<compile_context>
chip_gen: v7x
topology: tpu7x:2x2x1
jax: 0.10.0
libtpu: 0.0.40
codegen_flags: <defaults>
</compile_context>

<pallas_src>
import functools
import math

import jax
import jax.numpy as jnp
import numpy as np
from jax import lax
from jax.experimental import pallas as pl
from jax.experimental.pallas import tpu as pltpu

NUM_SKEL_ITER = 10        # SoftSkeletonize(num_iter=10) in soft_dice_cldice.__init__
ALPHA = 0.5
SMOOTH = 1.0


def _cdiv(a, b):
    return -(-a // b)


# ---------------------------------------------------------------------------
# Pallas kernel: skeletonize both inputs (lane-packed layout), chunk by chunk,
# and accumulate the 7 partial sums for this grid step in SMEM.
# ---------------------------------------------------------------------------
def _cldice_sums_kernel(rowflag_ref, colflag_ref, yt_ref, yp_ref, sums_ref, *,
                        num_iter, chunk_rows, n_chunks):
    lw = yt_ref.shape[1]

    # Factored border masks, hoisted once; they stay in broadcast-layout vregs.
    rflag = rowflag_ref[...]                       # (chunk_rows, 1) int32
    cflag = colflag_ref[...]                       # (1, lw) int32
    top = (rflag & 1) != 0                         # first row of an image
    bot = (rflag & 2) != 0                         # last row of an image
    lft = (cflag & 1) != 0                         # first column of an image
    rgt = (cflag & 2) != 0                         # last column of an image

    # Out-of-image neighbours are replaced by the centre pixel itself -- a
    # no-op for min/max pooling, identical to PyTorch's implicit +/-inf pad.
    def nb_up(x):      # x[i-1, j]
        return jnp.where(top, x, pltpu.roll(x, 1, 0))

    def nb_down(x):    # x[i+1, j]
        return jnp.where(bot, x, pltpu.roll(x, chunk_rows - 1, 0))

    def nb_left(x):    # x[i, j-1]
        return jnp.where(lft, x, pltpu.roll(x, 1, 1))

    def nb_right(x):   # x[i, j+1]
        return jnp.where(rgt, x, pltpu.roll(x, lw - 1, 1))

    def soft_erode(x):
        ph = jnp.minimum(jnp.minimum(nb_up(x), x), nb_down(x))      # (3,1) min-pool
        pw = jnp.minimum(jnp.minimum(nb_left(x), x), nb_right(x))   # (1,3) min-pool
        return jnp.minimum(ph, pw)

    def soft_skel(img):
        # Carry (img, e = erode(img)); share nb_up(e)/nb_down(e) between
        # dilate(e) (this iteration's img1) and erode(e) (next iteration's e).
        e = soft_erode(img)                        # 4 rolls, once
        skel = None
        for k in range(num_iter + 1):
            ue = nb_up(e)                          # shared
            de = nb_down(e)                        # shared
            vmax = jnp.maximum(jnp.maximum(ue, e), de)
            dil = jnp.maximum(jnp.maximum(nb_left(vmax), vmax), nb_right(vmax))
            delta = jnp.maximum(img - dil, 0.0)    # relu(img - open(img))
            if k == 0:
                skel = delta
            else:
                skel = skel + jnp.maximum(delta - skel * delta, 0.0)
            if k < num_iter:                       # skip the unused final erode
                vmin = jnp.minimum(jnp.minimum(ue, e), de)
                hmin = jnp.minimum(jnp.minimum(nb_left(e), e), nb_right(e))
                img = e
                e = jnp.minimum(vmin, hmin)
        return skel

    # Zero the SMEM accumulators once per grid step.
    for k in range(8):
        sums_ref[0, k] = jnp.float32(0.0)

    aligned = (chunk_rows % 8) == 0

    @pl.loop(0, n_chunks)
    def _(c):
        start = c * chunk_rows
        if aligned:
            start = pl.multiple_of(start, 8)
        yt = yt_ref[pl.ds(start, chunk_rows), :].astype(jnp.float32)
        yp = yp_ref[pl.ds(start, chunk_rows), :].astype(jnp.float32)

        sums_ref[0, 0] += jnp.sum(yt * yp)         # intersection
        sums_ref[0, 1] += jnp.sum(yt)              # sum(y_true)
        sums_ref[0, 2] += jnp.sum(yp)              # sum(y_pred)

        skel_p = soft_skel(yp)                     # consumed immediately -> dead
        sums_ref[0, 3] += jnp.sum(skel_p * yt)     # tprec numerator
        sums_ref[0, 4] += jnp.sum(skel_p)          # tprec denominator

        skel_t = soft_skel(yt)
        sums_ref[0, 5] += jnp.sum(skel_t * yp)     # tsens numerator
        sums_ref[0, 6] += jnp.sum(skel_t)          # tsens denominator


# ---------------------------------------------------------------------------
# wrapper: per-generation budgets, packing plan, layout plumbing, pallas_call
# ---------------------------------------------------------------------------
def _tpu_budgets():
    """(vmem_limit_bytes, per-tensor tile byte target) by device generation."""
    kind = ""
    try:
        kind = jax.devices()[0].device_kind.lower()
    except Exception:
        pass
    if "v7" in kind or "tpu7" in kind:
        return 48 * 1024 * 1024, 512 * 1024        # 64 MiB VMEM per TC on v7x
    if "v6" in kind or "v5" in kind:
        return 64 * 1024 * 1024, 1024 * 1024       # 128 MiB physical VMEM
    return 32 * 1024 * 1024, 512 * 1024            # conservative fallback


def _packing_plan(BC, H, W, tile_target_bytes):
    # --- lane layout: pack several images per 128-lane row, or pad W, ---
    # --- whichever wastes fewer elements.                              ---
    if W % 128 == 0:
        pack, w_pad = 1, W
    else:
        pack_a = 128 // math.gcd(W, 128)
        pad_a = (_cdiv(BC, pack_a) * pack_a - BC) * H * W     # padded whole images
        w_pad_b = _cdiv(W, 128) * 128
        pad_b = BC * H * (w_pad_b - W)                        # padded lanes
        if pad_a <= pad_b:
            pack, w_pad = pack_a, W
        else:
            pack, w_pad = 1, w_pad_b
    lw = pack * w_pad
    groups = _cdiv(BC, pack)

    # --- in-kernel chunk: whole images per chunk, ~vreg-resident working set ---
    target_chunk_elems = 16 * 1024
    gpc = max(1, min(groups, target_chunk_elems // max(1, H * lw)))
    m8 = 8 // math.gcd(H, 8)
    if gpc >= m8:
        gpc = (gpc // m8) * m8                     # chunk_rows % 8 == 0 when affordable
    chunk_rows = gpc * H
    total_chunks = _cdiv(groups, gpc)

    # --- chunks per grid step, from the per-tensor VMEM byte budget ---
    chunk_bytes = chunk_rows * lw * 4
    cpt = max(1, min(total_chunks, tile_target_bytes // max(1, chunk_bytes)))
    if total_chunks >= 2 and _cdiv(total_chunks, cpt) < 2:
        cpt = _cdiv(total_chunks, 2)               # >=2 grid steps: both v7x TCs work
    num_tiles = _cdiv(total_chunks, cpt)
    cpt = _cdiv(total_chunks, num_tiles)           # rebalance, minimize padding
    if num_tiles > 1 and (cpt * chunk_rows) % 8 != 0:
        mt = 8 // math.gcd(chunk_rows, 8)
        cpt = _cdiv(cpt, mt) * mt                  # block sublanes must be %8 when tiled
        num_tiles = _cdiv(total_chunks, cpt)
    if num_tiles == 1:
        cpt = total_chunks

    gpt = cpt * gpc
    groups_pad = num_tiles * gpt
    return pack, w_pad, lw, gpc, chunk_rows, cpt, num_tiles, gpt, groups_pad


def _pack_nchw(x, pack, w_pad, groups_pad):
    """(B, C, H, W) -> (groups_pad * H, pack * w_pad), images lane-packed."""
    B, C, H, W = x.shape
    BC = B * C
    x = x.reshape(BC, H, W)
    if w_pad > W:
        x = jnp.pad(x, ((0, 0), (0, 0), (0, w_pad - W)))     # zero lanes: 0 in all sums
    pad_imgs = groups_pad * pack - BC
    if pad_imgs:
        x = jnp.pad(x, ((0, pad_imgs), (0, 0), (0, 0)))      # zero images: 0 in all sums
    x = x.reshape(groups_pad, pack, H, w_pad).transpose(0, 2, 1, 3)
    return x.reshape(groups_pad * H, pack * w_pad)


def _row_flags(chunk_rows, H):
    r = np.arange(chunk_rows) % H
    f = (r == 0).astype(np.int32) | ((r == H - 1).astype(np.int32) << 1)
    return jnp.asarray(f[:, None], dtype=jnp.int32)           # (chunk_rows, 1)


def _col_flags(lw, w_pad, W):
    c = np.arange(lw) % w_pad
    f = (c == 0).astype(np.int32) | ((c == W - 1).astype(np.int32) << 1)
    return jnp.asarray(f[None, :], dtype=jnp.int32)           # (1, lw)


def soft_dice_cldice_loss(y_true, y_pred, alpha=ALPHA, smooth=SMOOTH,
                          num_iter=NUM_SKEL_ITER, exclude_background=False):
    """Forward pass of the PyTorch `soft_dice_cldice` module (4-D NCHW)."""
    assert y_true.shape == y_pred.shape and y_true.ndim == 4
    if exclude_background:
        y_true = y_true[:, 1:, :, :]
        y_pred = y_pred[:, 1:, :, :]

    B, C, H, W = y_true.shape
    vmem_limit, tile_target = _tpu_budgets()
    (pack, w_pad, lw, gpc, chunk_rows, cpt, num_tiles, gpt,
     groups_pad) = _packing_plan(B * C, H, W, tile_target)
    rows_per_tile = gpt * H

    yt = _pack_nchw(y_true, pack, w_pad, groups_pad)
    yp = _pack_nchw(y_pred, pack, w_pad, groups_pad)
    rowflag = _row_flags(chunk_rows, H)
    colflag = _col_flags(lw, w_pad, W)

    kernel = functools.partial(_cldice_sums_kernel, num_iter=num_iter,
                               chunk_rows=chunk_rows, n_chunks=cpt)

    partials = pl.pallas_call(
        kernel,
        out_shape=jax.ShapeDtypeStruct((num_tiles, 8), jnp.float32),
        grid=(num_tiles,),
        in_specs=[
            pl.BlockSpec((chunk_rows, 1), lambda i: (0, 0)),      # row border flags
            pl.BlockSpec((1, lw), lambda i: (0, 0)),              # col border flags
            pl.BlockSpec((rows_per_tile, lw), lambda i: (i, 0)),  # y_true tile
            pl.BlockSpec((rows_per_tile, lw), lambda i: (i, 0)),  # y_pred tile
        ],
        out_specs=pl.BlockSpec((1, 8), lambda i: (i, 0),
                               memory_space=pltpu.MemorySpace.SMEM),
        compiler_params=pltpu.CompilerParams(
            dimension_semantics=("parallel",),       # megacore sharding on v7x
            vmem_limit_bytes=vmem_limit),
    )(rowflag, colflag, yt, yp)

    sums = jnp.sum(partials, axis=0)
    inter, s_true, s_pred, sp_yt, sp, st_yp, st = (sums[i] for i in range(7))

    dice = 1.0 - (2.0 * inter + smooth) / (s_true + s_pred + smooth)
    tprec = (sp_yt + smooth) / (sp + smooth)
    tsens = (st_yp + smooth) / (st + smooth)
    cl_dice = 1.0 - 2.0 * (tprec * tsens) / (tprec + tsens)
    return (1.0 - alpha) * dice + alpha * cl_dice


# ---------------------------------------------------------------------------
# Independent pure-JAX reference (reduce_window, NCHW) mirroring the PyTorch
# module exactly -- not built from the kernel helpers, so the check is not
# circular and validates the roll+mask edge semantics and the loop refactor.
# ---------------------------------------------------------------------------
def _ref_min_pool(img, wh, ww):
    pad = [(0, 0), (0, 0), (wh // 2, wh // 2), (ww // 2, ww // 2)]
    return -lax.reduce_window(-img, -jnp.inf, lax.max,
                              (1, 1, wh, ww), (1, 1, 1, 1), pad)


def _ref_max_pool(img, wh, ww):
    pad = [(0, 0), (0, 0), (wh // 2, wh // 2), (ww // 2, ww // 2)]
    return lax.reduce_window(img, -jnp.inf, lax.max,
                             (1, 1, wh, ww), (1, 1, 1, 1), pad)


def _ref_soft_erode(img):
    return jnp.minimum(_ref_min_pool(img, 3, 1), _ref_min_pool(img, 1, 3))


def _ref_soft_dilate(img):
    return _ref_max_pool(img, 3, 3)


def _ref_soft_skel(img, num_iter):
    img1 = _ref_soft_dilate(_ref_soft_erode(img))
    skel = jnp.maximum(img - img1, 0.0)
    for _ in range(num_iter):
        img = _ref_soft_erode(img)
        img1 = _ref_soft_dilate(_ref_soft_erode(img))
        delta = jnp.maximum(img - img1, 0.0)
        skel = skel + jnp.maximum(delta - skel * delta, 0.0)
    return skel


def _reference_loss(y_true, y_pred, alpha=ALPHA, smooth=SMOOTH, num_iter=NUM_SKEL_ITER):
    yt = y_true.astype(jnp.float32)
    yp = y_pred.astype(jnp.float32)
    skel_p = _ref_soft_skel(yp, num_iter)
    skel_t = _ref_soft_skel(yt, num_iter)
    dice = 1.0 - (2.0 * jnp.sum(yt * yp) + smooth) / (jnp.sum(yt) + jnp.sum(yp) + smooth)
    tprec = (jnp.sum(skel_p * yt) + smooth) / (jnp.sum(skel_p) + smooth)
    tsens = (jnp.sum(skel_t * yp) + smooth) / (jnp.sum(skel_t) + smooth)
    cl = 1.0 - 2.0 * (tprec * tsens) / (tprec + tsens)
    return (1.0 - alpha) * dice + alpha * cl


if __name__ == "__main__":
    key = jax.random.PRNGKey(0)
    k1, k2, k3, k4 = jax.random.split(key, 4)

    # Small NCHW case (single packed group, single tile, single chunk).
    B, C, H, W = 2, 4, 16, 16
    y_true = (jax.random.uniform(k1, (B, C, H, W)) > 0.7).astype(jnp.float32)
    y_pred = jax.random.uniform(k2, (B, C, H, W), dtype=jnp.float32)
    loss = jax.block_until_ready(soft_dice_cldice_loss(y_true, y_pred))
    ref = jax.block_until_ready(_reference_loss(y_true, y_pred))
    assert jnp.allclose(loss, ref, atol=1e-4, rtol=1e-4), (loss, ref)

    # Larger case exercising the multi-tile grid and the in-kernel chunk loop.
    B2, C2, H2, W2 = 4, 8, 32, 64
    y_true2 = (jax.random.uniform(k3, (B2, C2, H2, W2)) > 0.7).astype(jnp.float32)
    y_pred2 = jax.random.uniform(k4, (B2, C2, H2, W2), dtype=jnp.float32)
    loss2 = jax.block_until_ready(soft_dice_cldice_loss(y_true2, y_pred2))
    ref2 = jax.block_until_ready(_reference_loss(y_true2, y_pred2))
    assert jnp.allclose(loss2, ref2, atol=1e-4, rtol=1e-4), (loss2, ref2)

    print("KERNEL_OK")
</pallas_src>

<mosaic_0001>
module attributes {stable_mosaic.version = 11 : i64} {
  func.func @_cldice_sums_kernel(%arg0: i32, %arg1: memref<16x1xi32, #tpu.memory_space<vmem>>, %arg2: memref<1x128xi32, #tpu.memory_space<vmem>>, %arg3: memref<16x128xf32, #tpu.memory_space<vmem>>, %arg4: memref<16x128xf32, #tpu.memory_space<vmem>>, %arg5: memref<1x8xf32, #tpu.memory_space<smem>>) attributes {dimension_semantics = [#tpu.dimension_semantics<parallel>], iteration_bounds = array<i64: 1>, scalar_prefetch = 0 : i64, scratch_operands = 0 : i64, tpu.core_type = #tpu.core_type<tc>, window_params = [{pipeline_mode = #tpu.pipeline_mode<synchronous>, transform_indices = @transform_0, window_bounds = array<i64: 16, 1>}, {pipeline_mode = #tpu.pipeline_mode<synchronous>, transform_indices = @transform_1, window_bounds = array<i64: 1, 128>}, {transform_indices = @transform_2, window_bounds = array<i64: 16, 128>}, {transform_indices = @transform_3, window_bounds = array<i64: 16, 128>}, {transform_indices = @transform_4, window_bounds = array<i64: 1, 8>}]} {
    %c0 = arith.constant 0 : index
    %c0_0 = arith.constant 0 : index
    %0 = vector.load %arg1[%c0, %c0_0] : memref<16x1xi32, #tpu.memory_space<vmem>>, vector<16x1xi32>
    %c0_1 = arith.constant 0 : index
    %c0_2 = arith.constant 0 : index
    %1 = vector.load %arg2[%c0_1, %c0_2] : memref<1x128xi32, #tpu.memory_space<vmem>>, vector<1x128xi32>
    %c1_i32 = arith.constant 1 : i32
    %2 = vector.broadcast %c1_i32 : i32 to vector<16x1xi32>
    %3 = arith.andi %0, %2 : vector<16x1xi32>
    %c0_i32 = arith.constant 0 : i32
    %4 = vector.broadcast %c0_i32 : i32 to vector<16x1xi32>
    %5 = arith.cmpi ne, %3, %4 : vector<16x1xi32>
    %c2_i32 = arith.constant 2 : i32
    %6 = vector.broadcast %c2_i32 : i32 to vector<16x1xi32>
    %7 = arith.andi %0, %6 : vector<16x1xi32>
    %c0_i32_3 = arith.constant 0 : i32
    %8 = vector.broadcast %c0_i32_3 : i32 to vector<16x1xi32>
    %9 = arith.cmpi ne, %7, %8 : vector<16x1xi32>
    %c1_i32_4 = arith.constant 1 : i32
    %10 = vector.broadcast %c1_i32_4 : i32 to vector<1x128xi32>
    %11 = arith.andi %1, %10 : vector<1x128xi32>
    %c0_i32_5 = arith.constant 0 : i32
    %12 = vector.broadcast %c0_i32_5 : i32 to vector<1x128xi32>
    %13 = arith.cmpi ne, %11, %12 : vector<1x128xi32>
    %c2_i32_6 = arith.constant 2 : i32
    %14 = vector.broadcast %c2_i32_6 : i32 to vector<1x128xi32>
    %15 = arith.andi %1, %14 : vector<1x128xi32>
    %c0_i32_7 = arith.constant 0 : i32
    %16 = vector.broadcast %c0_i32_7 : i32 to vector<1x128xi32>
    %17 = arith.cmpi ne, %15, %16 : vector<1x128xi32>
    %cst = arith.constant 0.000000e+00 : f32
    %c0_8 = arith.constant 0 : index
    %c0_9 = arith.constant 0 : index
    %18 = memref.load %arg5[%c0_8, %c0_9] : memref<1x8xf32, #tpu.memory_space<smem>>
    memref.store %cst, %arg5[%c0_8, %c0_9] : memref<1x8xf32, #tpu.memory_space<smem>>
    %cst_10 = arith.constant 0.000000e+00 : f32
    %c0_11 = arith.constant 0 : index
    %c1 = arith.constant 1 : index
    %19 = memref.load %arg5[%c0_11, %c1] : memref<1x8xf32, #tpu.memory_space<smem>>
    memref.store %cst_10, %arg5[%c0_11, %c1] : memref<1x8xf32, #tpu.memory_space<smem>>
    %cst_12 = arith.constant 0.000000e+00 : f32
    %c0_13 = arith.constant 0 : index
    %c2 = arith.constant 2 : index
    %20 = memref.load %arg5[%c0_13, %c2] : memref<1x8xf32, #tpu.memory_space<smem>>
    memref.store %cst_12, %arg5[%c0_13, %c2] : memref<1x8xf32, #tpu.memory_space<smem>>
    %cst_14 = arith.constant 0.000000e+00 : f32
    %c0_15 = arith.constant 0 : index
    %c3 = arith.constant 3 : index
    %21 = memref.load %arg5[%c0_15, %c3] : memref<1x8xf32, #tpu.memory_space<smem>>
    memref.store %cst_14, %arg5[%c0_15, %c3] : memref<1x8xf32, #tpu.memory_space<smem>>
    %cst_16 = arith.constant 0.000000e+00 : f32
    %c0_17 = arith.constant 0 : index
    %c4 = arith.constant 4 : index
    %22 = memref.load %arg5[%c0_17, %c4] : memref<1x8xf32, #tpu.memory_space<smem>>
    memref.store %cst_16, %arg5[%c0_17, %c4] : memref<1x8xf32, #tpu.memory_space<smem>>
    %cst_18 = arith.constant 0.000000e+00 : f32
    %c0_19 = arith.constant 0 : index
    %c5 = arith.constant 5 : index
    %23 = memref.load %arg5[%c0_19, %c5] : memref<1x8xf32, #tpu.memory_space<smem>>
    memref.store %cst_18, %arg5[%c0_19, %c5] : memref<1x8xf32, #tpu.memory_space<smem>>
    %cst_20 = arith.constant 0.000000e+00 : f32
    %c0_21 = arith.constant 0 : index
    %c6 = arith.constant 6 : index
    %24 = memref.load %arg5[%c0_21, %c6] : memref<1x8xf32, #tpu.memory_space<smem>>
    memref.store %cst_20, %arg5[%c0_21, %c6] : memref<1x8xf32, #tpu.memory_space<smem>>
    %cst_22 = arith.constant 0.000000e+00 : f32
    %c0_23 = arith.constant 0 : index
    %c7 = arith.constant 7 : index
    %25 = memref.load %arg5[%c0_23, %c7] : memref<1x8xf32, #tpu.memory_space<smem>>
    memref.store %cst_22, %arg5[%c0_23, %c7] : memref<1x8xf32, #tpu.memory_space<smem>>
    %c0_i32_24 = arith.constant 0 : i32
    %c1_i32_25 = arith.constant 1 : i32
    %26 = arith.muli %c0_i32_24, %c1_i32_25 : i32
    %c0_i32_26 = arith.constant 0 : i32
    %27 = arith.addi %c0_i32_26, %26 : i32
    %c16_i32 = arith.constant 16 : i32
    %28 = arith.muli %27, %c16_i32 : i32
    %29 = tpu.assume_multiple %28, 8 : i32
    %30 = arith.index_cast %29 : i32 to index
    %c0_27 = arith.constant 0 : index
    %31 = vector.load %arg3[%30, %c0_27] : memref<16x128xf32, #tpu.memory_space<vmem>>, vector<16x128xf32>
    %32 = arith.index_cast %29 : i32 to index
    %c0_28 = arith.constant 0 : index
    %33 = vector.load %arg4[%32, %c0_28] : memref<16x128xf32, #tpu.memory_space<vmem>>, vector<16x128xf32>
    %c0_29 = arith.constant 0 : index
    %c0_30 = arith.constant 0 : index
    %34 = memref.load %arg5[%c0_29, %c0_30] : memref<1x8xf32, #tpu.memory_space<smem>>
    %35 = arith.mulf %31, %33 : vector<16x128xf32>
    %36 = vector.shape_cast %35 : vector<16x128xf32> to vector<1x16x128xf32>
    %cst_31 = arith.constant dense<0.000000e+00> : vector<1xf32>
    %37 = vector.multi_reduction <add>, %36, %cst_31 [1, 2] : vector<1x16x128xf32> to vector<1xf32>
    %38 = vector.shape_cast %37 : vector<1xf32> to vector<1x1x1xf32>
    %39 = vector.extract %38[0, 0, 0] : f32 from vector<1x1x1xf32>
    %40 = arith.addf %34, %39 : f32
    %c0_32 = arith.constant 0 : index
    %c0_33 = arith.constant 0 : index
    %41 = memref.load %arg5[%c0_32, %c0_33] : memref<1x8xf32, #tpu.memory_space<smem>>
    memref.store %40, %arg5[%c0_32, %c0_33] : memref<1x8xf32, #tpu.memory_space<smem>>
    %c0_34 = arith.constant 0 : index
    %c1_35 = arith.constant 1 : index
    %42 = memref.load %arg5[%c0_34, %c1_35] : memref<1x8xf32, #tpu.memory_space<smem>>
    %43 = vector.shape_cast %31 : vector<16x128xf32> to vector<1x16x128xf32>
    %cst_36 = arith.constant dense<0.000000e+00> : vector<1xf32>
    %44 = vector.multi_reduction <add>, %43, %cst_36 [1, 2] : vector<1x16x128xf32> to vector<1xf32>
    %45 = vector.shape_cast %44 : vector<1xf32> to vector<1x1x1xf32>
    %46 = vector.extract %45[0, 0, 0] : f32 from vector<1x1x1xf32>
    %47 = arith.addf %42, %46 : f32
    %c0_37 = arith.constant 0 : index
    %c1_38 = arith.constant 1 : index
    %48 = memref.load %arg5[%c0_37, %c1_38] : memref<1x8xf32, #tpu.memory_space<smem>>
    memref.store %47, %arg5[%c0_37, %c1_38] : memref<1x8xf32, #tpu.memory_space<smem>>
    %c0_39 = arith.constant 0 : index
    %c2_40 = arith.constant 2 : index
    %49 = memref.load %arg5[%c0_39, %c2_40] : memref<1x8xf32, #tpu.memory_space<smem>>
    %50 = vector.shape_cast %33 : vector<16x128xf32> to vector<1x16x128xf32>
    %cst_41 = arith.constant dense<0.000000e+00> : vector<1xf32>
    %51 = vector.multi_reduction <add>, %50, %cst_41 [1, 2] : vector<1x16x128xf32> to vector<1xf32>
    %52 = vector.shape_cast %51 : vector<1xf32> to vector<1x1x1xf32>
    %53 = vector.extract %52[0, 0, 0] : f32 from vector<1x1x1xf32>
    %54 = arith.addf %49, %53 : f32
    %c0_42 = arith.constant 0 : index
    %c2_43 = arith.constant 2 : index
    %55 = memref.load %arg5[%c0_42, %c2_43] : memref<1x8xf32, #tpu.memory_space<smem>>
    memref.store %54, %arg5[%c0_42, %c2_43] : memref<1x8xf32, #tpu.memory_space<smem>>
    %c1_i32_44 = arith.constant 1 : i32
    %56 = tpu.dynamic_rotate %33 by %c1_i32_44 dim 0 : vector<16x128xf32>, i32 -> vector<16x128xf32>
    %57 = vector.shape_cast %5 : vector<16x1xi1> to vector<16x1xi1>
    %58 = vector.broadcast %57 : vector<16x1xi1> to vector<16x128xi1>
    %59 = arith.select %58, %33, %56 : vector<16x128xi1>, vector<16x128xf32>
    %60 = arith.minimumf %59, %33 : vector<16x128xf32>
    %c15_i32 = arith.constant 15 : i32
    %61 = tpu.dynamic_rotate %33 by %c15_i32 dim 0 : vector<16x128xf32>, i32 -> vector<16x128xf32>
    %62 = vector.shape_cast %9 : vector<16x1xi1> to vector<16x1xi1>
    %63 = vector.broadcast %62 : vector<16x1xi1> to vector<16x128xi1>
    %64 = arith.select %63, %33, %61 : vector<16x128xi1>, vector<16x128xf32>
    %65 = arith.minimumf %60, %64 : vector<16x128xf32>
    %c1_i32_45 = arith.constant 1 : i32
    %66 = tpu.dynamic_rotate %33 by %c1_i32_45 dim 1 : vector<16x128xf32>, i32 -> vector<16x128xf32>
    %67 = vector.shape_cast %13 : vector<1x128xi1> to vector<1x128xi1>
    %68 = vector.broadcast %67 : vector<1x128xi1> to vector<16x128xi1>
    %69 = arith.select %68, %33, %66 : vector<16x128xi1>, vector<16x128xf32>
    %70 = arith.minimumf %69, %33 : vector<16x128xf32>
    %c127_i32 = arith.constant 127 : i32
    %71 = tpu.dynamic_rotate %33 by %c127_i32 dim 1 : vector<16x128xf32>, i32 -> vector<16x128xf32>
    %72 = vector.shape_cast %17 : vector<1x128xi1> to vector<1x128xi1>
    %73 = vector.broadcast %72 : vector<1x128xi1> to vector<16x128xi1>
    %74 = arith.select %73, %33, %71 : vector<16x128xi1>, vector<16x128xf32>
    %75 = arith.minimumf %70, %74 : vector<16x128xf32>
    %76 = arith.minimumf %65, %75 : vector<16x128xf32>
    %c1_i32_46 = arith.constant 1 : i32
    %77 = tpu.dynamic_rotate %76 by %c1_i32_46 dim 0 : vector<16x128xf32>, i32 -> vector<16x128xf32>
    %78 = vector.shape_cast %5 : vector<16x1xi1> to vector<16x1xi1>
    %79 = vector.broadcast %78 : vector<16x1xi1> to vector<16x128xi1>
    %80 = arith.select %79, %76, %77 : vector<16x128xi1>, vector<16x128xf32>
    %c15_i32_47 = arith.constant 15 : i32
    %81 = tpu.dynamic_rotate %76 by %c15_i32_47 dim 0 : vector<16x128xf32>, i32 -> vector<16x128xf32>
    %82 = vector.shape_cast %9 : vector<16x1xi1> to vector<16x1xi1>
    %83 = vector.broadcast %82 : vector<16x1xi1> to vector<16x128xi1>
    %84 = arith.select %83, %76, %81 : vector<16x128xi1>, vector<16x128xf32>
    %85 = arith.maximumf %80, %76 : vector<16x128xf32>
    %86 = arith.maximumf %85, %84 : vector<16x128xf32>
    %c1_i32_48 = arith.constant 1 : i32
    %87 = tpu.dynamic_rotate %86 by %c1_i32_48 dim 1 : vector<16x128xf32>, i32 -> vector<16x128xf32>
    %88 = vector.shape_cast %13 : vector<1x128xi1> to vector<1x128xi1>
    %89 = vector.broadcast %88 : vector<1x128xi1> to vector<16x128xi1>
    %90 = arith.select %89, %86, %87 : vector<16x128xi1>, vector<16x128xf32>
    %91 = arith.maximumf %90, %86 : vector<16x128xf32>
    %c127_i32_49 = arith.constant 127 : i32
    %92 = tpu.dynamic_rotate %86 by %c127_i32_49 dim 1 : vector<16x128xf32>, i32 -> vector<16x128xf32>
    %93 = vector.shape_cast %17 : vector<1x128xi1> to vector<1x128xi1>
    %94 = vector.broadcast %93 : vector<1x128xi1> to vector<16x128xi1>
    %95 = arith.select %94, %86, %92 : vector<16x128xi1>, vector<16x128xf32>
    %96 = arith.maximumf %91, %95 : vector<16x128xf32>
    %97 = arith.subf %33, %96 : vector<16x128xf32>
    %cst_50 = arith.constant 0.000000e+00 : f32
    %98 = vector.broadcast %cst_50 : f32 to vector<16x128xf32>
    %99 = arith.maximumf %97, %98 : vector<16x128xf32>
    %100 = arith.minimumf %80, %76 : vector<16x128xf32>
    %101 = arith.minimumf %100, %84 : vector<16x128xf32>
    %c1_i32_51 = arith.constant 1 : i32
    %102 = tpu.dynamic_rotate %76 by %c1_i32_51 dim 1 : vector<16x128xf32>, i32 -> vector<16x128xf32>
    %103 = vector.shape_cast %13 : vector<1x128xi1> to vector<1x128xi1>
    %104 = vector.broadcast %103 : vector<1x128xi1> to vector<16x128xi1>
    %105 = arith.select %104, %76, %102 : vector<16x128xi1>, vector<16x128xf32>
    %106 = arith.minimumf %105, %76 : vector<16x128xf32>
    %c127_i32_52 = arith.constant 127 : i32
    %107 = tpu.dynamic_rotate %76 by %c127_i32_52 dim 1 : vector<16x128xf32>, i32 -> vector<16x128xf32>
    %108 = vector.shape_cast %17 : vector<1x128xi1> to vector<1x128xi1>
    %109 = vector.broadcast %108 : vector<1x128xi1> to vector<16x128xi1>
    %110 = arith.select %109, %76, %107 : vector<16x128xi1>, vector<16x128xf32>
    %111 = arith.minimumf %106, %110 : vector<16x128xf32>
    %112 = arith.minimumf %101, %111 : vector<16x128xf32>
    %c1_i32_53 = arith.constant 1 : i32
    %113 = tpu.dynamic_rotate %112 by %c1_i32_53 dim 0 : vector<16x128xf32>, i32 -> vector<16x128xf32>
    %114 = vector.shape_cast %5 : vector<16x1xi1> to vector<16x1xi1>
    %115 = vector.broadcast %114 : vector<16x1xi1> to vector<16x128xi1>
    %116 = arith.select %115, %112, %113 : vector<16x128xi1>, vector<16x128xf32>
    %c15_i32_54 = arith.constant 15 : i32
    %117 = tpu.dynamic_rotate %112 by %c15_i32_54 dim 0 : vector<16x128xf32>, i32 -> vector<16x128xf32>
    %118 = vector.shape_cast %9 : vector<16x1xi1> to vector<16x1xi1>
    %119 = vector.broadcast %118 : vector<16x1xi1> to vector<16x128xi1>
    %120 = arith.select %119, %112, %117 : vector<16x128xi1>, vector<16x128xf32>
    %121 = arith.maximumf %116, %112 : vector<16x128xf32>
    %122 = arith.maximumf %121, %120 : vector<16x128xf32>
    %c1_i32_55 = arith.constant 1 : i32
    %123 = tpu.dynamic_rotate %122 by %c1_i32_55 dim 1 : vector<16x128xf32>, i32 -> vector<16x128xf32>
    %124 = vector.shape_cast %13 : vector<1x128xi1> to vector<1x128xi1>
    %125 = vector.broadcast %124 : vector<1x128xi1> to vector<16x128xi1>
    %126 = arith.select %125, %122, %123 : vector<16x128xi1>, vector<16x128xf32>
    %127 = arith.maximumf %126, %122 : vector<16x128xf32>
    %c127_i32_56 = arith.constant 127 : i32
    %128 = tpu.dynamic_rotate %122 by %c127_i32_56 dim 1 : vector<16x128xf32>, i32 -> vector<16x128xf32>
    %129 = vector.shape_cast %17 : vector<1x128xi1> to vector<1x128xi1>
    %130 = vector.broadcast %129 : vector<1x128xi1> to vector<16x128xi1>
    %131 = arith.select %130, %122, %128 : vector<16x128xi1>, vector<16x128xf32>
    %132 = arith.maximumf %127, %131 : vector<16x128xf32>
    %133 = arith.subf %76, %132 : vector<16x128xf32>
    %cst_57 = arith.constant 0.000000e+00 : f32
    %134 = vector.broadcast %cst_57 : f32 to vector<16x128xf32>
    %135 = arith.maximumf %133, %134 : vector<16x128xf32>
    %136 = arith.mulf %99, %135 : vector<16x128xf32>
    %137 = arith.subf %135, %136 : vector<16x128xf32>
    %cst_58 = arith.constant 0.000000e+00 : f32
    %138 = vector.broadcast %cst_58 : f32 to vector<16x128xf32>
    %139 = arith.maximumf %137, %138 : vector<16x128xf32>
    %140 = arith.addf %99, %139 : vector<16x128xf32>
    %141 = arith.minimumf %116, %112 : vector<16x128xf32>
    %142 = arith.minimumf %141, %120 : vector<16x128xf32>
    %c1_i32_59 = arith.constant 1 : i32
    %143 = tpu.dynamic_rotate %112 by %c1_i32_59 dim 1 : vector<16x128xf32>, i32 -> vector<16x128xf32>
    %144 = vector.shape_cast %13 : vector<1x128xi1> to vector<1x128xi1>
    %145 = vector.broadcast %144 : vector<1x128xi1> to vector<16x128xi1>
    %146 = arith.select %145, %112, %143 : vector<16x128xi1>, vector<16x128xf32>
    %147 = arith.minimumf %146, %112 : vector<16x128xf32>
    %c127_i32_60 = arith.constant 127 : i32
    %148 = tpu.dynamic_rotate %112 by %c127_i32_60 dim 1 : vector<16x128xf32>, i32 -> vector<16x128xf32>
    %149 = vector.shape_cast %17 : vector<1x128xi1> to vector<1x128xi1>
    %150 = vector.broadcast %149 : vector<1x128xi1> to vector<16x128xi1>
    %151 = arith.select %150, %112, %148 : vector<16x128xi1>, vector<16x128xf32>
    %152 = arith.minimumf %147, %151 : vector<16x128xf32>
    %153 = arith.minimumf %142, %152 : vector<16x128xf32>
    %c1_i32_61 = arith.constant 1 : i32
    %154 = tpu.dynamic_rotate %153 by %c1_i32_61 dim 0 : vector<16x128xf32>, i32 -> vector<16x128xf32>
    %155 = vector.shape_cast %5 : vector<16x1xi1> to vector<16x1xi1>
    %156 = vector.broadcast %155 : vector<16x1xi1> to vector<16x128xi1>
    %157 = arith.select %156, %153, %154 : vector<16x128xi1>, vector<16x128xf32>
    %c15_i32_62 = arith.constant 15 : i32
    %158 = tpu.dynamic_rotate %153 by %c15_i32_62 dim 0 : vector<16x128xf32>, i32 -> vector<16x128xf32>
    %159 = vector.shape_cast %9 : vector<16x1xi1> to vector<16x1xi1>
    %160 = vector.broadcast %159 : vector<16x1xi1> to vector<16x128xi1>
    %161 = arith.select %160, %153, %158 : vector<16x128xi1>, vector<16x128xf32>
    %162 = arith.maximumf %157, %153 : vector<16x128xf32>
    %163 = arith.maximumf %162, %161 : vector<16x128xf32>
    %c1_i32_63 = arith.constant 1 : i32
    %164 = tpu.dynamic_rotate %163 by %c1_i32_63 dim 1 : vector<16x128xf32>, i32 -> vector<16x128xf32>
    %165 = vector.shape_cast %13 : vector<1x128xi1> to vector<1x128xi1>
    %166 = vector.broadcast %165 : vector<1x128xi1> to vector<16x128xi1>
    %167 = arith.select %166, %163, %164 : vector<16x128xi1>, vector<16x128xf32>
    %168 = arith.maximumf %167, %163 : vector<16x128xf32>
    %c127_i32_64 = arith.constant 127 : i32
    %169 = tpu.dynamic_rotate %163 by %c127_i32_64 dim 1 : vector<16x128xf32>, i32 -> vector<16x128xf32>
    %170 = vector.shape_cast %17 : vector<1x128xi1> to vector<1x128xi1>
    %171 = vector.broadcast %170 : vector<1x128xi1> to vector<16x128xi1>
    %172 = arith.select %171, %163, %169 : vector<16x128xi1>, vector<16x128xf32>
    %173 = arith.maximumf %168, %172 : vector<16x128xf32>
    %174 = arith.subf %112, %173 : vector<16x128xf32>
    %cst_65 = arith.constant 0.000000e+00 : f32
    %175 = vector.broadcast %cst_65 : f32 to vector<16x128xf32>
    %176 = arith.maximumf %174, %175 : vector<16x128xf32>
    %177 = arith.mulf %140, %176 : vector<16x128xf32>
    %178 = arith.subf %176, %177 : vector<16x128xf32>
    %cst_66 = arith.constant 0.000000e+00 : f32
    %179 = vector.broadcast %cst_66 : f32 to vector<16x128xf32>
    %180 = arith.maximumf %178, %179 : vector<16x128xf32>
    %181 = arith.addf %140, %180 : vector<16x128xf32>
    %182 = arith.minimumf %157, %153 : vector<16x128xf32>
    %183 = arith.minimumf %182, %161 : vector<16x128xf32>
    %c1_i32_67 = arith.constant 1 : i32
    %184 = tpu.dynamic_rotate %153 by %c1_i32_67 dim 1 : vector<16x128xf32>, i32 -> vector<16x128xf32>
    %185 = vector.shape_cast %13 : vector<1x128xi1> to vector<1x128xi1>
    %186 = vector.broadcast %185 : vector<1x128xi1> to vector<16x128xi1>
    %187 = arith.select %186, %153, %184 : vector<16x128xi1>, vector<16x128xf32>
    %188 = arith.minimumf %187, %153 : vector<16x128xf32>
    %c127_i32_68 = arith.constant 127 : i32
    %189 = tpu.dynamic_rotate %153 by %c127_i32_68 dim 1 : vector<16x128xf32>, i32 -> vector<16x128xf32>
    %190 = vector.shape_cast %17 : vector<1x128xi1> to vector<1x128xi1>
    %191 = vector.broadcast %190 : vector<1x128xi1> to vector<16x128xi1>
    %192 = arith.select %191, %153, %189 : vector<16x128xi1>, vector<16x128xf32>
    %193 = arith.minimumf %188, %192 : vector<16x128xf32>
    %194 = arith.minimumf %183, %193 : vector<16x128xf32>
    %c1_i32_69 = arith.constant 1 : i32
    %195 = tpu.dynamic_rotate %194 by %c1_i32_69 dim 0 : vector<16x128xf32>, i32 -> vector<16x128xf32>
    %196 = vector.shape_cast %5 : vector<16x1xi1> to vector<16x1xi1>
    %197 = vector.broadcast %196 : vector<16x1xi1> to vector<16x128xi1>
    %198 = arith.select %197, %194, %195 : vector<16x128xi1>, vector<16x128xf32>
    %c15_i32_70 = arith.constant 15 : i32
    %199 = tpu.dynamic_rotate %194 by %c15_i32_70 dim 0 : vector<16x128xf32>, i32 -> vector<16x128xf32>
    %200 = vector.shape_cast %9 : vector<16x1xi1> to vector<16x1xi1>
    %201 = vector.broadcast %200 : vector<16x1xi1> to vector<16x128xi1>
    %202 = arith.select %201, %194, %199 : vector<16x128xi1>, vector<16x128xf32>
    %203 = arith.maximumf %198, %194 : vector<16x128xf32>
    %204 = arith.maximumf %203, %202 : vector<16x128xf32>
    %c1_i32_71 = arith.constant 1 : i32
    %205 = tpu.dynamic_rotate %204 by %c1_i32_71 dim 1 : vector<16x128xf32>, i32 -> vector<16x128xf32>
    %206 = vector.shape_cast %13 : vector<1x128xi1> to vector<1x128xi1>
    %207 = vector.broadcast %206 : vector<1x128xi1> to vector<16x128xi1>
    %208 = arith.select %207, %204, %205 : vector<16x128xi1>, vector<16x128xf32>
    %209 = arith.maximumf %208, %204 : vector<16x128xf32>
    %c127_i32_72 = arith.constant 127 : i32
    %210 = tpu.dynamic_rotate %204 by %c127_i32_72 dim 1 : vector<16x128xf32>, i32 -> vector<16x128xf32>
    %211 = vector.shape_cast %17 : vector<1x128xi1> to vector<1x128xi1>
    %212 = vector.broadcast %211 : vector<1x128xi1> to vector<16x128xi1>
    %213 = arith.select %212, %204, %210 : vector<16x128xi1>, vector<16x128xf32>
    %214 = arith.maximumf %209, %213 : vector<16x128xf32>
    %215 = arith.subf %153, %214 : vector<16x128xf32>
    %cst_73 = arith.constant 0.000000e+00 : f32
    %216 = vector.broadcast %cst_73 : f32 to vector<16x128xf32>
    %217 = arith.maximumf %215, %216 : vector<16x128xf32>
    %218 = arith.mulf %181, %217 : vector<16x128xf32>
    %219 = arith.subf %217, %218 : vector<16x128xf32>
    %cst_74 = arith.constant 0.000000e+00 : f32
    %220 = vector.broadcast %cst_74 : f32 to vector<16x128xf32>
    %221 = arith.maximumf %219, %220 : vector<16x128xf32>
    %222 = arith.addf %181, %221 : vector<16x128xf32>
    %223 = arith.minimumf %198, %194 : vector<16x128xf32>
    %224 = arith.minimumf %223, %202 : vector<16x128xf32>
    %c1_i32_75 = arith.constant 1 : i32
    %225 = tpu.dynamic_rotate %194 by %c1_i32_75 dim 1 : vector<16x128xf32>, i32 -> vector<16x128xf32>
    %226 = vector.shape_cast %13 : vector<1x128xi1> to vector<1x128xi1>
    %227 = vector.broadcast %226 : vector<1x128xi1> to vector<16x128xi1>
    %228 = arith.select %227, %194, %225 : vector<16x128xi1>, vector<16x128xf32>
    %229 = arith.minimumf %228, %194 : vector<16x128xf32>
    %c127_i32_76 = arith.constant 127 : i32
    %230 = tpu.dynamic_rotate %194 by %c127_i32_76 dim 1 : vector<16x128xf32>, i32 -> vector<16x128xf32>
    %231 = vector.shape_cast %17 : vector<1x128xi1> to vector<1x128xi1>
    %232 = vector.broadcast %231 : vector<1x128xi1> to vector<16x128xi1>
    %233 = arith.select %232, %194, %230 : vector<16x128xi1>, vector<16x128xf32>
    %234 = arith.minimumf %229, %233 : vector<16x128xf32>
    %235 = arith.minimumf %224, %234 : vector<16x128xf32>
    %c1_i32_77 = arith.constant 1 : i32
    %236 = tpu.dynamic_rotate %235 by %c1_i32_77 dim 0 : vector<16x128xf32>, i32 -> vector<16x128xf32>
    %237 = vector.shape_cast %5 : vector<16x1xi1> to vector<16x1xi1>
    %238 = vector.broadcast %237 : vector<16x1xi1> to vector<16x128xi1>
    %239 = arith.select %238, %235, %236 : vector<16x128xi1>, vector<16x128xf32>
    %c15_i32_78 = arith.constant 15 : i32
    %240 = tpu.dynamic_rotate %235 by %c15_i32_78 dim 0 : vector<16x128xf32>, i32 -> vector<16x128xf32>
    %241 = vector.shape_cast %9 : vector<16x1xi1> to vector<16x1xi1>
    %242 = vector.broadcast %241 : vector<16x1xi1> to vector<16x128xi1>
    %243 = arith.select %242, %235, %240 : vector<16x128xi1>, vector<16x128xf32>
    %244 = arith.maximumf %239, %235 : vector<16x128xf32>
    %245 = arith.maximumf %244, %243 : vector<16x128xf32>
    %c1_i32_79 = arith.constant 1 : i32
    %246 = tpu.dynamic_rotate %245 by %c1_i32_79 dim 1 : vector<16x128xf32>, i32 -> vector<16x128xf32>
    %247 = vector.shape_cast %13 : vector<1x128xi1> to vector<1x128xi1>
    %248 = vector.broadcast %247 : vector<1x128xi1> to vector<16x128xi1>
    %249 = arith.select %248, %245, %246 : vector<16x128xi1>, vector<16x128xf32>
    %250 = arith.maximumf %249, %245 : vector<16x128xf32>
    %c127_i32_80 = arith.constant 127 : i32
    %251 = tpu.dynamic_rotate %245 by %c127_i32_80 dim 1 : vector<16x128xf32>, i32 -> vector<16x128xf32>
    %252 = vector.shape_cast %17 : vector<1x128xi1> to vector<1x128xi1>
    %253 = vector.broadcast %252 : vector<1x128xi1> to vector<16x128xi1>
    %254 = arith.select %253, %245, %251 : vector<16x128xi1>, vector<16x128xf32>
    %255 = arith.maximumf %250, %254 : vector<16x128xf32>
    %256 = arith.subf %194, %255 : vector<16x128xf32>
    %cst_81 = arith.constant 0.000000e+00 : f32
    %257 = vector.broadcast %cst_81 : f32 to vector<16x128xf32>
    %258 = arith.maximumf %256, %257 : vector<16x128xf32>
    %259 = arith.mulf %222, %258 : vector<16x128xf32>
    %260 = arith.subf %258, %259 : vector<16x128xf32>
    %cst_82 = arith.constant 0.000000e+00 : f32
    %261 = vector.broadcast %cst_82 : f32 to vector<16x128xf32>
    %262 = arith.maximumf %260, %261 : vector<16x128xf32>
    %263 = arith.addf %222, %262 : vector<16x128xf32>
    %264 = arith.minimumf %239, %235 : vector<16x128xf32>
    %265 = arith.minimumf %264, %243 : vector<16x128xf32>
    %c1_i32_83 = arith.constant 1 : i32
    %266 = tpu.dynamic_rotate %235 by %c1_i32_83 dim 1 : vector<16x128xf32>, i32 -> vector<16x128xf32>
    %267 = vector.shape_cast %13 : vector<1x128xi1> to vector<1x128xi1>
    %268 = vector.broadcast %267 : vector<1x128xi1> to vector<16x128xi1>
    %269 = arith.select %268, %235, %266 : vector<16x128xi1>, vector<16x128xf32>
    %270 = arith.minimumf %269, %235 : vector<16x128xf32>
    %c127_i32_84 = arith.constant 127 : i32
    %271 = tpu.dynamic_rotate %235 by %c127_i32_84 dim 1 : vector<16x128xf32>, i32 -> vector<16x128xf32>
    %272 = vector.shape_cast %17 : vector<1x128xi1> to vector<1x128xi1>
    %273 = vector.broadcast %272 : vector<1x128xi1> to vector<16x128xi1>
    %274 = arith.select %273, %235, %271 : vector<16x128xi1>, vector<16x128xf32>
    %275 = arith.minimumf %270, %274 : vector<16x128xf32>
    %276 = arith.minimumf %265, %275 : vector<16x128xf32>
    %c1_i32_85 = arith.constant 1 : i32
    %277 = tpu.dynamic_rotate %276 by %c1_i32_85 dim 0 : vector<16x128xf32>, i32 -> vector<16x128xf32>
    %278 = vector.shape_cast %5 : vector<16x1xi1> to vector<16x1xi1>
    %279 = vector.broadcast %278 : vector<16x1xi1> to vector<16x128xi1>
    %280 = arith.select %279, %276, %277 : vector<16x128xi1>, vector<16x128xf32>
    %c15_i32_86 = arith.constant 15 : i32
    %281 = tpu.dynamic_rotate %276 by %c15_i32_86 dim 0 : vector<16x128xf32>, i32 -> vector<16x128xf32>
    %282 = vector.shape_cast %9 : vector<16x1xi1> to vector<16x1xi1>
    %283 = vector.broadcast %282 : vector<16x1xi1> to vector<16x128xi1>
    %284 = arith.select %283, %276, %281 : vector<16x128xi1>, vector<16x128xf32>
    %285 = arith.maximumf %280, %276 : vector<16x128xf32>
    %286 = arith.maximumf %285, %284 : vector<16x128xf32>
    %c1_i32_87 = arith.constant 1 : i32
    %287 = tpu.dynamic_rotate %286 by %c1_i32_87 dim 1 : vector<16x128xf32>, i32 -> vector<16x128xf32>
    %288 = vector.shape_cast %13 : vector<1x128xi1> to vector<1x128xi1>
    %289 = vector.broadcast %288 : vector<1x128xi1> to vector<16x128xi1>
    %290 = arith.select %289, %286, %287 : vector<16x128xi1>, vector<16x128xf32>
    %291 = arith.maximumf %290, %286 : vector<16x128xf32>
    %c127_i32_88 = arith.constant 127 : i32
    %292 = tpu.dynamic_rotate %286 by %c127_i32_88 dim 1 : vector<16x128xf32>, i32 -> vector<16x128xf32>
    %293 = vector.shape_cast %17 : vector<1x128xi1> to vector<1x128xi1>
    %294 = vector.broadcast %293 : vector<1x128xi1> to vector<16x128xi1>
    %295 = arith.select %294, %286, %292 : vector<16x128xi1>, vector<16x128xf32>
    %296 = arith.maximumf %291, %295 : vector<16x128xf32>
    %297 = arith.subf %235, %296 : vector<16x128xf32>
    %cst_89 = arith.constant 0.000000e+00 : f32
    %298 = vector.broadcast %cst_89 : f32 to vector<16x128xf32>
    %299 = arith.maximumf %297, %298 : vector<16x128xf32>
    %300 = arith.mulf %263, %299 : vector<16x128xf32>
    %301 = arith.subf %299, %300 : vector<16x128xf32>
    %cst_90 = arith.constant 0.000000e+00 : f32
    %302 = vector.broadcast %cst_90 : f32 to vector<16x128xf32>
    %303 = arith.maximumf %301, %302 : vector<16x128xf32>
    %304 = arith.addf %263, %303 : vector<16x128xf32>
    %305 = arith.minimumf %280, %276 : vector<16x128xf32>
    %306 = arith.minimumf %305, %284 : vector<16x128xf32>
    %c1_i32_91 = arith.constant 1 : i32
    %307 = tpu.dynamic_rotate %276 by %c1_i32_91 dim 1 : vector<16x128xf32>, i32 -> vector<16x128xf32>
    %308 = vector.shape_cast %13 : vector<1x128xi1> to vector<1x128xi1>
    %309 = vector.broadcast %308 : vector<1x128xi1> to vector<16x128xi1>
    %310 = arith.select %309, %276, %307 : vector<16x128xi1>, vector<16x128xf32>
    %311 = arith.minimumf %310, %276 : vector<16x128xf32>
    %c127_i32_92 = arith.constant 127 : i32
    %312 = tpu.dynamic_rotate %276 by %c127_i32_92 dim 1 : vector<16x128xf32>, i32 -> vector<16x128xf32>
    %313 = vector.shape_cast %17 : vector<1x128xi1> to vector<1x128xi1>
    %314 = vector.broadcast %313 : vector<1x128xi1> to vector<16x128xi1>
    %315 = arith.select %314, %276, %312 : vector<16x128xi1>, vector<16x128xf32>
    %316 = arith.minimumf %311, %315 : vector<16x128xf32>
    %317 = arith.minimumf %306, %316 : vector<16x128xf32>
    %c1_i32_93 = arith.constant 1 : i32
    %318 = tpu.dynamic_rotate %317 by %c1_i32_93 dim 0 : vector<16x128xf32>, i32 -> vector<16x128xf32>
    %319 = vector.shape_cast %5 : vector<16x1xi1> to vector<16x1xi1>
    %320 = vector.broadcast %319 : vector<16x1xi1> to vector<16x128xi1>
    %321 = arith.select %320, %317, %318 : vector<16x128xi1>, vector<16x128xf32>
    %c15_i32_94 = arith.constant 15 : i32
    %322 = tpu.dynamic_rotate %317 by %c15_i32_94 dim 0 : vector<16x128xf32>, i32 -> vector<16x128xf32>
    %323 = vector.shape_cast %9 : vector<16x1xi1> to vector<16x1xi1>
    %324 = vector.broadcast %323 : vector<16x1xi1> to vector<16x128xi1>
    %325 = arith.select %324, %317, %322 : vector<16x128xi1>, vector<16x128xf32>
    %326 = arith.maximumf %321, %317 : vector<16x128xf32>
    %327 = arith.maximumf %326, %325 : vector<16x128xf32>
    %c1_i32_95 = arith.constant 1 : i32
    %328 = tpu.dynamic_rotate %327 by %c1_i32_95 dim 1 : vector<16x128xf32>, i32 -> vector<16x128xf32>
    %329 = vector.shape_cast %13 : vector<1x128xi1> to vector<1x128xi1>
    %330 = vector.broadcast %329 : vector<1x128xi1> to vector<16x128xi1>
    %331 = arith.select %330, %327, %328 : vector<16x128xi1>, vector<16x128xf32>
    %332 = arith.maximumf %331, %327 : vector<16x128xf32>
    %c127_i32_96 = arith.constant 127 : i32
    %333 = tpu.dynamic_rotate %327 by %c127_i32_96 dim 1 : vector<16x128xf32>, i32 -> vector<16x128xf32>
    %334 = vector.shape_cast %17 : vector<1x128xi1> to vector<1x128xi1>
    %335 = vector.broadcast %334 : vector<1x128xi1> to vector<16x128xi1>
    %336 = arith.select %335, %327, %333 : vector<16x128xi1>, vector<16x128xf32>
    %337 = arith.maximumf %332, %336 : vector<16x128xf32>
    %338 = arith.subf %276, %337 : vector<16x128xf32>
    %cst_97 = arith.constant 0.000000e+00 : f32
    %339 = vector.broadcast %cst_97 : f32 to vector<16x128xf32>
    %340 = arith.maximumf %338, %339 : vector<16x128xf32>
    %341 = arith.mulf %304, %340 : vector<16x128xf32>
    %342 = arith.subf %340, %341 : vector<16x128xf32>
    %cst_98 = arith.constant 0.000000e+00 : f32
    %343 = vector.broadcast %cst_98 : f32 to vector<16x128xf32>
    %344 = arith.maximumf %342, %343 : vector<16x128xf32>
    %345 = arith.addf %304, %344 : vector<16x128xf32>
    %346 = arith.minimumf %321, %317 : vector<16x128xf32>
    %347 = arith.minimumf %346, %325 : vector<16x128xf32>
    %c1_i32_99 = arith.constant 1 : i32
    %348 = tpu.dynamic_rotate %317 by %c1_i32_99 dim 1 : vector<16x128xf32>, i32 -> vector<16x128xf32>
    %349 = vector.shape_cast %13 : vector<1x128xi1> to vector<1x128xi1>
    %350 = vector.broadcast %349 : vector<1x128xi1> to vector<16x128xi1>
    %351 = arith.select %350, %317, %348 : vector<16x128xi1>, vector<16x128xf32>
    %352 = arith.minimumf %351, %317 : vector<16x128xf32>
    %c127_i32_100 = arith.constant 127 : i32
    %353 = tpu.dynamic_rotate %317 by %c127_i32_100 dim 1 : vector<16x128xf32>, i32 -> vector<16x128xf32>
    %354 = vector.shape_cast %17 : vector<1x128xi1> to vector<1x128xi1>
    %355 = vector.broadcast %354 : vector<1x128xi1> to vector<16x128xi1>
    %356 = arith.select %355, %317, %353 : vector<16x128xi1>, vector<16x128xf32>
    %357 = arith.minimumf %352, %356 : vector<16x128xf32>
    %358 = arith.minimumf %347, %357 : vector<16x128xf32>
    %c1_i32_101 = arith.constant 1 : i32
    %359 = tpu.dynamic_rotate %358 by %c1_i32_101 dim 0 : vector<16x128xf32>, i32 -> vector<16x128xf32>
    %360 = vector.shape_cast %5 : vector<16x1xi1> to vector<16x1xi1>
    %361 = vector.broadcast %360 : vector<16x1xi1> to vector<16x128xi1>
    %362 = arith.select %361, %358, %359 : vector<16x128xi1>, vector<16x128xf32>
    %c15_i32_102 = arith.constant 15 : i32
    %363 = tpu.dynamic_rotate %358 by %c15_i32_102 dim 0 : vector<16x128xf32>, i32 -> vector<16x128xf32>
    %364 = vector.shape_cast %9 : vector<16x1xi1> to vector<16x1xi1>
    %365 = vector.broadcast %364 : vector<16x1xi1> to vector<16x128xi1>
    %366 = arith.select %365, %358, %363 : vector<16x128xi1>, vector<16x128xf32>
    %367 = arith.maximumf %362, %358 : vector<16x128xf32>
    %368 = arith.maximumf %367, %366 : vector<16x128xf32>
    %c1_i32_103 = arith.constant 1 : i32
    %369 = tpu.dynamic_rotate %368 by %c1_i32_103 dim 1 : vector<16x128xf32>, i32 -> vector<16x128xf32>
    %370 = vector.shape_cast %13 : vector<1x128xi1> to vector<1x128xi1>
    %371 = vector.broadcast %370 : vector<1x128xi1> to vector<16x128xi1>
    %372 = arith.select %371, %368, %369 : vector<16x128xi1>, vector<16x128xf32>
    %373 = arith.maximumf %372, %368 : vector<16x128xf32>
    %c127_i32_104 = arith.constant 127 : i32
    %374 = tpu.dynamic_rotate %368 by %c127_i32_104 dim 1 : vector<16x128xf32>, i32 -> vector<16x128xf32>
    %375 = vector.shape_cast %17 : vector<1x128xi1> to vector<1x128xi1>
    %376 = vector.broadcast %375 : vector<1x128xi1> to vector<16x128xi1>
    %377 = arith.select %376, %368, %374 : vector<16x128xi1>, vector<16x128xf32>
    %378 = arith.maximumf %373, %377 : vector<16x128xf32>
    %379 = arith.subf %317, %378 : vector<16x128xf32>
    %cst_105 = arith.constant 0.000000e+00 : f32
    %380 = vector.broadcast %cst_105 : f32 to vector<16x128xf32>
    %381 = arith.maximumf %379, %380 : vector<16x128xf32>
    %382 = arith.mulf %345, %381 : vector<16x128xf32>
    %383 = arith.subf %381, %382 : vector<16x128xf32>
    %cst_106 = arith.constant 0.000000e+00 : f32
    %384 = vector.broadcast %cst_106 : f32 to vector<16x128xf32>
    %385 = arith.maximumf %383, %384 : vector<16x128xf32>
    %386 = arith.addf %345, %385 : vector<16x128xf32>
    %387 = arith.minimumf %362, %358 : vector<16x128xf32>
    %388 = arith.minimumf %387, %366 : vector<16x128xf32>
    %c1_i32_107 = arith.constant 1 : i32
    %389 = tpu.dynamic_rotate %358 by %c1_i32_107 dim 1 : vector<16x128xf32>, i32 -> vector<16x128xf32>
    %390 = vector.shape_cast %13 : vector<1x128xi1> to vector<1x128xi1>
    %391 = vector.broadcast %390 : vector<1x128xi1> to vector<16x128xi1>
    %392 = arith.select %391, %358, %389 : vector<16x128xi1>, vector<16x128xf32>
    %393 = arith.minimumf %392, %358 : vector<16x128xf32>
    %c127_i32_108 = arith.constant 127 : i32
    %394 = tpu.dynamic_rotate %358 by %c127_i32_108 dim 1 : vector<16x128xf32>, i32 -> vector<16x128xf32>
    %395 = vector.shape_cast %17 : vector<1x128xi1> to vector<1x128xi1>
    %396 = vector.broadcast %395 : vector<1x128xi1> to vector<16x128xi1>
    %397 = arith.select %396, %358, %394 : vector<16x128xi1>, vector<16x128xf32>
    %398 = arith.minimumf %393, %397 : vector<16x128xf32>
    %399 = arith.minimumf %388, %398 : vector<16x128xf32>
    %c1_i32_109 = arith.constant 1 : i32
    %400 = tpu.dynamic_rotate %399 by %c1_i32_109 dim 0 : vector<16x128xf32>, i32 -> vector<16x128xf32>
    %401 = vector.shape_cast %5 : vector<16x1xi1> to vector<16x1xi1>
    %402 = vector.broadcast %401 : vector<16x1xi1> to vector<16x128xi1>
    %403 = arith.select %402, %399, %400 : vector<16x128xi1>, vector<16x128xf32>
    %c15_i32_110 = arith.constant 15 : i32
    %404 = tpu.dynamic_rotate %399 by %c15_i32_110 dim 0 : vector<16x128xf32>, i32 -> vector<16x128xf32>
    %405 = vector.shape_cast %9 : vector<16x1xi1> to vector<16x1xi1>
    %406 = vector.broadcast %405 : vector<16x1xi1> to vector<16x128xi1>
    %407 = arith.select %406, %399, %404 : vector<16x128xi1>, vector<16x128xf32>
    %408 = arith.maximumf %403, %399 : vector<16x128xf32>
    %409 = arith.maximumf %408, %407 : vector<16x128xf32>
    %c1_i32_111 = arith.constant 1 : i32
    %410 = tpu.dynamic_rotate %409 by %c1_i32_111 dim 1 : vector<16x128xf32>, i32 -> vector<16x128xf32>
    %411 = vector.shape_cast %13 : vector<1x128xi1> to vector<1x128xi1>
    %412 = vector.broadcast %411 : vector<1x128xi1> to vector<16x128xi1>
    %413 = arith.select %412, %409, %410 : vector<16x128xi1>, vector<16x128xf32>
    %414 = arith.maximumf %413, %409 : vector<16x128xf32>
    %c127_i32_112 = arith.constant 127 : i32
    %415 = tpu.dynamic_rotate %409 by %c127_i32_112 dim 1 : vector<16x128xf32>, i32 -> vector<16x128xf32>
    %416 = vector.shape_cast %17 : vector<1x128xi1> to vector<1x128xi1>
    %417 = vector.broadcast %416 : vector<1x128xi1> to vector<16x128xi1>
    %418 = arith.select %417, %409, %415 : vector<16x128xi1>, vector<16x128xf32>
    %419 = arith.maximumf %414, %418 : vector<16x128xf32>
    %420 = arith.subf %358, %419 : vector<16x128xf32>
    %cst_113 = arith.constant 0.000000e+00 : f32
    %421 = vector.broadcast %cst_113 : f32 to vector<16x128xf32>
    %422 = arith.maximumf %420, %421 : vector<16x128xf32>
    %423 = arith.mulf %386, %422 : vector<16x128xf32>
    %424 = arith.subf %422, %423 : vector<16x128xf32>
    %cst_114 = arith.constant 0.000000e+00 : f32
    %425 = vector.broadcast %cst_114 : f32 to vector<16x128xf32>
    %426 = arith.maximumf %424, %425 : vector<16x128xf32>
    %427 = arith.addf %386, %426 : vector<16x128xf32>
    %428 = arith.minimumf %403, %399 : vector<16x128xf32>
    %429 = arith.minimumf %428, %407 : vector<16x128xf32>
    %c1_i32_115 = arith.constant 1 : i32
    %430 = tpu.dynamic_rotate %399 by %c1_i32_115 dim 1 : vector<16x128xf32>, i32 -> vector<16x128xf32>
    %431 = vector.shape_cast %13 : vector<1x128xi1> to vector<1x128xi1>
    %432 = vector.broadcast %431 : vector<1x128xi1> to vector<16x128xi1>
    %433 = arith.select %432, %399, %430 : vector<16x128xi1>, vector<16x128xf32>
    %434 = arith.minimumf %433, %399 : vector<16x128xf32>
    %c127_i32_116 = arith.constant 127 : i32
    %435 = tpu.dynamic_rotate %399 by %c127_i32_116 dim 1 : vector<16x128xf32>, i32 -> vector<16x128xf32>
    %436 = vector.shape_cast %17 : vector<1x128xi1> to vector<1x128xi1>
    %437 = vector.broadcast %436 : vector<1x128xi1> to vector<16x128xi1>
    %438 = arith.select %437, %399, %435 : vector<16x128xi1>, vector<16x128xf32>
    %439 = arith.minimumf %434, %438 : vector<16x128xf32>
    %440 = arith.minimumf %429, %439 : vector<16x128xf32>
    %c1_i32_117 = arith.constant 1 : i32
    %441 = tpu.dynamic_rotate %440 by %c1_i32_117 dim 0 : vector<16x128xf32>, i32 -> vector<16x128xf32>
    %442 = vector.shape_cast %5 : vector<16x1xi1> to vector<16x1xi1>
    %443 = vector.broadcast %442 : vector<16x1xi1> to vector<16x128xi1>
    %444 = arith.select %443, %440, %441 : vector<16x128xi1>, vector<16x128xf32>
    %c15_i32_118 = arith.constant 15 : i32
    %445 = tpu.dynamic_rotate %440 by %c15_i32_118 dim 0 : vector<16x128xf32>, i32 -> vector<16x128xf32>
    %446 = vector.shape_cast %9 : vector<16x1xi1> to vector<16x1xi1>
    %447 = vector.broadcast %446 : vector<16x1xi1> to vector<16x128xi1>
    %448 = arith.select %447, %440, %445 : vector<16x128xi1>, vector<16x128xf32>
    %449 = arith.maximumf %444, %440 : vector<16x128xf32>
    %450 = arith.maximumf %449, %448 : vector<16x128xf32>
    %c1_i32_119 = arith.constant 1 : i32
    %451 = tpu.dynamic_rotate %450 by %c1_i32_119 dim 1 : vector<16x128xf32>, i32 -> vector<16x128xf32>
    %452 = vector.shape_cast %13 : vector<1x128xi1> to vector<1x128xi1>
    %453 = vector.broadcast %452 : vector<1x128xi1> to vector<16x128xi1>
    %454 = arith.select %453, %450, %451 : vector<16x128xi1>, vector<16x128xf32>
    %455 = arith.maximumf %454, %450 : vector<16x128xf32>
    %c127_i32_120 = arith.constant 127 : i32
    %456 = tpu.dynamic_rotate %450 by %c127_i32_120 dim 1 : vector<16x128xf32>, i32 -> vector<16x128xf32>
    %457 = vector.shape_cast %17 : vector<1x128xi1> to vector<1x128xi1>
    %458 = vector.broadcast %457 : vector<1x128xi1> to vector<16x128xi1>
    %459 = arith.select %458, %450, %456 : vector<16x128xi1>, vector<16x128xf32>
    %460 = arith.maximumf %455, %459 : vector<16x128xf32>
    %461 = arith.subf %399, %460 : vector<16x128xf32>
    %cst_121 = arith.constant 0.000000e+00 : f32
    %462 = vector.broadcast %cst_121 : f32 to vector<16x128xf32>
    %463 = arith.maximumf %461, %462 : vector<16x128xf32>
    %464 = arith.mulf %427, %463 : vector<16x128xf32>
    %465 = arith.subf %463, %464 : vector<16x128xf32>
    %cst_122 = arith.constant 0.000000e+00 : f32
    %466 = vector.broadcast %cst_122 : f32 to vector<16x128xf32>
    %467 = arith.maximumf %465, %466 : vector<16x128xf32>
    %468 = arith.addf %427, %467 : vector<16x128xf32>
    %469 = arith.minimumf %444, %440 : vector<16x128xf32>
    %470 = arith.minimumf %469, %448 : vector<16x128xf32>
    %c1_i32_123 = arith.constant 1 : i32
    %471 = tpu.dynamic_rotate %440 by %c1_i32_123 dim 1 : vector<16x128xf32>, i32 -> vector<16x128xf32>
    %472 = vector.shape_cast %13 : vector<1x128xi1> to vector<1x128xi1>
    %473 = vector.broadcast %472 : vector<1x128xi1> to vector<16x128xi1>
    %474 = arith.select %473, %440, %471 : vector<16x128xi1>, vector<16x128xf32>
    %475 = arith.minimumf %474, %440 : vector<16x128xf32>
    %c127_i32_124 = arith.constant 127 : i32
    %476 = tpu.dynamic_rotate %440 by %c127_i32_124 dim 1 : vector<16x128xf32>, i32 -> vector<16x128xf32>
    %477 = vector.shape_cast %17 : vector<1x128xi1> to vector<1x128xi1>
    %478 = vector.broadcast %477 : vector<1x128xi1> to vector<16x128xi1>
    %479 = arith.select %478, %440, %476 : vector<16x128xi1>, vector<16x128xf32>
    %480 = arith.minimumf %475, %479 : vector<16x128xf32>
    %481 = arith.minimumf %470, %480 : vector<16x128xf32>
    %c1_i32_125 = arith.constant 1 : i32
    %482 = tpu.dynamic_rotate %481 by %c1_i32_125 dim 0 : vector<16x128xf32>, i32 -> vector<16x128xf32>
    %483 = vector.shape_cast %5 : vector<16x1xi1> to vector<16x1xi1>
    %484 = vector.broadcast %483 : vector<16x1xi1> to vector<16x128xi1>
    %485 = arith.select %484, %481, %482 : vector<16x128xi1>, vector<16x128xf32>
    %c15_i32_126 = arith.constant 15 : i32
    %486 = tpu.dynamic_rotate %481 by %c15_i32_126 dim 0 : vector<16x128xf32>, i32 -> vector<16x128xf32>
    %487 = vector.shape_cast %9 : vector<16x1xi1> to vector<16x1xi1>
    %488 = vector.broadcast %487 : vector<16x1xi1> to vector<16x128xi1>
    %489 = arith.select %488, %481, %486 : vector<16x128xi1>, vector<16x128xf32>
    %490 = arith.maximumf %485, %481 : vector<16x128xf32>
    %491 = arith.maximumf %490, %489 : vector<16x128xf32>
    %c1_i32_127 = arith.constant 1 : i32
    %492 = tpu.dynamic_rotate %491 by %c1_i32_127 dim 1 : vector<16x128xf32>, i32 -> vector<16x128xf32>
    %493 = vector.shape_cast %13 : vector<1x128xi1> to vector<1x128xi1>
    %494 = vector.broadcast %493 : vector<1x128xi1> to vector<16x128xi1>
    %495 = arith.select %494, %491, %492 : vector<16x128xi1>, vector<16x128xf32>
    %496 = arith.maximumf %495, %491 : vector<16x128xf32>
    %c127_i32_128 = arith.constant 127 : i32
    %497 = tpu.dynamic_rotate %491 by %c127_i32_128 dim 1 : vector<16x128xf32>, i32 -> vector<16x128xf32>
    %498 = vector.shape_cast %17 : vector<1x128xi1> to vector<1x128xi1>
    %499 = vector.broadcast %498 : vector<1x128xi1> to vector<16x128xi1>
    %500 = arith.select %499, %491, %497 : vector<16x128xi1>, vector<16x128xf32>
    %501 = arith.maximumf %496, %500 : vector<16x128xf32>
    %502 = arith.subf %440, %501 : vector<16x128xf32>
    %cst_129 = arith.constant 0.000000e+00 : f32
    %503 = vector.broadcast %cst_129 : f32 to vector<16x128xf32>
    %504 = arith.maximumf %502, %503 : vector<16x128xf32>
    %505 = arith.mulf %468, %504 : vector<16x128xf32>
    %506 = arith.subf %504, %505 : vector<16x128xf32>
    %cst_130 = arith.constant 0.000000e+00 : f32
    %507 = vector.broadcast %cst_130 : f32 to vector<16x128xf32>
    %508 = arith.maximumf %506, %507 : vector<16x128xf32>
    %509 = arith.addf %468, %508 : vector<16x128xf32>
    %c0_131 = arith.constant 0 : index
    %c3_132 = arith.constant 3 : index
    %510 = memref.load %arg5[%c0_131, %c3_132] : memref<1x8xf32, #tpu.memory_space<smem>>
    %511 = arith.mulf %509, %31 : vector<16x128xf32>
    %512 = vector.shape_cast %511 : vector<16x128xf32> to vector<1x16x128xf32>
    %cst_133 = arith.constant dense<0.000000e+00> : vector<1xf32>
    %513 = vector.multi_reduction <add>, %512, %cst_133 [1, 2] : vector<1x16x128xf32> to vector<1xf32>
    %514 = vector.shape_cast %513 : vector<1xf32> to vector<1x1x1xf32>
    %515 = vector.extract %514[0, 0, 0] : f32 from vector<1x1x1xf32>
    %516 = arith.addf %510, %515 : f32
    %c0_134 = arith.constant 0 : index
    %c3_135 = arith.constant 3 : index
    %517 = memref.load %arg5[%c0_134, %c3_135] : memref<1x8xf32, #tpu.memory_space<smem>>
    memref.store %516, %arg5[%c0_134, %c3_135] : memref<1x8xf32, #tpu.memory_space<smem>>
    %c0_136 = arith.constant 0 : index
    %c4_137 = arith.constant 4 : index
    %518 = memref.load %arg5[%c0_136, %c4_137] : memref<1x8xf32, #tpu.memory_space<smem>>
    %519 = vector.shape_cast %509 : vector<16x128xf32> to vector<1x16x128xf32>
    %cst_138 = arith.constant dense<0.000000e+00> : vector<1xf32>
    %520 = vector.multi_reduction <add>, %519, %cst_138 [1, 2] : vector<1x16x128xf32> to vector<1xf32>
    %521 = vector.shape_cast %520 : vector<1xf32> to vector<1x1x1xf32>
    %522 = vector.extract %521[0, 0, 0] : f32 from vector<1x1x1xf32>
    %523 = arith.addf %518, %522 : f32
    %c0_139 = arith.constant 0 : index
    %c4_140 = arith.constant 4 : index
    %524 = memref.load %arg5[%c0_139, %c4_140] : memref<1x8xf32, #tpu.memory_space<smem>>
    memref.store %523, %arg5[%c0_139, %c4_140] : memref<1x8xf32, #tpu.memory_space<smem>>
    %c1_i32_141 = arith.constant 1 : i32
    %525 = tpu.dynamic_rotate %31 by %c1_i32_141 dim 0 : vector<16x128xf32>, i32 -> vector<16x128xf32>
    %526 = vector.shape_cast %5 : vector<16x1xi1> to vector<16x1xi1>
    %527 = vector.broadcast %526 : vector<16x1xi1> to vector<16x128xi1>
    %528 = arith.select %527, %31, %525 : vector<16x128xi1>, vector<16x128xf32>
    %529 = arith.minimumf %528, %31 : vector<16x128xf32>
    %c15_i32_142 = arith.constant 15 : i32
    %530 = tpu.dynamic_rotate %31 by %c15_i32_142 dim 0 : vector<16x128xf32>, i32 -> vector<16x128xf32>
    %531 = vector.shape_cast %9 : vector<16x1xi1> to vector<16x1xi1>
    %532 = vector.broadcast %531 : vector<16x1xi1> to vector<16x128xi1>
    %533 = arith.select %532, %31, %530 : vector<16x128xi1>, vector<16x128xf32>
    %534 = arith.minimumf %529, %533 : vector<16x128xf32>
    %c1_i32_143 = arith.constant 1 : i32
    %535 = tpu.dynamic_rotate %31 by %c1_i32_143 dim 1 : vector<16x128xf32>, i32 -> vector<16x128xf32>
    %536 = vector.shape_cast %13 : vector<1x128xi1> to vector<1x128xi1>
    %537 = vector.broadcast %536 : vector<1x128xi1> to vector<16x128xi1>
    %538 = arith.select %537, %31, %535 : vector<16x128xi1>, vector<16x128xf32>
    %539 = arith.minimumf %538, %31 : vector<16x128xf32>
    %c127_i32_144 = arith.constant 127 : i32
    %540 = tpu.dynamic_rotate %31 by %c127_i32_144 dim 1 : vector<16x128xf32>, i32 -> vector<16x128xf32>
    %541 = vector.shape_cast %17 : vector<1x128xi1> to vector<1x128xi1>
    %542 = vector.broadcast %541 : vector<1x128xi1> to vector<16x128xi1>
    %543 = arith.select %542, %31, %540 : vector<16x128xi1>, vector<16x128xf32>
    %544 = arith.minimumf %539, %543 : vector<16x128xf32>
    %545 = arith.minimumf %534, %544 : vector<16x128xf32>
    %c1_i32_145 = arith.constant 1 : i32
    %546 = tpu.dynamic_rotate %545 by %c1_i32_145 dim 0 : vector<16x128xf32>, i32 -> vector<16x128xf32>
    %547 = vector.shape_cast %5 : vector<16x1xi1> to vector<16x1xi1>
    %548 = vector.broadcast %547 : vector<16x1xi1> to vector<16x128xi1>
    %549 = arith.select %548, %545, %546 : vector<16x128xi1>, vector<16x128xf32>
    %c15_i32_146 = arith.constant 15 : i32
    %550 = tpu.dynamic_rotate %545 by %c15_i32_146 dim 0 : vector<16x128xf32>, i32 -> vector<16x128xf32>
    %551 = vector.shape_cast %9 : vector<16x1xi1> to vector<16x1xi1>
    %552 = vector.broadcast %551 : vector<16x1xi1> to vector<16x128xi1>
    %553 = arith.select %552, %545, %550 : vector<16x128xi1>, vector<16x128xf32>
    %554 = arith.maximumf %549, %545 : vector<16x128xf32>
    %555 = arith.maximumf %554, %553 : vector<16x128xf32>
    %c1_i32_147 = arith.constant 1 : i32
    %556 = tpu.dynamic_rotate %555 by %c1_i32_147 dim 1 : vector<16x128xf32>, i32 -> vector<16x128xf32>
    %557 = vector.shape_cast %13 : vector<1x128xi1> to vector<1x128xi1>
    %558 = vector.broadcast %557 : vector<1x128xi1> to vector<16x128xi1>
    %559 = arith.select %558, %555, %556 : vector<16x128xi1>, vector<16x128xf32>
    %560 = arith.maximumf %559, %555 : vector<16x128xf32>
    %c127_i32_148 = arith.constant 127 : i32
    %561 = tpu.dynamic_rotate %555 by %c127_i32_148 dim 1 : vector<16x128xf32>, i32 -> vector<16x128xf32>
    %562 = vector.shape_cast %17 : vector<1x128xi1> to vector<1x128xi1>
    %563 = vector.broadcast %562 : vector<1x128xi1> to vector<16x128xi1>
    %564 = arith.select %563, %555, %561 : vector<16x128xi1>, vector<16x128xf32>
    %565 = arith.maximumf %560, %564 : vector<16x128xf32>
    %566 = arith.subf %31, %565 : vector<16x128xf32>
    %cst_149 = arith.constant 0.000000e+00 : f32
    %567 = vector.broadcast %cst_149 : f32 to vector<16x128xf32>
    %568 = arith.maximumf %566, %567 : vector<16x128xf32>
    %569 = arith.minimumf %549, %545 : vector<16x128xf32>
    %570 = arith.minimumf %569, %553 : vector<16x128xf32>
    %c1_i32_150 = arith.constant 1 : i32
    %571 = tpu.dynamic_rotate %545 by %c1_i32_150 dim 1 : vector<16x128xf32>, i32 -> vector<16x128xf32>
    %572 = vector.shape_cast %13 : vector<1x128xi1> to vector<1x128xi1>
    %573 = vector.broadcast %572 : vector<1x128xi1> to vector<16x128xi1>
    %574 = arith.select %573, %545, %571 : vector<16x128xi1>, vector<16x128xf32>
    %575 = arith.minimumf %574, %545 : vector<16x128xf32>
    %c127_i32_151 = arith.constant 127 : i32
    %576 = tpu.dynamic_rotate %545 by %c127_i32_151 dim 1 : vector<16x128xf32>, i32 -> vector<16x128xf32>
    %577 = vector.shape_cast %17 : vector<1x128xi1> to vector<1x128xi1>
    %578 = vector.broadcast %577 : vector<1x128xi1> to vector<16x128xi1>
    %579 = arith.select %578, %545, %576 : vector<16x128xi1>, vector<16x128xf32>
    %580 = arith.minimumf %575, %579 : vector<16x128xf32>
    %581 = arith.minimumf %570, %580 : vector<16x128xf32>
    %c1_i32_152 = arith.constant 1 : i32
    %582 = tpu.dynamic_rotate %581 by %c1_i32_152 dim 0 : vector<16x128xf32>, i32 -> vector<16x128xf32>
    %583 = vector.shape_cast %5 : vector<16x1xi1> to vector<16x1xi1>
    %584 = vector.broadcast %583 : vector<16x1xi1> to vector<16x128xi1>
    %585 = arith.select %584, %581, %582 : vector<16x128xi1>, vector<16x128xf32>
    %c15_i32_153 = arith.constant 15 : i32
    %586 = tpu.dynamic_rotate %581 by %c15_i32_153 dim 0 : vector<16x128xf32>, i32 -> vector<16x128xf32>
    %587 = vector.shape_cast %9 : vector<16x1xi1> to vector<16x1xi1>
    %588 = vector.broadcast %587 : vector<16x1xi1> to vector<16x128xi1>
    %589 = arith.select %588, %581, %586 : vector<16x128xi1>, vector<16x128xf32>
    %590 = arith.maximumf %585, %581 : vector<16x128xf32>
    %591 = arith.maximumf %590, %589 : vector<16x128xf32>
    %c1_i32_154 = arith.constant 1 : i32
    %592 = tpu.dynamic_rotate %591 by %c1_i32_154 dim 1 : vector<16x128xf32>, i32 -> vector<16x128xf32>
    %593 = vector.shape_cast %13 : vector<1x128xi1> to vector<1x128xi1>
    %594 = vector.broadcast %593 : vector<1x128xi1> to vector<16x128xi1>
    %595 = arith.select %594, %591, %592 : vector<16x128xi1>, vector<16x128xf32>
    %596 = arith.maximumf %595, %591 : vector<16x128xf32>
    %c127_i32_155 = arith.constant 127 : i32
    %597 = tpu.dynamic_rotate %591 by %c127_i32_155 dim 1 : vector<16x128xf32>, i32 -> vector<16x128xf32>
    %598 = vector.shape_cast %17 : vector<1x128xi1> to vector<1x128xi1>
    %599 = vector.broadcast %598 : vector<1x128xi1> to vector<16x128xi1>
    %600 = arith.select %599, %591, %597 : vector<16x128xi1>, vector<16x128xf32>
    %601 = arith.maximumf %596, %600 : vector<16x128xf32>
    %602 = arith.subf %545, %601 : vector<16x128xf32>
    %cst_156 = arith.constant 0.000000e+00 : f32
    %603 = vector.broadcast %cst_156 : f32 to vector<16x128xf32>
    %604 = arith.maximumf %602, %603 : vector<16x128xf32>
    %605 = arith.mulf %568, %604 : vector<16x128xf32>
    %606 = arith.subf %604, %605 : vector<16x128xf32>
    %cst_157 = arith.constant 0.000000e+00 : f32
    %607 = vector.broadcast %cst_157 : f32 to vector<16x128xf32>
    %608 = arith.maximumf %606, %607 : vector<16x128xf32>
    %609 = arith.addf %568, %608 : vector<16x128xf32>
    %610 = arith.minimumf %585, %581 : vector<16x128xf32>
    %611 = arith.minimumf %610, %589 : vector<16x128xf32>
    %c1_i32_158 = arith.constant 1 : i32
    %612 = tpu.dynamic_rotate %581 by %c1_i32_158 dim 1 : vector<16x128xf32>, i32 -> vector<16x128xf32>
    %613 = vector.shape_cast %13 : vector<1x128xi1> to vector<1x128xi1>
    %614 = vector.broadcast %613 : vector<1x128xi1> to vector<16x128xi1>
    %615 = arith.select %614, %581, %612 : vector<16x128xi1>, vector<16x128xf32>
    %616 = arith.minimumf %615, %581 : vector<16x128xf32>
    %c127_i32_159 = arith.constant 127 : i32
    %617 = tpu.dynamic_rotate %581 by %c127_i32_159 dim 1 : vector<16x128xf32>, i32 -> vector<16x128xf32>
    %618 = vector.shape_cast %17 : vector<1x128xi1> to vector<1x128xi1>
    %619 = vector.broadcast %618 : vector<1x128xi1> to vector<16x128xi1>
    %620 = arith.select %619, %581, %617 : vector<16x128xi1>, vector<16x128xf32>
    %621 = arith.minimumf %616, %620 : vector<16x128xf32>
    %622 = arith.minimumf %611, %621 : vector<16x128xf32>
    %c1_i32_160 = arith.constant 1 : i32
    %623 = tpu.dynamic_rotate %622 by %c1_i32_160 dim 0 : vector<16x128xf32>, i32 -> vector<16x128xf32>
    %624 = vector.shape_cast %5 : vector<16x1xi1> to vector<16x1xi1>
    %625 = vector.broadcast %624 : vector<16x1xi1> to vector<16x128xi1>
    %626 = arith.select %625, %622, %623 : vector<16x128xi1>, vector<16x128xf32>
    %c15_i32_161 = arith.constant 15 : i32
    %627 = tpu.dynamic_rotate %622 by %c15_i32_161 dim 0 : vector<16x128xf32>, i32 -> vector<16x128xf32>
    %628 = vector.shape_cast %9 : vector<16x1xi1> to vector<16x1xi1>
    %629 = vector.broadcast %628 : vector<16x1xi1> to vector<16x128xi1>
    %630 = arith.select %629, %622, %627 : vector<16x128xi1>, vector<16x128xf32>
    %631 = arith.maximumf %626, %622 : vector<16x128xf32>
    %632 = arith.maximumf %631, %630 : vector<16x128xf32>
    %c1_i32_162 = arith.constant 1 : i32
    %633 = tpu.dynamic_rotate %632 by %c1_i32_162 dim 1 : vector<16x128xf32>, i32 -> vector<16x128xf32>
    %634 = vector.shape_cast %13 : vector<1x128xi1> to vector<1x128xi1>
    %635 = vector.broadcast %634 : vector<1x128xi1> to vector<16x128xi1>
    %636 = arith.select %635, %632, %633 : vector<16x128xi1>, vector<16x128xf32>
    %637 = arith.maximumf %636, %632 : vector<16x128xf32>
    %c127_i32_163 = arith.constant 127 : i32
    %638 = tpu.dynamic_rotate %632 by %c127_i32_163 dim 1 : vector<16x128xf32>, i32 -> vector<16x128xf32>
    %639 = vector.shape_cast %17 : vector<1x128xi1> to vector<1x128xi1>
    %640 = vector.broadcast %639 : vector<1x128xi1> to vector<16x128xi1>
    %641 = arith.select %640, %632, %638 : vector<16x128xi1>, vector<16x128xf32>
    %642 = arith.maximumf %637, %641 : vector<16x128xf32>
    %643 = arith.subf %581, %642 : vector<16x128xf32>
    %cst_164 = arith.constant 0.000000e+00 : f32
    %644 = vector.broadcast %cst_164 : f32 to vector<16x128xf32>
    %645 = arith.maximumf %643, %644 : vector<16x128xf32>
    %646 = arith.mulf %609, %645 : vector<16x128xf32>
    %647 = arith.subf %645, %646 : vector<16x128xf32>
    %cst_165 = arith.constant 0.000000e+00 : f32
    %648 = vector.broadcast %cst_165 : f32 to vector<16x128xf32>
    %649 = arith.maximumf %647, %648 : vector<16x128xf32>
    %650 = arith.addf %609, %649 : vector<16x128xf32>
    %651 = arith.minimumf %626, %622 : vector<16x128xf32>
    %652 = arith.minimumf %651, %630 : vector<16x128xf32>
    %c1_i32_166 = arith.constant 1 : i32
    %653 = tpu.dynamic_rotate %622 by %c1_i32_166 dim 1 : vector<16x128xf32>, i32 -> vector<16x128xf32>
    %654 = vector.shape_cast %13 : vector<1x128xi1> to vector<1x128xi1>
    %655 = vector.broadcast %654 : vector<1x128xi1> to vector<16x128xi1>
    %656 = arith.select %655, %622, %653 : vector<16x128xi1>, vector<16x128xf32>
    %657 = arith.minimumf %656, %622 : vector<16x128xf32>
    %c127_i32_167 = arith.constant 127 : i32
    %658 = tpu.dynamic_rotate %622 by %c127_i32_167 dim 1 : vector<16x128xf32>, i32 -> vector<16x128xf32>
    %659 = vector.shape_cast %17 : vector<1x128xi1> to vector<1x128xi1>
    %660 = vector.broadcast %659 : vector<1x128xi1> to vector<16x128xi1>
    %661 = arith.select %660, %622, %658 : vector<16x128xi1>, vector<16x128xf32>
    %662 = arith.minimumf %657, %661 : vector<16x128xf32>
    %663 = arith.minimumf %652, %662 : vector<16x128xf32>
    %c1_i32_168 = arith.constant 1 : i32
    %664 = tpu.dynamic_rotate %663 by %c1_i32_168 dim 0 : vector<16x128xf32>, i32 -> vector<16x128xf32>
    %665 = vector.shape_cast %5 : vector<16x1xi1> to vector<16x1xi1>
    %666 = vector.broadcast %665 : vector<16x1xi1> to vector<16x128xi1>
    %667 = arith.select %666, %663, %664 : vector<16x128xi1>, vector<16x128xf32>
    %c15_i32_169 = arith.constant 15 : i32
    %668 = tpu.dynamic_rotate %663 by %c15_i32_169 dim 0 : vector<16x128xf32>, i32 -> vector<16x128xf32>
    %669 = vector.shape_cast %9 : vector<16x1xi1> to vector<16x1xi1>
    %670 = vector.broadcast %669 : vector<16x1xi1> to vector<16x128xi1>
    %671 = arith.select %670, %663, %668 : vector<16x128xi1>, vector<16x128xf32>
    %672 = arith.maximumf %667, %663 : vector<16x128xf32>
    %673 = arith.maximumf %672, %671 : vector<16x128xf32>
    %c1_i32_170 = arith.constant 1 : i32
    %674 = tpu.dynamic_rotate %673 by %c1_i32_170 dim 1 : vector<16x128xf32>, i32 -> vector<16x128xf32>
    %675 = vector.shape_cast %13 : vector<1x128xi1> to vector<1x128xi1>
    %676 = vector.broadcast %675 : vector<1x128xi1> to vector<16x128xi1>
    %677 = arith.select %676, %673, %674 : vector<16x128xi1>, vector<16x128xf32>
    %678 = arith.maximumf %677, %673 : vector<16x128xf32>
    %c127_i32_171 = arith.constant 127 : i32
    %679 = tpu.dynamic_rotate %673 by %c127_i32_171 dim 1 : vector<16x128xf32>, i32 -> vector<16x128xf32>
    %680 = vector.shape_cast %17 : vector<1x128xi1> to vector<1x128xi1>
    %681 = vector.broadcast %680 : vector<1x128xi1> to vector<16x128xi1>
    %682 = arith.select %681, %673, %679 : vector<16x128xi1>, vector<16x128xf32>
    %683 = arith.maximumf %678, %682 : vector<16x128xf32>
    %684 = arith.subf %622, %683 : vector<16x128xf32>
    %cst_172 = arith.constant 0.000000e+00 : f32
    %685 = vector.broadcast %cst_172 : f32 to vector<16x128xf32>
    %686 = arith.maximumf %684, %685 : vector<16x128xf32>
    %687 = arith.mulf %650, %686 : vector<16x128xf32>
    %688 = arith.subf %686, %687 : vector<16x128xf32>
    %cst_173 = arith.constant 0.000000e+00 : f32
    %689 = vector.broadcast %cst_173 : f32 to vector<16x128xf32>
    %690 = arith.maximumf %688, %689 : vector<16x128xf32>
    %691 = arith.addf %650, %690 : vector<16x128xf32>
    %692 = arith.minimumf %667, %663 : vector<16x128xf32>
    %693 = arith.minimumf %692, %671 : vector<16x128xf32>
    %c1_i32_174 = arith.constant 1 : i32
    %694 = tpu.dynamic_rotate %663 by %c1_i32_174 dim 1 : vector<16x128xf32>, i32 -> vector<16x128xf32>
    %695 = vector.shape_cast %13 : vector<1x128xi1> to vector<1x128xi1>
    %696 = vector.broadcast %695 : vector<1x128xi1> to vector<16x128xi1>
    %697 = arith.select %696, %663, %694 : vector<16x128xi1>, vector<16x128xf32>
    %698 = arith.minimumf %697, %663 : vector<16x128xf32>
    %c127_i32_175 = arith.constant 127 : i32
    %699 = tpu.dynamic_rotate %663 by %c127_i32_175 dim 1 : vector<16x128xf32>, i32 -> vector<16x128xf32>
    %700 = vector.shape_cast %17 : vector<1x128xi1> to vector<1x128xi1>
    %701 = vector.broadcast %700 : vector<1x128xi1> to vector<16x128xi1>
    %702 = arith.select %701, %663, %699 : vector<16x128xi1>, vector<16x128xf32>
    %703 = arith.minimumf %698, %702 : vector<16x128xf32>
    %704 = arith.minimumf %693, %703 : vector<16x128xf32>
    %c1_i32_176 = arith.constant 1 : i32
    %705 = tpu.dynamic_rotate %704 by %c1_i32_176 dim 0 : vector<16x128xf32>, i32 -> vector<16x128xf32>
    %706 = vector.shape_cast %5 : vector<16x1xi1> to vector<16x1xi1>
    %707 = vector.broadcast %706 : vector<16x1xi1> to vector<16x128xi1>
    %708 = arith.select %707, %704, %705 : vector<16x128xi1>, vector<16x128xf32>
    %c15_i32_177 = arith.constant 15 : i32
    %709 = tpu.dynamic_rotate %704 by %c15_i32_177 dim 0 : vector<16x128xf32>, i32 -> vector<16x128xf32>
    %710 = vector.shape_cast %9 : vector<16x1xi1> to vector<16x1xi1>
    %711 = vector.broadcast %710 : vector<16x1xi1> to vector<16x128xi1>
    %712 = arith.select %711, %704, %709 : vector<16x128xi1>, vector<16x128xf32>
    %713 = arith.maximumf %708, %704 : vector<16x128xf32>
    %714 = arith.maximumf %713, %712 : vector<16x128xf32>
    %c1_i32_178 = arith.constant 1 : i32
    %715 = tpu.dynamic_rotate %714 by %c1_i32_178 dim 1 : vector<16x128xf32>, i32 -> vector<16x128xf32>
    %716 = vector.shape_cast %13 : vector<1x128xi1> to vector<1x128xi1>
    %717 = vector.broadcast %716 : vector<1x128xi1> to vector<16x128xi1>
    %718 = arith.select %717, %714, %715 : vector<16x128xi1>, vector<16x128xf32>
    %719 = arith.maximumf %718, %714 : vector<16x128xf32>
    %c127_i32_179 = arith.constant 127 : i32
    %720 = tpu.dynamic_rotate %714 by %c127_i32_179 dim 1 : vector<16x128xf32>, i32 -> vector<16x128xf32>
    %721 = vector.shape_cast %17 : vector<1x128xi1> to vector<1x128xi1>
    %722 = vector.broadcast %721 : vector<1x128xi1> to vector<16x128xi1>
    %723 = arith.select %722, %714, %720 : vector<16x128xi1>, vector<16x128xf32>
    %724 = arith.maximumf %719, %723 : vector<16x128xf32>
    %725 = arith.subf %663, %724 : vector<16x128xf32>
    %cst_180 = arith.constant 0.000000e+00 : f32
    %726 = vector.broadcast %cst_180 : f32 to vector<16x128xf32>
    %727 = arith.maximumf %725, %726 : vector<16x128xf32>
    %728 = arith.mulf %691, %727 : vector<16x128xf32>
    %729 = arith.subf %727, %728 : vector<16x128xf32>
    %cst_181 = arith.constant 0.000000e+00 : f32
    %730 = vector.broadcast %cst_181 : f32 to vector<16x128xf32>
    %731 = arith.maximumf %729, %730 : vector<16x128xf32>
    %732 = arith.addf %691, %731 : vector<16x128xf32>
    %733 = arith.minimumf %708, %704 : vector<16x128xf32>
    %734 = arith.minimumf %733, %712 : vector<16x128xf32>
    %c1_i32_182 = arith.constant 1 : i32
    %735 = tpu.dynamic_rotate %704 by %c1_i32_182 dim 1 : vector<16x128xf32>, i32 -> vector<16x128xf32>
    %736 = vector.shape_cast %13 : vector<1x128xi1> to vector<1x128xi1>
    %737 = vector.broadcast %736 : vector<1x128xi1> to vector<16x128xi1>
    %738 = arith.select %737, %704, %735 : vector<16x128xi1>, vector<16x128xf32>
    %739 = arith.minimumf %738, %704 : vector<16x128xf32>
    %c127_i32_183 = arith.constant 127 : i32
    %740 = tpu.dynamic_rotate %704 by %c127_i32_183 dim 1 : vector<16x128xf32>, i32 -> vector<16x128xf32>
    %741 = vector.shape_cast %17 : vector<1x128xi1> to vector<1x128xi1>
    %742 = vector.broadcast %741 : vector<1x128xi1> to vector<16x128xi1>
    %743 = arith.select %742, %704, %740 : vector<16x128xi1>, vector<16x128xf32>
    %744 = arith.minimumf %739, %743 : vector<16x128xf32>
    %745 = arith.minimumf %734, %744 : vector<16x128xf32>
    %c1_i32_184 = arith.constant 1 : i32
    %746 = tpu.dynamic_rotate %745 by %c1_i32_184 dim 0 : vector<16x128xf32>, i32 -> vector<16x128xf32>
    %747 = vector.shape_cast %5 : vector<16x1xi1> to vector<16x1xi1>
    %748 = vector.broadcast %747 : vector<16x1xi1> to vector<16x128xi1>
    %749 = arith.select %748, %745, %746 : vector<16x128xi1>, vector<16x128xf32>
    %c15_i32_185 = arith.constant 15 : i32
    %750 = tpu.dynamic_rotate %745 by %c15_i32_185 dim 0 : vector<16x128xf32>, i32 -> vector<16x128xf32>
    %751 = vector.shape_cast %9 : vector<16x1xi1> to vector<16x1xi1>
    %752 = vector.broadcast %751 : vector<16x1xi1> to vector<16x128xi1>
    %753 = arith.select %752, %745, %750 : vector<16x128xi1>, vector<16x128xf32>
    %754 = arith.maximumf %749, %745 : vector<16x128xf32>
    %755 = arith.maximumf %754, %753 : vector<16x128xf32>
    %c1_i32_186 = arith.constant 1 : i32
    %756 = tpu.dynamic_rotate %755 by %c1_i32_186 dim 1 : vector<16x128xf32>, i32 -> vector<16x128xf32>
    %757 = vector.shape_cast %13 : vector<1x128xi1> to vector<1x128xi1>
    %758 = vector.broadcast %757 : vector<1x128xi1> to vector<16x128xi1>
    %759 = arith.select %758, %755, %756 : vector<16x128xi1>, vector<16x128xf32>
    %760 = arith.maximumf %759, %755 : vector<16x128xf32>
    %c127_i32_187 = arith.constant 127 : i32
    %761 = tpu.dynamic_rotate %755 by %c127_i32_187 dim 1 : vector<16x128xf32>, i32 -> vector<16x128xf32>
    %762 = vector.shape_cast %17 : vector<1x128xi1> to vector<1x128xi1>
    %763 = vector.broadcast %762 : vector<1x128xi1> to vector<16x128xi1>
    %764 = arith.select %763, %755, %761 : vector<16x128xi1>, vector<16x128xf32>
    %765 = arith.maximumf %760, %764 : vector<16x128xf32>
    %766 = arith.subf %704, %765 : vector<16x128xf32>
    %cst_188 = arith.constant 0.000000e+00 : f32
    %767 = vector.broadcast %cst_188 : f32 to vector<16x128xf32>
    %768 = arith.maximumf %766, %767 : vector<16x128xf32>
    %769 = arith.mulf %732, %768 : vector<16x128xf32>
    %770 = arith.subf %768, %769 : vector<16x128xf32>
    %cst_189 = arith.constant 0.000000e+00 : f32
    %771 = vector.broadcast %cst_189 : f32 to vector<16x128xf32>
    %772 = arith.maximumf %770, %771 : vector<16x128xf32>
    %773 = arith.addf %732, %772 : vector<16x128xf32>
    %774 = arith.minimumf %749, %745 : vector<16x128xf32>
    %775 = arith.minimumf %774, %753 : vector<16x128xf32>
    %c1_i32_190 = arith.constant 1 : i32
    %776 = tpu.dynamic_rotate %745 by %c1_i32_190 dim 1 : vector<16x128xf32>, i32 -> vector<16x128xf32>
    %777 = vector.shape_cast %13 : vector<1x128xi1> to vector<1x128xi1>
    %778 = vector.broadcast %777 : vector<1x128xi1> to vector<16x128xi1>
    %779 = arith.select %778, %745, %776 : vector<16x128xi1>, vector<16x128xf32>
    %780 = arith.minimumf %779, %745 : vector<16x128xf32>
    %c127_i32_191 = arith.constant 127 : i32
    %781 = tpu.dynamic_rotate %745 by %c127_i32_191 dim 1 : vector<16x128xf32>, i32 -> vector<16x128xf32>
    %782 = vector.shape_cast %17 : vector<1x128xi1> to vector<1x128xi1>
    %783 = vector.broadcast %782 : vector<1x128xi1> to vector<16x128xi1>
    %784 = arith.select %783, %745, %781 : vector<16x128xi1>, vector<16x128xf32>
    %785 = arith.minimumf %780, %784 : vector<16x128xf32>
    %786 = arith.minimumf %775, %785 : vector<16x128xf32>
    %c1_i32_192 = arith.constant 1 : i32
    %787 = tpu.dynamic_rotate %786 by %c1_i32_192 dim 0 : vector<16x128xf32>, i32 -> vector<16x128xf32>
    %788 = vector.shape_cast %5 : vector<16x1xi1> to vector<16x1xi1>
    %789 = vector.broadcast %788 : vector<16x1xi1> to vector<16x128xi1>
    %790 = arith.select %789, %786, %787 : vector<16x128xi1>, vector<16x128xf32>
    %c15_i32_193 = arith.constant 15 : i32
    %791 = tpu.dynamic_rotate %786 by %c15_i32_193 dim 0 : vector<16x128xf32>, i32 -> vector<16x128xf32>
    %792 = vector.shape_cast %9 : vector<16x1xi1> to vector<16x1xi1>
    %793 = vector.broadcast %792 : vector<16x1xi1> to vector<16x128xi1>
    %794 = arith.select %793, %786, %791 : vector<16x128xi1>, vector<16x128xf32>
    %795 = arith.maximumf %790, %786 : vector<16x128xf32>
    %796 = arith.maximumf %795, %794 : vector<16x128xf32>
    %c1_i32_194 = arith.constant 1 : i32
    %797 = tpu.dynamic_rotate %796 by %c1_i32_194 dim 1 : vector<16x128xf32>, i32 -> vector<16x128xf32>
    %798 = vector.shape_cast %13 : vector<1x128xi1> to vector<1x128xi1>
    %799 = vector.broadcast %798 : vector<1x128xi1> to vector<16x128xi1>
    %800 = arith.select %799, %796, %797 : vector<16x128xi1>, vector<16x128xf32>
    %801 = arith.maximumf %800, %796 : vector<16x128xf32>
    %c127_i32_195 = arith.constant 127 : i32
    %802 = tpu.dynamic_rotate %796 by %c127_i32_195 dim 1 : vector<16x128xf32>, i32 -> vector<16x128xf32>
    %803 = vector.shape_cast %17 : vector<1x128xi1> to vector<1x128xi1>
    %804 = vector.broadcast %803 : vector<1x128xi1> to vector<16x128xi1>
    %805 = arith.select %804, %796, %802 : vector<16x128xi1>, vector<16x128xf32>
    %806 = arith.maximumf %801, %805 : vector<16x128xf32>
    %807 = arith.subf %745, %806 : vector<16x128xf32>
    %cst_196 = arith.constant 0.000000e+00 : f32
    %808 = vector.broadcast %cst_196 : f32 to vector<16x128xf32>
    %809 = arith.maximumf %807, %808 : vector<16x128xf32>
    %810 = arith.mulf %773, %809 : vector<16x128xf32>
    %811 = arith.subf %809, %810 : vector<16x128xf32>
    %cst_197 = arith.constant 0.000000e+00 : f32
    %812 = vector.broadcast %cst_197 : f32 to vector<16x128xf32>
    %813 = arith.maximumf %811, %812 : vector<16x128xf32>
    %814 = arith.addf %773, %813 : vector<16x128xf32>
    %815 = arith.minimumf %790, %786 : vector<16x128xf32>
    %816 = arith.minimumf %815, %794 : vector<16x128xf32>
    %c1_i32_198 = arith.constant 1 : i32
    %817 = tpu.dynamic_rotate %786 by %c1_i32_198 dim 1 : vector<16x128xf32>, i32 -> vector<16x128xf32>
    %818 = vector.shape_cast %13 : vector<1x128xi1> to vector<1x128xi1>
    %819 = vector.broadcast %818 : vector<1x128xi1> to vector<16x128xi1>
    %820 = arith.select %819, %786, %817 : vector<16x128xi1>, vector<16x128xf32>
    %821 = arith.minimumf %820, %786 : vector<16x128xf32>
    %c127_i32_199 = arith.constant 127 : i32
    %822 = tpu.dynamic_rotate %786 by %c127_i32_199 dim 1 : vector<16x128xf32>, i32 -> vector<16x128xf32>
    %823 = vector.shape_cast %17 : vector<1x128xi1> to vector<1x128xi1>
    %824 = vector.broadcast %823 : vector<1x128xi1> to vector<16x128xi1>
    %825 = arith.select %824, %786, %822 : vector<16x128xi1>, vector<16x128xf32>
    %826 = arith.minimumf %821, %825 : vector<16x128xf32>
    %827 = arith.minimumf %816, %826 : vector<16x128xf32>
    %c1_i32_200 = arith.constant 1 : i32
    %828 = tpu.dynamic_rotate %827 by %c1_i32_200 dim 0 : vector<16x128xf32>, i32 -> vector<16x128xf32>
    %829 = vector.shape_cast %5 : vector<16x1xi1> to vector<16x1xi1>
    %830 = vector.broadcast %829 : vector<16x1xi1> to vector<16x128xi1>
    %831 = arith.select %830, %827, %828 : vector<16x128xi1>, vector<16x128xf32>
    %c15_i32_201 = arith.constant 15 : i32
    %832 = tpu.dynamic_rotate %827 by %c15_i32_201 dim 0 : vector<16x128xf32>, i32 -> vector<16x128xf32>
    %833 = vector.shape_cast %9 : vector<16x1xi1> to vector<16x1xi1>
    %834 = vector.broadcast %833 : vector<16x1xi1> to vector<16x128xi1>
    %835 = arith.select %834, %827, %832 : vector<16x128xi1>, vector<16x128xf32>
    %836 = arith.maximumf %831, %827 : vector<16x128xf32>
    %837 = arith.maximumf %836, %835 : vector<16x128xf32>
    %c1_i32_202 = arith.constant 1 : i32
    %838 = tpu.dynamic_rotate %837 by %c1_i32_202 dim 1 : vector<16x128xf32>, i32 -> vector<16x128xf32>
    %839 = vector.shape_cast %13 : vector<1x128xi1> to vector<1x128xi1>
    %840 = vector.broadcast %839 : vector<1x128xi1> to vector<16x128xi1>
    %841 = arith.select %840, %837, %838 : vector<16x128xi1>, vector<16x128xf32>
    %842 = arith.maximumf %841, %837 : vector<16x128xf32>
    %c127_i32_203 = arith.constant 127 : i32
    %843 = tpu.dynamic_rotate %837 by %c127_i32_203 dim 1 : vector<16x128xf32>, i32 -> vector<16x128xf32>
    %844 = vector.shape_cast %17 : vector<1x128xi1> to vector<1x128xi1>
    %845 = vector.broadcast %844 : vector<1x128xi1> to vector<16x128xi1>
    %846 = arith.select %845, %837, %843 : vector<16x128xi1>, vector<16x128xf32>
    %847 = arith.maximumf %842, %846 : vector<16x128xf32>
    %848 = arith.subf %786, %847 : vector<16x128xf32>
    %cst_204 = arith.constant 0.000000e+00 : f32
    %849 = vector.broadcast %cst_204 : f32 to vector<16x128xf32>
    %850 = arith.maximumf %848, %849 : vector<16x128xf32>
    %851 = arith.mulf %814, %850 : vector<16x128xf32>
    %852 = arith.subf %850, %851 : vector<16x128xf32>
    %cst_205 = arith.constant 0.000000e+00 : f32
    %853 = vector.broadcast %cst_205 : f32 to vector<16x128xf32>
    %854 = arith.maximumf %852, %853 : vector<16x128xf32>
    %855 = arith.addf %814, %854 : vector<16x128xf32>
    %856 = arith.minimumf %831, %827 : vector<16x128xf32>
    %857 = arith.minimumf %856, %835 : vector<16x128xf32>
    %c1_i32_206 = arith.constant 1 : i32
    %858 = tpu.dynamic_rotate %827 by %c1_i32_206 dim 1 : vector<16x128xf32>, i32 -> vector<16x128xf32>
    %859 = vector.shape_cast %13 : vector<1x128xi1> to vector<1x128xi1>
    %860 = vector.broadcast %859 : vector<1x128xi1> to vector<16x128xi1>
    %861 = arith.select %860, %827, %858 : vector<16x128xi1>, vector<16x128xf32>
    %862 = arith.minimumf %861, %827 : vector<16x128xf32>
    %c127_i32_207 = arith.constant 127 : i32
    %863 = tpu.dynamic_rotate %827 by %c127_i32_207 dim 1 : vector<16x128xf32>, i32 -> vector<16x128xf32>
    %864 = vector.shape_cast %17 : vector<1x128xi1> to vector<1x128xi1>
    %865 = vector.broadcast %864 : vector<1x128xi1> to vector<16x128xi1>
    %866 = arith.select %865, %827, %863 : vector<16x128xi1>, vector<16x128xf32>
    %867 = arith.minimumf %862, %866 : vector<16x128xf32>
    %868 = arith.minimumf %857, %867 : vector<16x128xf32>
    %c1_i32_208 = arith.constant 1 : i32
    %869 = tpu.dynamic_rotate %868 by %c1_i32_208 dim 0 : vector<16x128xf32>, i32 -> vector<16x128xf32>
    %870 = vector.shape_cast %5 : vector<16x1xi1> to vector<16x1xi1>
    %871 = vector.broadcast %870 : vector<16x1xi1> to vector<16x128xi1>
    %872 = arith.select %871, %868, %869 : vector<16x128xi1>, vector<16x128xf32>
    %c15_i32_209 = arith.constant 15 : i32
    %873 = tpu.dynamic_rotate %868 by %c15_i32_209 dim 0 : vector<16x128xf32>, i32 -> vector<16x128xf32>
    %874 = vector.shape_cast %9 : vector<16x1xi1> to vector<16x1xi1>
    %875 = vector.broadcast %874 : vector<16x1xi1> to vector<16x128xi1>
    %876 = arith.select %875, %868, %873 : vector<16x128xi1>, vector<16x128xf32>
    %877 = arith.maximumf %872, %868 : vector<16x128xf32>
    %878 = arith.maximumf %877, %876 : vector<16x128xf32>
    %c1_i32_210 = arith.constant 1 : i32
    %879 = tpu.dynamic_rotate %878 by %c1_i32_210 dim 1 : vector<16x128xf32>, i32 -> vector<16x128xf32>
    %880 = vector.shape_cast %13 : vector<1x128xi1> to vector<1x128xi1>
    %881 = vector.broadcast %880 : vector<1x128xi1> to vector<16x128xi1>
    %882 = arith.select %881, %878, %879 : vector<16x128xi1>, vector<16x128xf32>
    %883 = arith.maximumf %882, %878 : vector<16x128xf32>
    %c127_i32_211 = arith.constant 127 : i32
    %884 = tpu.dynamic_rotate %878 by %c127_i32_211 dim 1 : vector<16x128xf32>, i32 -> vector<16x128xf32>
    %885 = vector.shape_cast %17 : vector<1x128xi1> to vector<1x128xi1>
    %886 = vector.broadcast %885 : vector<1x128xi1> to vector<16x128xi1>
    %887 = arith.select %886, %878, %884 : vector<16x128xi1>, vector<16x128xf32>
    %888 = arith.maximumf %883, %887 : vector<16x128xf32>
    %889 = arith.subf %827, %888 : vector<16x128xf32>
    %cst_212 = arith.constant 0.000000e+00 : f32
    %890 = vector.broadcast %cst_212 : f32 to vector<16x128xf32>
    %891 = arith.maximumf %889, %890 : vector<16x128xf32>
    %892 = arith.mulf %855, %891 : vector<16x128xf32>
    %893 = arith.subf %891, %892 : vector<16x128xf32>
    %cst_213 = arith.constant 0.000000e+00 : f32
    %894 = vector.broadcast %cst_213 : f32 to vector<16x128xf32>
    %895 = arith.maximumf %893, %894 : vector<16x128xf32>
    %896 = arith.addf %855, %895 : vector<16x128xf32>
    %897 = arith.minimumf %872, %868 : vector<16x128xf32>
    %898 = arith.minimumf %897, %876 : vector<16x128xf32>
    %c1_i32_214 = arith.constant 1 : i32
    %899 = tpu.dynamic_rotate %868 by %c1_i32_214 dim 1 : vector<16x128xf32>, i32 -> vector<16x128xf32>
    %900 = vector.shape_cast %13 : vector<1x128xi1> to vector<1x128xi1>
    %901 = vector.broadcast %900 : vector<1x128xi1> to vector<16x128xi1>
    %902 = arith.select %901, %868, %899 : vector<16x128xi1>, vector<16x128xf32>
    %903 = arith.minimumf %902, %868 : vector<16x128xf32>
    %c127_i32_215 = arith.constant 127 : i32
    %904 = tpu.dynamic_rotate %868 by %c127_i32_215 dim 1 : vector<16x128xf32>, i32 -> vector<16x128xf32>
    %905 = vector.shape_cast %17 : vector<1x128xi1> to vector<1x128xi1>
    %906 = vector.broadcast %905 : vector<1x128xi1> to vector<16x128xi1>
    %907 = arith.select %906, %868, %904 : vector<16x128xi1>, vector<16x128xf32>
    %908 = arith.minimumf %903, %907 : vector<16x128xf32>
    %909 = arith.minimumf %898, %908 : vector<16x128xf32>
    %c1_i32_216 = arith.constant 1 : i32
    %910 = tpu.dynamic_rotate %909 by %c1_i32_216 dim 0 : vector<16x128xf32>, i32 -> vector<16x128xf32>
    %911 = vector.shape_cast %5 : vector<16x1xi1> to vector<16x1xi1>
    %912 = vector.broadcast %911 : vector<16x1xi1> to vector<16x128xi1>
    %913 = arith.select %912, %909, %910 : vector<16x128xi1>, vector<16x128xf32>
    %c15_i32_217 = arith.constant 15 : i32
    %914 = tpu.dynamic_rotate %909 by %c15_i32_217 dim 0 : vector<16x128xf32>, i32 -> vector<16x128xf32>
    %915 = vector.shape_cast %9 : vector<16x1xi1> to vector<16x1xi1>
    %916 = vector.broadcast %915 : vector<16x1xi1> to vector<16x128xi1>
    %917 = arith.select %916, %909, %914 : vector<16x128xi1>, vector<16x128xf32>
    %918 = arith.maximumf %913, %909 : vector<16x128xf32>
    %919 = arith.maximumf %918, %917 : vector<16x128xf32>
    %c1_i32_218 = arith.constant 1 : i32
    %920 = tpu.dynamic_rotate %919 by %c1_i32_218 dim 1 : vector<16x128xf32>, i32 -> vector<16x128xf32>
    %921 = vector.shape_cast %13 : vector<1x128xi1> to vector<1x128xi1>
    %922 = vector.broadcast %921 : vector<1x128xi1> to vector<16x128xi1>
    %923 = arith.select %922, %919, %920 : vector<16x128xi1>, vector<16x128xf32>
    %924 = arith.maximumf %923, %919 : vector<16x128xf32>
    %c127_i32_219 = arith.constant 127 : i32
    %925 = tpu.dynamic_rotate %919 by %c127_i32_219 dim 1 : vector<16x128xf32>, i32 -> vector<16x128xf32>
    %926 = vector.shape_cast %17 : vector<1x128xi1> to vector<1x128xi1>
    %927 = vector.broadcast %926 : vector<1x128xi1> to vector<16x128xi1>
    %928 = arith.select %927, %919, %925 : vector<16x128xi1>, vector<16x128xf32>
    %929 = arith.maximumf %924, %928 : vector<16x128xf32>
    %930 = arith.subf %868, %929 : vector<16x128xf32>
    %cst_220 = arith.constant 0.000000e+00 : f32
    %931 = vector.broadcast %cst_220 : f32 to vector<16x128xf32>
    %932 = arith.maximumf %930, %931 : vector<16x128xf32>
    %933 = arith.mulf %896, %932 : vector<16x128xf32>
    %934 = arith.subf %932, %933 : vector<16x128xf32>
    %cst_221 = arith.constant 0.000000e+00 : f32
    %935 = vector.broadcast %cst_221 : f32 to vector<16x128xf32>
    %936 = arith.maximumf %934, %935 : vector<16x128xf32>
    %937 = arith.addf %896, %936 : vector<16x128xf32>
    %938 = arith.minimumf %913, %909 : vector<16x128xf32>
    %939 = arith.minimumf %938, %917 : vector<16x128xf32>
    %c1_i32_222 = arith.constant 1 : i32
    %940 = tpu.dynamic_rotate %909 by %c1_i32_222 dim 1 : vector<16x128xf32>, i32 -> vector<16x128xf32>
    %941 = vector.shape_cast %13 : vector<1x128xi1> to vector<1x128xi1>
    %942 = vector.broadcast %941 : vector<1x128xi1> to vector<16x128xi1>
    %943 = arith.select %942, %909, %940 : vector<16x128xi1>, vector<16x128xf32>
    %944 = arith.minimumf %943, %909 : vector<16x128xf32>
    %c127_i32_223 = arith.constant 127 : i32
    %945 = tpu.dynamic_rotate %909 by %c127_i32_223 dim 1 : vector<16x128xf32>, i32 -> vector<16x128xf32>
    %946 = vector.shape_cast %17 : vector<1x128xi1> to vector<1x128xi1>
    %947 = vector.broadcast %946 : vector<1x128xi1> to vector<16x128xi1>
    %948 = arith.select %947, %909, %945 : vector<16x128xi1>, vector<16x128xf32>
    %949 = arith.minimumf %944, %948 : vector<16x128xf32>
    %950 = arith.minimumf %939, %949 : vector<16x128xf32>
    %c1_i32_224 = arith.constant 1 : i32
    %951 = tpu.dynamic_rotate %950 by %c1_i32_224 dim 0 : vector<16x128xf32>, i32 -> vector<16x128xf32>
    %952 = vector.shape_cast %5 : vector<16x1xi1> to vector<16x1xi1>
    %953 = vector.broadcast %952 : vector<16x1xi1> to vector<16x128xi1>
    %954 = arith.select %953, %950, %951 : vector<16x128xi1>, vector<16x128xf32>
    %c15_i32_225 = arith.constant 15 : i32
    %955 = tpu.dynamic_rotate %950 by %c15_i32_225 dim 0 : vector<16x128xf32>, i32 -> vector<16x128xf32>
    %956 = vector.shape_cast %9 : vector<16x1xi1> to vector<16x1xi1>
    %957 = vector.broadcast %956 : vector<16x1xi1> to vector<16x128xi1>
    %958 = arith.select %957, %950, %955 : vector<16x128xi1>, vector<16x128xf32>
    %959 = arith.maximumf %954, %950 : vector<16x128xf32>
    %960 = arith.maximumf %959, %958 : vector<16x128xf32>
    %c1_i32_226 = arith.constant 1 : i32
    %961 = tpu.dynamic_rotate %960 by %c1_i32_226 dim 1 : vector<16x128xf32>, i32 -> vector<16x128xf32>
    %962 = vector.shape_cast %13 : vector<1x128xi1> to vector<1x128xi1>
    %963 = vector.broadcast %962 : vector<1x128xi1> to vector<16x128xi1>
    %964 = arith.select %963, %960, %961 : vector<16x128xi1>, vector<16x128xf32>
    %965 = arith.maximumf %964, %960 : vector<16x128xf32>
    %c127_i32_227 = arith.constant 127 : i32
    %966 = tpu.dynamic_rotate %960 by %c127_i32_227 dim 1 : vector<16x128xf32>, i32 -> vector<16x128xf32>
    %967 = vector.shape_cast %17 : vector<1x128xi1> to vector<1x128xi1>
    %968 = vector.broadcast %967 : vector<1x128xi1> to vector<16x128xi1>
    %969 = arith.select %968, %960, %966 : vector<16x128xi1>, vector<16x128xf32>
    %970 = arith.maximumf %965, %969 : vector<16x128xf32>
    %971 = arith.subf %909, %970 : vector<16x128xf32>
    %cst_228 = arith.constant 0.000000e+00 : f32
    %972 = vector.broadcast %cst_228 : f32 to vector<16x128xf32>
    %973 = arith.maximumf %971, %972 : vector<16x128xf32>
    %974 = arith.mulf %937, %973 : vector<16x128xf32>
    %975 = arith.subf %973, %974 : vector<16x128xf32>
    %cst_229 = arith.constant 0.000000e+00 : f32
    %976 = vector.broadcast %cst_229 : f32 to vector<16x128xf32>
    %977 = arith.maximumf %975, %976 : vector<16x128xf32>
    %978 = arith.addf %937, %977 : vector<16x128xf32>
    %c0_230 = arith.constant 0 : index
    %c5_231 = arith.constant 5 : index
    %979 = memref.load %arg5[%c0_230, %c5_231] : memref<1x8xf32, #tpu.memory_space<smem>>
    %980 = arith.mulf %978, %33 : vector<16x128xf32>
    %981 = vector.shape_cast %980 : vector<16x128xf32> to vector<1x16x128xf32>
    %cst_232 = arith.constant dense<0.000000e+00> : vector<1xf32>
    %982 = vector.multi_reduction <add>, %981, %cst_232 [1, 2] : vector<1x16x128xf32> to vector<1xf32>
    %983 = vector.shape_cast %982 : vector<1xf32> to vector<1x1x1xf32>
    %984 = vector.extract %983[0, 0, 0] : f32 from vector<1x1x1xf32>
    %985 = arith.addf %979, %984 : f32
    %c0_233 = arith.constant 0 : index
    %c5_234 = arith.constant 5 : index
    %986 = memref.load %arg5[%c0_233, %c5_234] : memref<1x8xf32, #tpu.memory_space<smem>>
    memref.store %985, %arg5[%c0_233, %c5_234] : memref<1x8xf32, #tpu.memory_space<smem>>
    %c0_235 = arith.constant 0 : index
    %c6_236 = arith.constant 6 : index
    %987 = memref.load %arg5[%c0_235, %c6_236] : memref<1x8xf32, #tpu.memory_space<smem>>
    %988 = vector.shape_cast %978 : vector<16x128xf32> to vector<1x16x128xf32>
    %cst_237 = arith.constant dense<0.000000e+00> : vector<1xf32>
    %989 = vector.multi_reduction <add>, %988, %cst_237 [1, 2] : vector<1x16x128xf32> to vector<1xf32>
    %990 = vector.shape_cast %989 : vector<1xf32> to vector<1x1x1xf32>
    %991 = vector.extract %990[0, 0, 0] : f32 from vector<1x1x1xf32>
    %992 = arith.addf %987, %991 : f32
    %c0_238 = arith.constant 0 : index
    %c6_239 = arith.constant 6 : index
    %993 = memref.load %arg5[%c0_238, %c6_239] : memref<1x8xf32, #tpu.memory_space<smem>>
    memref.store %992, %arg5[%c0_238, %c6_239] : memref<1x8xf32, #tpu.memory_space<smem>>
    %c1_i32_240 = arith.constant 1 : i32
    return
  }
  func.func @transform_0(%arg0: i32) -> (i32, i32) {
    %c0_i32 = arith.constant 0 : i32
    %c0_i32_0 = arith.constant 0 : i32
    %c0_i32_1 = arith.constant 0 : i32
    return %c0_i32, %c0_i32_0 : i32, i32
  }
  func.func @transform_1(%arg0: i32) -> (i32, i32) {
    %c0_i32 = arith.constant 0 : i32
    %c0_i32_0 = arith.constant 0 : i32
    %c0_i32_1 = arith.constant 0 : i32
    return %c0_i32, %c0_i32_0 : i32, i32
  }
  func.func @transform_2(%arg0: i32) -> (i32, i32) {
    %c0_i32 = arith.constant 0 : i32
    %c0_i32_0 = arith.constant 0 : i32
    return %arg0, %c0_i32 : i32, i32
  }
  func.func @transform_3(%arg0: i32) -> (i32, i32) {
    %c0_i32 = arith.constant 0 : i32
    %c0_i32_0 = arith.constant 0 : i32
    return %arg0, %c0_i32 : i32, i32
  }
  func.func @transform_4(%arg0: i32) -> (i32, i32) {
    %c0_i32 = arith.constant 0 : i32
    %c0_i32_0 = arith.constant 0 : i32
    return %arg0, %c0_i32 : i32, i32
  }
}

</mosaic_0001>

<llo_original>
// kernel: tpu_custom_call.1
$region0: #{tpu_custom_call.1}
  #allocation0 [shape = 'u32[]', space=smem, size = 0x4, offset = 0x4, fixed_abs, tag = 'smem constant byte address 0x4 - core index']
  #allocation1 [shape = 'u32[144,128]{1,0:T(1,128)}', space=vmem, size = 0x12000, scoped, tag = 'internal scratch']
  %s0 = inlined_call_operand.vmem [shape: s32[16,1], index: 0, kind: input, shape index: {}]
  %s1 = inlined_call_operand.vmem [shape: s32[1,128], index: 1, kind: input, shape index: {}]
  %s2 = inlined_call_operand.vmem [shape: f32[16,128], index: 2, kind: input, shape index: {}]
  %s3 = inlined_call_operand.hbm [shape: f32[16,128], index: 3, kind: input, shape index: {}]
  %s4 = inlined_call_operand.hbm [shape: f32[1,8], index: 4, kind: output, shape index: {}]
  %s5 = sld [smem:[#allocation0]]
  $region30: #{tpu_custom_call.1} parent=0
    _
  %s7 = ssub.s32 1, %s5
  %s8 = scalar_select 0, %s7, %s5
  $region1: #{tpu_custom_call.1} parent=0
    #allocation2 [shape = 'u8[8192]{0}', space=vmem, size = 0x2000, scoped, tag = 'input window, operand 3, single buffered']
    #allocation3 [shape = 's32[1]{0}', space=sflag, size = 0x4, scoped, tag = 'scoped memory for tpu_custom_call.1']
    #allocation4 [shape = 's32[1]{0}', space=sflag, size = 0x4, scoped, tag = 'scoped memory for tpu_custom_call.1']
    #allocation5 [shape = 'u8[512]{0}', space=smem, size = 0x200, scoped, tag = 'output window, operand 0, single buffered']
    %9 = vsyncpa [#allocation3], 0
    %10 = vsyncpa [#allocation4], 0
    // Predicated region
    $region2: #{tpu_custom_call.1} parent=1 // pred_check
      _
    $region3: #{tpu_custom_call.1} parent=1 // pred_check_branch
      %12 = sbr.rel (0) target = $region5
    $region4: #{tpu_custom_call.1} parent=1 // pred_region
      _
    $region5: #{tpu_custom_call.1} parent=1 // pred_fallthru
      _
    // Predicated region
    $region6: #{tpu_custom_call.1} parent=1 // pred_check
      _
    $region7: #{tpu_custom_call.1} parent=1 // pred_check_branch
      %14 = sbr.rel (0) target = $region9
    $region8: #{tpu_custom_call.1} parent=1 // pred_region
      _
    $region9: #{tpu_custom_call.1} parent=1 // pred_fallthru
      _
    // Predicated region
    $region10: #{tpu_custom_call.1} parent=1 // pred_check
      _
    $region11: #{tpu_custom_call.1} parent=1 // pred_check_branch
      %16 = sbr.rel (0) target = $region13
    $region12: #{tpu_custom_call.1} parent=1 // pred_region
      _
    $region13: #{tpu_custom_call.1} parent=1 // pred_fallthru
      _
    // Predicated region
    $region14: #{tpu_custom_call.1} parent=1 // pred_check
      _
    $region15: #{tpu_custom_call.1} parent=1 // pred_check_branch
      %18 = sbr.rel (0) target = $region17
    $region16: #{tpu_custom_call.1} parent=1 // pred_region
      %s20 = ssub.s32 256, 256
      %21 = vsyncadd [#allocation3], %s20
      %s22 = sshll.u32 [#allocation2], 4
      %s23 = int_to_ptr.vmem [resolvable:$true] %s22
      %28 = dma.hbm_to_vmem [thread:$0]  %s3, 256, %s23, [#allocation3], 128, 128, 8
    $region17: #{tpu_custom_call.1} parent=1 // pred_fallthru
      _
    // Predicated region
    $region18: #{tpu_custom_call.1} parent=1 // pred_check
      _
    $region19: #{tpu_custom_call.1} parent=1 // pred_check_branch
      %30 = sbr.rel (0) target = $region21
    $region20: #{tpu_custom_call.1} parent=1 // pred_region
      %31 = dma.done [#allocation3], 256
    $region21: #{tpu_custom_call.1} parent=1 // pred_fallthru
      _
    %v32 = vld [vmem:[%s0] sm:$0xff]
    %v33 = vld [vmem:[%s0 + $0x8] sm:$0xff]
    %v34 = vld [vmem:[%s1] sm:$0x1]
    %v35 = vand.u32 %v32, 1
    %v36 = vand.u32 %v33, 1
    %vm37 = vcmp.ne.s32.totalorder %v35, 0
    %vm38 = vcmp.ne.s32.totalorder %v36, 0
    %v39 = vand.u32 %v32, 2
    %v40 = vand.u32 %v33, 2
    %vm41 = vcmp.ne.s32.totalorder %v39, 0
    %vm42 = vcmp.ne.s32.totalorder %v40, 0
    %v43 = vand.u32 %v34, 1
    %vm44 = vcmp.ne.s32.totalorder %v43, 0
    %v45 = vand.u32 %v34, 2
    %vm46 = vcmp.ne.s32.totalorder %v45, 0
    %s47 = scalar_lea.smem [#allocation5], 0
    %48 = sst [smem:[%s47]] 0.0
    %s49 = scalar_lea.smem [#allocation5], 1
    %50 = sst [smem:[%s49]] 0.0
    %s51 = scalar_lea.smem [#allocation5], 2
    %52 = sst [smem:[%s51]] 0.0
    %s53 = scalar_lea.smem [#allocation5], 3
    %54 = sst [smem:[%s53]] 0.0
    %s55 = scalar_lea.smem [#allocation5], 4
    %56 = sst [smem:[%s55]] 0.0
    %s57 = scalar_lea.smem [#allocation5], 5
    %58 = sst [smem:[%s57]] 0.0
    %s59 = scalar_lea.smem [#allocation5], 6
    %60 = sst [smem:[%s59]] 0.0
    %s61 = scalar_lea.smem [#allocation5], 7
    %62 = sst [smem:[%s61]] 0.0
    %v63 = vld [vmem:[%s2] sm:$0xff]
    %v64 = vld [vmem:[%s2 + $0x8] sm:$0xff]
    %v65 = vld [vmem:[#allocation2] sm:$0xff]
    %v66 = vld [vmem:[#allocation2 + $0x8] sm:$0xff]
    %s67 = sld [smem:[#allocation5]]
    %v68 = vmul.f32 %v63, %v65
    %v69 = vmul.f32 %v64, %v66
    %v70 = vadd.f32 %v68, %v69
    %71 = vadd.xlane.f32.xlu0 %v70
    %v72 = vpop.xlane.xlu0 %71
    %v73 = vrot.slane %v72, 4
    %v74 = vadd.f32 %v72, %v73
    %v75 = vrot.slane %v74, 2
    %v76 = vadd.f32 %v74, %v75
    %v77 = vrot.slane %v76, 1
    %v78 = vadd.f32 %v76, %v77
    %s79 = vtos %v78
    %s80 = sadd.f32 %s67, %s79
    %81 = sst [smem:[%s47]] %s80
    %s82 = sld [smem:[#allocation5 + $0x1]]
    %v83 = vadd.f32 %v63, %v64
    %84 = vadd.xlane.f32.xlu0 %v83
    %v85 = vpop.xlane.xlu0 %84
    %v86 = vrot.slane %v85, 4
    %v87 = vadd.f32 %v85, %v86
    %v88 = vrot.slane %v87, 2
    %v89 = vadd.f32 %v87, %v88
    %v90 = vrot.slane %v89, 1
    %v91 = vadd.f32 %v89, %v90
    %s92 = vtos %v91
    %s93 = sadd.f32 %s82, %s92
    %94 = sst [smem:[%s49]] %s93
    %s95 = sld [smem:[#allocation5 + $0x2]]
    %v96 = vadd.f32 %v65, %v66
    %97 = vadd.xlane.f32.xlu0 %v96
    %v98 = vpop.xlane.xlu0 %97
    %v99 = vrot.slane %v98, 4
    %v100 = vadd.f32 %v98, %v99
    %v101 = vrot.slane %v100, 2
    %v102 = vadd.f32 %v100, %v101
    %v103 = vrot.slane %v102, 1
    %v104 = vadd.f32 %v102, %v103
    %s105 = vtos %v104
    %s106 = sadd.f32 %s95, %s105
    %107 = sst [smem:[%s51]] %s106
    %v108 = vrot.slane %v65, 7
    %v109 = vrot.slane %v66, 7
    %v110 = vlaneseq
    %v111 = vshrl.u32 %v110, 7
    %vm112 = vcmp.lt.s32.totalorder %v111, 1
    %v113 = vsel %vm112, %v108, %v109
    %v114 = vsel %vm112, %v109, %v108
    %v115 = vsel %vm37, 1, 0
    %v116 = vsel %vm38, 1, 0
    %117 = vset.pattern.permute.xlu0 0
    %118 = vperm.xlu0 %117, %v115
    %v119 = vpop.permute.xlu0 %118
    %120 = vset.pattern.permute.xlu0 0
    %121 = vperm.xlu0 %120, %v116
    %v122 = vpop.permute.xlu0 %121
    %vm123 = vcmp.eq.s32.totalorder %v119, 1
    %vm124 = vcmp.eq.s32.totalorder %v122, 1
    %v125 = vsel %vm123, %v65, %v114
    %v126 = vsel %vm124, %v66, %v113
    %v127 = vmin.f32 %v125, %v65
    %v128 = vmin.f32 %v126, %v66
    %v129 = vrot.slane %v65, 1
    %v130 = vrot.slane %v66, 1
    %vm131 = vcmp.lt.s32.totalorder %v111, 7
    %v132 = vsel %vm131, %v129, %v130
    %v133 = vsel %vm131, %v130, %v129
    %v134 = vsel %vm41, 1, 0
    %v135 = vsel %vm42, 1, 0
    %136 = vset.pattern.permute.xlu0 0
    %137 = vperm.xlu0 %136, %v134
    %v138 = vpop.permute.xlu0 %137
    %139 = vset.pattern.permute.xlu0 0
    %140 = vperm.xlu0 %139, %v135
    %v141 = vpop.permute.xlu0 %140
    %vm142 = vcmp.eq.s32.totalorder %v138, 1
    %vm143 = vcmp.eq.s32.totalorder %v141, 1
    %v144 = vsel %vm142, %v65, %v132
    %v145 = vsel %vm143, %v66, %v133
    %v146 = vmin.f32 %v127, %v144
    %v147 = vmin.f32 %v128, %v145
    %148 = vrot.lane.b32.xlu0 %v65, 1
    %v149 = vpop.permute.xlu0 %148
    %150 = vrot.lane.b32.xlu0 %v66, 1
    %v151 = vpop.permute.xlu0 %150
    %v152 = vsel %vm44, 1, 0
    %v153 = vlaneseq
    %v154 = vshrl.u32 %v153, 7
    %v155 = vsub.s32 0, %v154
    %v156 = vrot.slane %v152, %v155
    %vm157 = vcmp.eq.s32.totalorder %v156, 1
    %v158 = vsel %vm157, %v65, %v149
    %v159 = vsel %vm157, %v66, %v151
    %v160 = vmin.f32 %v158, %v65
    %v161 = vmin.f32 %v159, %v66
    %162 = vrot.lane.b32.xlu0 %v65, 127
    %v163 = vpop.permute.xlu0 %162
    %164 = vrot.lane.b32.xlu0 %v66, 127
    %v165 = vpop.permute.xlu0 %164
    %v166 = vsel %vm46, 1, 0
    %v167 = vlaneseq
    %v168 = vshrl.u32 %v167, 7
    %v169 = vsub.s32 0, %v168
    %v170 = vrot.slane %v166, %v169
    %vm171 = vcmp.eq.s32.totalorder %v170, 1
    %v172 = vsel %vm171, %v65, %v163
    %v173 = vsel %vm171, %v66, %v165
    %v174 = vmin.f32 %v160, %v172
    %v175 = vmin.f32 %v161, %v173
    %v176 = vmin.f32 %v146, %v174
    %v177 = vmin.f32 %v147, %v175
    %v178 = vrot.slane %v176, 7
    %v179 = vrot.slane %v177, 7
    %v180 = vsel %vm112, %v178, %v179
    %v181 = vsel %vm112, %v179, %v178
    %v182 = vsel %vm123, %v176, %v181
    %v183 = vsel %vm124, %v177, %v180
    %v184 = vrot.slane %v176, 1
    %v185 = vrot.slane %v177, 1
    %v186 = vsel %vm131, %v184, %v185
    %v187 = vsel %vm131, %v185, %v184
    %v188 = vsel %vm142, %v176, %v186
    %v189 = vsel %vm143, %v177, %v187
    %v190 = vmax.f32 %v182, %v176
    %v191 = vmax.f32 %v183, %v177
    %v192 = vmax.f32 %v190, %v188
    %v193 = vmax.f32 %v191, %v189
    %194 = vrot.lane.b32.xlu0 %v192, 1
    %v195 = vpop.permute.xlu0 %194
    %196 = vrot.lane.b32.xlu0 %v193, 1
    %v197 = vpop.permute.xlu0 %196
    %v198 = vsel %vm157, %v192, %v195
    %v199 = vsel %vm157, %v193, %v197
    %v200 = vmax.f32 %v198, %v192
    %v201 = vmax.f32 %v199, %v193
    %202 = vrot.lane.b32.xlu0 %v192, 127
    %v203 = vpop.permute.xlu0 %202
    %204 = vrot.lane.b32.xlu0 %v193, 127
    %v205 = vpop.permute.xlu0 %204
    %v206 = vsel %vm171, %v192, %v203
    %v207 = vsel %vm171, %v193, %v205
    %v208 = vmax.f32 %v200, %v206
    %v209 = vmax.f32 %v201, %v207
    %v210 = vsub.f32 %v65, %v208
    %v211 = vsub.f32 %v66, %v209
    %v212 = vmax.f32 %v210, 0.0
    %v213 = vmax.f32 %v211, 0.0
    %v214 = vmin.f32 %v182, %v176
    %v215 = vmin.f32 %v183, %v177
    %v216 = vmin.f32 %v214, %v188
    %v217 = vmin.f32 %v215, %v189
    %218 = vrot.lane.b32.xlu0 %v176, 1
    %v219 = vpop.permute.xlu0 %218
    %220 = vrot.lane.b32.xlu0 %v177, 1
    %v221 = vpop.permute.xlu0 %220
    %v222 = vsel %vm157, %v176, %v219
    %v223 = vsel %vm157, %v177, %v221
    %v224 = vmin.f32 %v222, %v176
    %v225 = vmin.f32 %v223, %v177
    %226 = vrot.lane.b32.xlu0 %v176, 127
    %v227 = vpop.permute.xlu0 %226
    %228 = vrot.lane.b32.xlu0 %v177, 127
    %v229 = vpop.permute.xlu0 %228
    %v230 = vsel %vm171, %v176, %v227
    %v231 = vsel %vm171, %v177, %v229
    %v232 = vmin.f32 %v224, %v230
    %v233 = vmin.f32 %v225, %v231
    %v234 = vmin.f32 %v216, %v232
    %v235 = vmin.f32 %v217, %v233
    %v236 = vrot.slane %v234, 7
    %v237 = vrot.slane %v235, 7
    %v238 = vsel %vm112, %v236, %v237
    %v239 = vsel %vm112, %v237, %v236
    %v240 = vsel %vm123, %v234, %v239
    %v241 = vsel %vm124, %v235, %v238
    %v242 = vrot.slane %v234, 1
    %v243 = vrot.slane %v235, 1
    %v244 = vsel %vm131, %v242, %v243
    %v245 = vsel %vm131, %v243, %v242
    %v246 = vsel %vm142, %v234, %v244
    %v247 = vsel %vm143, %v235, %v245
    %v248 = vmax.f32 %v240, %v234
    %v249 = vmax.f32 %v241, %v235
    %v250 = vmax.f32 %v248, %v246
    %v251 = vmax.f32 %v249, %v247
    %252 = vrot.lane.b32.xlu0 %v250, 1
    %v253 = vpop.permute.xlu0 %252
    %254 = vrot.lane.b32.xlu0 %v251, 1
    %v255 = vpop.permute.xlu0 %254
    %v256 = vsel %vm157, %v250, %v253
    %v257 = vsel %vm157, %v251, %v255
    %v258 = vmax.f32 %v256, %v250
    %v259 = vmax.f32 %v257, %v251
    %260 = vrot.lane.b32.xlu0 %v250, 127
    %v261 = vpop.permute.xlu0 %260
    %262 = vrot.lane.b32.xlu0 %v251, 127
    %v263 = vpop.permute.xlu0 %262
    %v264 = vsel %vm171, %v250, %v261
    %v265 = vsel %vm171, %v251, %v263
    %v266 = vmax.f32 %v258, %v264
    %v267 = vmax.f32 %v259, %v265
    %v268 = vsub.f32 %v176, %v266
    %v269 = vsub.f32 %v177, %v267
    %v270 = vmax.f32 %v268, 0.0
    %v271 = vmax.f32 %v269, 0.0
    %v272 = vmul.f32 %v212, %v270
    %v273 = vmul.f32 %v213, %v271
    %v274 = vsub.f32 %v270, %v272
    %v275 = vsub.f32 %v271, %v273
    %v276 = vmax.f32 %v274, 0.0
    %v277 = vmax.f32 %v275, 0.0
    %v278 = vadd.f32 %v212, %v276
    %v279 = vadd.f32 %v213, %v277
    %v280 = vmin.f32 %v240, %v234
    %v281 = vmin.f32 %v241, %v235
    %v282 = vmin.f32 %v280, %v246
    %v283 = vmin.f32 %v281, %v247
    %284 = vrot.lane.b32.xlu0 %v234, 1
    %v285 = vpop.permute.xlu0 %284
    %286 = vrot.lane.b32.xlu0 %v235, 1
    %v287 = vpop.permute.xlu0 %286
    %v288 = vsel %vm157, %v234, %v285
    %v289 = vsel %vm157, %v235, %v287
    %v290 = vmin.f32 %v288, %v234
    %v291 = vmin.f32 %v289, %v235
    %292 = vrot.lane.b32.xlu0 %v234, 127
    %v293 = vpop.permute.xlu0 %292
    %294 = vrot.lane.b32.xlu0 %v235, 127
    %v295 = vpop.permute.xlu0 %294
    %v296 = vsel %vm171, %v234, %v293
    %v297 = vsel %vm171, %v235, %v295
    %v298 = vmin.f32 %v290, %v296
    %v299 = vmin.f32 %v291, %v297
    %v300 = vmin.f32 %v282, %v298
    %v301 = vmin.f32 %v283, %v299
    %v302 = vrot.slane %v300, 7
    %v303 = vrot.slane %v301, 7
    %v304 = vsel %vm112, %v302, %v303
    %v305 = vsel %vm112, %v303, %v302
    %v306 = vsel %vm123, %v300, %v305
    %v307 = vsel %vm124, %v301, %v304
    %v308 = vrot.slane %v300, 1
    %v309 = vrot.slane %v301, 1
    %v310 = vsel %vm131, %v308, %v309
    %v311 = vsel %vm131, %v309, %v308
    %v312 = vsel %vm142, %v300, %v310
    %v313 = vsel %vm143, %v301, %v311
    %v314 = vmax.f32 %v306, %v300
    %v315 = vmax.f32 %v307, %v301
    %v316 = vmax.f32 %v314, %v312
    %v317 = vmax.f32 %v315, %v313
    %318 = vrot.lane.b32.xlu0 %v316, 1
    %v319 = vpop.permute.xlu0 %318
    %320 = vrot.lane.b32.xlu0 %v317, 1
    %v321 = vpop.permute.xlu0 %320
    %v322 = vsel %vm157, %v316, %v319
    %v323 = vsel %vm157, %v317, %v321
    %v324 = vmax.f32 %v322, %v316
    %v325 = vmax.f32 %v323, %v317
    %326 = vrot.lane.b32.xlu0 %v316, 127
    %v327 = vpop.permute.xlu0 %326
    %328 = vrot.lane.b32.xlu0 %v317, 127
    %v329 = vpop.permute.xlu0 %328
    %v330 = vsel %vm171, %v316, %v327
    %v331 = vsel %vm171, %v317, %v329
    %v332 = vmax.f32 %v324, %v330
    %v333 = vmax.f32 %v325, %v331
    %v334 = vsub.f32 %v234, %v332
    %v335 = vsub.f32 %v235, %v333
    %v336 = vmax.f32 %v334, 0.0
    %v337 = vmax.f32 %v335, 0.0
    %v338 = vmul.f32 %v278, %v336
    %v339 = vmul.f32 %v279, %v337
    %v340 = vsub.f32 %v336, %v338
    %v341 = vsub.f32 %v337, %v339
    %v342 = vmax.f32 %v340, 0.0
    %v343 = vmax.f32 %v341, 0.0
    %v344 = vadd.f32 %v278, %v342
    %v345 = vadd.f32 %v279, %v343
    %v346 = vmin.f32 %v306, %v300
    %v347 = vmin.f32 %v307, %v301
    %v348 = vmin.f32 %v346, %v312
    %v349 = vmin.f32 %v347, %v313
    %350 = vrot.lane.b32.xlu0 %v300, 1
    %v351 = vpop.permute.xlu0 %350
    %352 = vrot.lane.b32.xlu0 %v301, 1
    %v353 = vpop.permute.xlu0 %352
    %v354 = vsel %vm157, %v300, %v351
    %v355 = vsel %vm157, %v301, %v353
    %v356 = vmin.f32 %v354, %v300
    %v357 = vmin.f32 %v355, %v301
    %358 = vrot.lane.b32.xlu0 %v300, 127
    %v359 = vpop.permute.xlu0 %358
    %360 = vrot.lane.b32.xlu0 %v301, 127
    %v361 = vpop.permute.xlu0 %360
    %v362 = vsel %vm171, %v300, %v359
    %v363 = vsel %vm171, %v301, %v361
    %v364 = vmin.f32 %v356, %v362
    %v365 = vmin.f32 %v357, %v363
    %v366 = vmin.f32 %v348, %v364
    %v367 = vmin.f32 %v349, %v365
    %v368 = vrot.slane %v366, 7
    %v369 = vrot.slane %v367, 7
    %v370 = vsel %vm112, %v368, %v369
    %v371 = vsel %vm112, %v369, %v368
    %v372 = vsel %vm123, %v366, %v371
    %v373 = vsel %vm124, %v367, %v370
    %v374 = vrot.slane %v366, 1
    %v375 = vrot.slane %v367, 1
    %v376 = vsel %vm131, %v374, %v375
    %v377 = vsel %vm131, %v375, %v374
    %v378 = vsel %vm142, %v366, %v376
    %v379 = vsel %vm143, %v367, %v377
    %v380 = vmax.f32 %v372, %v366
    %v381 = vmax.f32 %v373, %v367
    %v382 = vmax.f32 %v380, %v378
    %v383 = vmax.f32 %v381, %v379
    %384 = vrot.lane.b32.xlu0 %v382, 1
    %v385 = vpop.permute.xlu0 %384
    %386 = vrot.lane.b32.xlu0 %v383, 1
    %v387 = vpop.permute.xlu0 %386
    %v388 = vsel %vm157, %v382, %v385
    %v389 = vsel %vm157, %v383, %v387
    %v390 = vmax.f32 %v388, %v382
    %v391 = vmax.f32 %v389, %v383
    %392 = vrot.lane.b32.xlu0 %v382, 127
    %v393 = vpop.permute.xlu0 %392
    %394 = vrot.lane.b32.xlu0 %v383, 127
    %v395 = vpop.permute.xlu0 %394
    %v396 = vsel %vm171, %v382, %v393
    %v397 = vsel %vm171, %v383, %v395
    %v398 = vmax.f32 %v390, %v396
    %v399 = vmax.f32 %v391, %v397
    %v400 = vsub.f32 %v300, %v398
    %v401 = vsub.f32 %v301, %v399
    %v402 = vmax.f32 %v400, 0.0
    %v403 = vmax.f32 %v401, 0.0
    %v404 = vmul.f32 %v344, %v402
    %v405 = vmul.f32 %v345, %v403
    %v406 = vsub.f32 %v402, %v404
    %v407 = vsub.f32 %v403, %v405
    %v408 = vmax.f32 %v406, 0.0
    %v409 = vmax.f32 %v407, 0.0
    %v410 = vadd.f32 %v344, %v408
    %v411 = vadd.f32 %v345, %v409
    %v412 = vmin.f32 %v372, %v366
    %v413 = vmin.f32 %v373, %v367
    %v414 = vmin.f32 %v412, %v378
    %v415 = vmin.f32 %v413, %v379
    %416 = vrot.lane.b32.xlu0 %v366, 1
    %v417 = vpop.permute.xlu0 %416
    %418 = vrot.lane.b32.xlu0 %v367, 1
    %v419 = vpop.permute.xlu0 %418
    %v420 = vsel %vm157, %v366, %v417
    %v421 = vsel %vm157, %v367, %v419
    %v422 = vmin.f32 %v420, %v366
    %v423 = vmin.f32 %v421, %v367
    %424 = vrot.lane.b32.xlu0 %v366, 127
    %v425 = vpop.permute.xlu0 %424
    %426 = vrot.lane.b32.xlu0 %v367, 127
    %v427 = vpop.permute.xlu0 %426
    %v428 = vsel %vm171, %v366, %v425
    %v429 = vsel %vm171, %v367, %v427
    %v430 = vmin.f32 %v422, %v428
    %v431 = vmin.f32 %v423, %v429
    %v432 = vmin.f32 %v414, %v430
    %v433 = vmin.f32 %v415, %v431
    %v434 = vrot.slane %v432, 7
    %v435 = vrot.slane %v433, 7
    %v436 = vsel %vm112, %v434, %v435
    %v437 = vsel %vm112, %v435, %v434
    %v438 = vsel %vm123, %v432, %v437
    %v439 = vsel %vm124, %v433, %v436
    %v440 = vrot.slane %v432, 1
    %v441 = vrot.slane %v433, 1
    %v442 = vsel %vm131, %v440, %v441
    %v443 = vsel %vm131, %v441, %v440
    %v444 = vsel %vm142, %v432, %v442
    %v445 = vsel %vm143, %v433, %v443
    %v446 = vmax.f32 %v438, %v432
    %v447 = vmax.f32 %v439, %v433
    %v448 = vmax.f32 %v446, %v444
    %v449 = vmax.f32 %v447, %v445
    %450 = vrot.lane.b32.xlu0 %v448, 1
    %v451 = vpop.permute.xlu0 %450
    %452 = vrot.lane.b32.xlu0 %v449, 1
    %v453 = vpop.permute.xlu0 %452
    %v454 = vsel %vm157, %v448, %v451
    %v455 = vsel %vm157, %v449, %v453
    %v456 = vmax.f32 %v454, %v448
    %v457 = vmax.f32 %v455, %v449
    %458 = vrot.lane.b32.xlu0 %v448, 127
    %v459 = vpop.permute.xlu0 %458
    %460 = vrot.lane.b32.xlu0 %v449, 127
    %v461 = vpop.permute.xlu0 %460
    %v462 = vsel %vm171, %v448, %v459
    %v463 = vsel %vm171, %v449, %v461
    %v464 = vmax.f32 %v456, %v462
    %v465 = vmax.f32 %v457, %v463
    %v466 = vsub.f32 %v366, %v464
    %v467 = vsub.f32 %v367, %v465
    %v468 = vmax.f32 %v466, 0.0
    %v469 = vmax.f32 %v467, 0.0
    %v470 = vmul.f32 %v410, %v468
    %v471 = vmul.f32 %v411, %v469
    %v472 = vsub.f32 %v468, %v470
    %v473 = vsub.f32 %v469, %v471
    %v474 = vmax.f32 %v472, 0.0
    %v475 = vmax.f32 %v473, 0.0
    %v476 = vadd.f32 %v410, %v474
    %v477 = vadd.f32 %v411, %v475
    %v478 = vmin.f32 %v438, %v432
    %v479 = vmin.f32 %v439, %v433
    %v480 = vmin.f32 %v478, %v444
    %v481 = vmin.f32 %v479, %v445
    %482 = vrot.lane.b32.xlu0 %v432, 1
    %v483 = vpop.permute.xlu0 %482
    %484 = vrot.lane.b32.xlu0 %v433, 1
    %v485 = vpop.permute.xlu0 %484
    %v486 = vsel %vm157, %v432, %v483
    %v487 = vsel %vm157, %v433, %v485
    %v488 = vmin.f32 %v486, %v432
    %v489 = vmin.f32 %v487, %v433
    %490 = vrot.lane.b32.xlu0 %v432, 127
    %v491 = vpop.permute.xlu0 %490
    %492 = vrot.lane.b32.xlu0 %v433, 127
    %v493 = vpop.permute.xlu0 %492
    %v494 = vsel %vm171, %v432, %v491
    %v495 = vsel %vm171, %v433, %v493
    %v496 = vmin.f32 %v488, %v494
    %v497 = vmin.f32 %v489, %v495
    %v498 = vmin.f32 %v480, %v496
    %v499 = vmin.f32 %v481, %v497
    %v500 = vrot.slane %v498, 7
    %v501 = vrot.slane %v499, 7
    %v502 = vsel %vm112, %v500, %v501
    %v503 = vsel %vm112, %v501, %v500
    %v504 = vsel %vm123, %v498, %v503
    %v505 = vsel %vm124, %v499, %v502
    %v506 = vrot.slane %v498, 1
    %v507 = vrot.slane %v499, 1
    %v508 = vsel %vm131, %v506, %v507
    %v509 = vsel %vm131, %v507, %v506
    %v510 = vsel %vm142, %v498, %v508
    %v511 = vsel %vm143, %v499, %v509
    %v512 = vmax.f32 %v504, %v498
    %v513 = vmax.f32 %v505, %v499
    %v514 = vmax.f32 %v512, %v510
    %v515 = vmax.f32 %v513, %v511
    %516 = vrot.lane.b32.xlu0 %v514, 1
    %v517 = vpop.permute.xlu0 %516
    %518 = vrot.lane.b32.xlu0 %v515, 1
    %v519 = vpop.permute.xlu0 %518
    %v520 = vsel %vm157, %v514, %v517
    %v521 = vsel %vm157, %v515, %v519
    %v522 = vmax.f32 %v520, %v514
    %v523 = vmax.f32 %v521, %v515
    %524 = vrot.lane.b32.xlu0 %v514, 127
    %v525 = vpop.permute.xlu0 %524
    %526 = vrot.lane.b32.xlu0 %v515, 127
    %v527 = vpop.permute.xlu0 %526
    %v528 = vsel %vm171, %v514, %v525
    %v529 = vsel %vm171, %v515, %v527
    %v530 = vmax.f32 %v522, %v528
    %v531 = vmax.f32 %v523, %v529
    %v532 = vsub.f32 %v432, %v530
    %v533 = vsub.f32 %v433, %v531
    %v534 = vmax.f32 %v532, 0.0
    %v535 = vmax.f32 %v533, 0.0
    %v536 = vmul.f32 %v476, %v534
    %v537 = vmul.f32 %v477, %v535
    %v538 = vsub.f32 %v534, %v536
    %v539 = vsub.f32 %v535, %v537
    %v540 = vmax.f32 %v538, 0.0
    %v541 = vmax.f32 %v539, 0.0
    %v542 = vadd.f32 %v476, %v540
    %v543 = vadd.f32 %v477, %v541
    %v544 = vmin.f32 %v504, %v498
    %v545 = vmin.f32 %v505, %v499
    %v546 = vmin.f32 %v544, %v510
    %v547 = vmin.f32 %v545, %v511
    %548 = vrot.lane.b32.xlu0 %v498, 1
    %v549 = vpop.permute.xlu0 %548
    %550 = vrot.lane.b32.xlu0 %v499, 1
    %v551 = vpop.permute.xlu0 %550
    %v552 = vsel %vm157, %v498, %v549
    %v553 = vsel %vm157, %v499, %v551
    %v554 = vmin.f32 %v552, %v498
    %v555 = vmin.f32 %v553, %v499
    %556 = vrot.lane.b32.xlu0 %v498, 127
    %v557 = vpop.permute.xlu0 %556
    %558 = vrot.lane.b32.xlu0 %v499, 127
    %v559 = vpop.permute.xlu0 %558
    %v560 = vsel %vm171, %v498, %v557
    %v561 = vsel %vm171, %v499, %v559
    %v562 = vmin.f32 %v554, %v560
    %v563 = vmin.f32 %v555, %v561
    %v564 = vmin.f32 %v546, %v562
    %v565 = vmin.f32 %v547, %v563
    %v566 = vrot.slane %v564, 7
    %v567 = vrot.slane %v565, 7
    %v568 = vsel %vm112, %v566, %v567
    %v569 = vsel %vm112, %v567, %v566
    %v570 = vsel %vm123, %v564, %v569
    %v571 = vsel %vm124, %v565, %v568
    %v572 = vrot.slane %v564, 1
    %v573 = vrot.slane %v565, 1
    %v574 = vsel %vm131, %v572, %v573
    %v575 = vsel %vm131, %v573, %v572
    %v576 = vsel %vm142, %v564, %v574
    %v577 = vsel %vm143, %v565, %v575
    %v578 = vmax.f32 %v570, %v564
    %v579 = vmax.f32 %v571, %v565
    %v580 = vmax.f32 %v578, %v576
    %v581 = vmax.f32 %v579, %v577
    %582 = vrot.lane.b32.xlu0 %v580, 1
    %v583 = vpop.permute.xlu0 %582
    %584 = vrot.lane.b32.xlu0 %v581, 1
    %v585 = vpop.permute.xlu0 %584
    %v586 = vsel %vm157, %v580, %v583
    %v587 = vsel %vm157, %v581, %v585
    %v588 = vmax.f32 %v586, %v580
    %v589 = vmax.f32 %v587, %v581
    %590 = vrot.lane.b32.xlu0 %v580, 127
    %v591 = vpop.permute.xlu0 %590
    %592 = vrot.lane.b32.xlu0 %v581, 127
    %v593 = vpop.permute.xlu0 %592
    %v594 = vsel %vm171, %v580, %v591
    %v595 = vsel %vm171, %v581, %v593
    %v596 = vmax.f32 %v588, %v594
    %v597 = vmax.f32 %v589, %v595
    %v598 = vsub.f32 %v498, %v596
    %v599 = vsub.f32 %v499, %v597
    %v600 = vmax.f32 %v598, 0.0
    %v601 = vmax.f32 %v599, 0.0
    %v602 = vmul.f32 %v542, %v600
    %v603 = vmul.f32 %v543, %v601
    %v604 = vsub.f32 %v600, %v602
    %v605 = vsub.f32 %v601, %v603
    %v606 = vmax.f32 %v604, 0.0
    %v607 = vmax.f32 %v605, 0.0
    %v608 = vadd.f32 %v542, %v606
    %v609 = vadd.f32 %v543, %v607
    %v610 = vmin.f32 %v570, %v564
    %v611 = vmin.f32 %v571, %v565
    %v612 = vmin.f32 %v610, %v576
    %v613 = vmin.f32 %v611, %v577
    %614 = vrot.lane.b32.xlu0 %v564, 1
    %v615 = vpop.permute.xlu0 %614
    %616 = vrot.lane.b32.xlu0 %v565, 1
    %v617 = vpop.permute.xlu0 %616
    %v618 = vsel %vm157, %v564, %v615
    %v619 = vsel %vm157, %v565, %v617
    %v620 = vmin.f32 %v618, %v564
    %v621 = vmin.f32 %v619, %v565
    %622 = vrot.lane.b32.xlu0 %v564, 127
    %v623 = vpop.permute.xlu0 %622
    %624 = vrot.lane.b32.xlu0 %v565, 127
    %v625 = vpop.permute.xlu0 %624
    %v626 = vsel %vm171, %v564, %v623
    %v627 = vsel %vm171, %v565, %v625
    %v628 = vmin.f32 %v620, %v626
    %v629 = vmin.f32 %v621, %v627
    %v630 = vmin.f32 %v612, %v628
    %v631 = vmin.f32 %v613, %v629
    %v632 = vrot.slane %v630, 7
    %v633 = vrot.slane %v631, 7
    %v634 = vsel %vm112, %v632, %v633
    %v635 = vsel %vm112, %v633, %v632
    %v636 = vsel %vm123, %v630, %v635
    %v637 = vsel %vm124, %v631, %v634
    %v638 = vrot.slane %v630, 1
    %v639 = vrot.slane %v631, 1
    %v640 = vsel %vm131, %v638, %v639
    %v641 = vsel %vm131, %v639, %v638
    %v642 = vsel %vm142, %v630, %v640
    %v643 = vsel %vm143, %v631, %v641
    %v644 = vmax.f32 %v636, %v630
    %v645 = vmax.f32 %v637, %v631
    %v646 = vmax.f32 %v644, %v642
    %v647 = vmax.f32 %v645, %v643
    %648 = vrot.lane.b32.xlu0 %v646, 1
    %v649 = vpop.permute.xlu0 %648
    %650 = vrot.lane.b32.xlu0 %v647, 1
    %v651 = vpop.permute.xlu0 %650
    %v652 = vsel %vm157, %v646, %v649
    %v653 = vsel %vm157, %v647, %v651
    %v654 = vmax.f32 %v652, %v646
    %v655 = vmax.f32 %v653, %v647
    %656 = vrot.lane.b32.xlu0 %v646, 127
    %v657 = vpop.permute.xlu0 %656
    %658 = vrot.lane.b32.xlu0 %v647, 127
    %v659 = vpop.permute.xlu0 %658
    %v660 = vsel %vm171, %v646, %v657
    %v661 = vsel %vm171, %v647, %v659
    %v662 = vmax.f32 %v654, %v660
    %v663 = vmax.f32 %v655, %v661
    %v664 = vsub.f32 %v564, %v662
    %v665 = vsub.f32 %v565, %v663
    %v666 = vmax.f32 %v664, 0.0
    %v667 = vmax.f32 %v665, 0.0
    %v668 = vmul.f32 %v608, %v666
    %v669 = vmul.f32 %v609, %v667
    %v670 = vsub.f32 %v666, %v668
    %v671 = vsub.f32 %v667, %v669
    %v672 = vmax.f32 %v670, 0.0
    %v673 = vmax.f32 %v671, 0.0
    %v674 = vadd.f32 %v608, %v672
    %v675 = vadd.f32 %v609, %v673
    %v676 = vmin.f32 %v636, %v630
    %v677 = vmin.f32 %v637, %v631
    %v678 = vmin.f32 %v676, %v642
    %v679 = vmin.f32 %v677, %v643
    %680 = vrot.lane.b32.xlu0 %v630, 1
    %v681 = vpop.permute.xlu0 %680
    %682 = vrot.lane.b32.xlu0 %v631, 1
    %v683 = vpop.permute.xlu0 %682
    %v684 = vsel %vm157, %v630, %v681
    %v685 = vsel %vm157, %v631, %v683
    %v686 = vmin.f32 %v684, %v630
    %v687 = vmin.f32 %v685, %v631
    %688 = vrot.lane.b32.xlu0 %v630, 127
    %v689 = vpop.permute.xlu0 %688
    %690 = vrot.lane.b32.xlu0 %v631, 127
    %v691 = vpop.permute.xlu0 %690
    %v692 = vsel %vm171, %v630, %v689
    %v693 = vsel %vm171, %v631, %v691
    %v694 = vmin.f32 %v686, %v692
    %v695 = vmin.f32 %v687, %v693
    %v696 = vmin.f32 %v678, %v694
    %v697 = vmin.f32 %v679, %v695
    %v698 = vrot.slane %v696, 7
    %v699 = vrot.slane %v697, 7
    %v700 = vsel %vm112, %v698, %v699
    %v701 = vsel %vm112, %v699, %v698
    %v702 = vsel %vm123, %v696, %v701
    %v703 = vsel %vm124, %v697, %v700
    %v704 = vrot.slane %v696, 1
    %v705 = vrot.slane %v697, 1
    %v706 = vsel %vm131, %v704, %v705
    %v707 = vsel %vm131, %v705, %v704
    %v708 = vsel %vm142, %v696, %v706
    %v709 = vsel %vm143, %v697, %v707
    %v710 = vmax.f32 %v702, %v696
    %v711 = vmax.f32 %v703, %v697
    %v712 = vmax.f32 %v710, %v708
    %v713 = vmax.f32 %v711, %v709
    %714 = vrot.lane.b32.xlu0 %v712, 1
    %v715 = vpop.permute.xlu0 %714
    %716 = vrot.lane.b32.xlu0 %v713, 1
    %v717 = vpop.permute.xlu0 %716
    %v718 = vsel %vm157, %v712, %v715
    %v719 = vsel %vm157, %v713, %v717
    %v720 = vmax.f32 %v718, %v712
    %v721 = vmax.f32 %v719, %v713
    %722 = vrot.lane.b32.xlu0 %v712, 127
    %v723 = vpop.permute.xlu0 %722
    %724 = vrot.lane.b32.xlu0 %v713, 127
    %v725 = vpop.permute.xlu0 %724
    %v726 = vsel %vm171, %v712, %v723
    %v727 = vsel %vm171, %v713, %v725
    %v728 = vmax.f32 %v720, %v726
    %v729 = vmax.f32 %v721, %v727
    %v730 = vsub.f32 %v630, %v728
    %v731 = vsub.f32 %v631, %v729
    %v732 = vmax.f32 %v730, 0.0
    %v733 = vmax.f32 %v731, 0.0
    %v734 = vmul.f32 %v674, %v732
    %v735 = vmul.f32 %v675, %v733
    %v736 = vsub.f32 %v732, %v734
    %v737 = vsub.f32 %v733, %v735
    %v738 = vmax.f32 %v736, 0.0
    %v739 = vmax.f32 %v737, 0.0
    %v740 = vadd.f32 %v674, %v738
    %v741 = vadd.f32 %v675, %v739
    %v742 = vmin.f32 %v702, %v696
    %v743 = vmin.f32 %v703, %v697
    %v744 = vmin.f32 %v742, %v708
    %v745 = vmin.f32 %v743, %v709
    %746 = vrot.lane.b32.xlu0 %v696, 1
    %v747 = vpop.permute.xlu0 %746
    %748 = vrot.lane.b32.xlu0 %v697, 1
    %v749 = vpop.permute.xlu0 %748
    %v750 = vsel %vm157, %v696, %v747
    %v751 = vsel %vm157, %v697, %v749
    %v752 = vmin.f32 %v750, %v696
    %v753 = vmin.f32 %v751, %v697
    %754 = vrot.lane.b32.xlu0 %v696, 127
    %v755 = vpop.permute.xlu0 %754
    %756 = vrot.lane.b32.xlu0 %v697, 127
    %v757 = vpop.permute.xlu0 %756
    %v758 = vsel %vm171, %v696, %v755
    %v759 = vsel %vm171, %v697, %v757
    %v760 = vmin.f32 %v752, %v758
    %v761 = vmin.f32 %v753, %v759
    %v762 = vmin.f32 %v744, %v760
    %v763 = vmin.f32 %v745, %v761
    %v764 = vrot.slane %v762, 7
    %v765 = vrot.slane %v763, 7
    %v766 = vsel %vm112, %v764, %v765
    %v767 = vsel %vm112, %v765, %v764
    %v768 = vsel %vm123, %v762, %v767
    %v769 = vsel %vm124, %v763, %v766
    %v770 = vrot.slane %v762, 1
    %v771 = vrot.slane %v763, 1
    %v772 = vsel %vm131, %v770, %v771
    %v773 = vsel %vm131, %v771, %v770
    %v774 = vsel %vm142, %v762, %v772
    %v775 = vsel %vm143, %v763, %v773
    %v776 = vmax.f32 %v768, %v762
    %v777 = vmax.f32 %v769, %v763
    %v778 = vmax.f32 %v776, %v774
    %v779 = vmax.f32 %v777, %v775
    %780 = vrot.lane.b32.xlu0 %v778, 1
    %v781 = vpop.permute.xlu0 %780
    %782 = vrot.lane.b32.xlu0 %v779, 1
    %v783 = vpop.permute.xlu0 %782
    %v784 = vsel %vm157, %v778, %v781
    %v785 = vsel %vm157, %v779, %v783
    %v786 = vmax.f32 %v784, %v778
    %v787 = vmax.f32 %v785, %v779
    %788 = vrot.lane.b32.xlu0 %v778, 127
    %v789 = vpop.permute.xlu0 %788
    %790 = vrot.lane.b32.xlu0 %v779, 127
    %v791 = vpop.permute.xlu0 %790
    %v792 = vsel %vm171, %v778, %v789
    %v793 = vsel %vm171, %v779, %v791
    %v794 = vmax.f32 %v786, %v792
    %v795 = vmax.f32 %v787, %v793
    %v796 = vsub.f32 %v696, %v794
    %v797 = vsub.f32 %v697, %v795
    %v798 = vmax.f32 %v796, 0.0
    %v799 = vmax.f32 %v797, 0.0
    %v800 = vmul.f32 %v740, %v798
    %v801 = vmul.f32 %v741, %v799
    %v802 = vsub.f32 %v798, %v800
    %v803 = vsub.f32 %v799, %v801
    %v804 = vmax.f32 %v802, 0.0
    %v805 = vmax.f32 %v803, 0.0
    %v806 = vadd.f32 %v740, %v804
    %v807 = vadd.f32 %v741, %v805
    %v808 = vmin.f32 %v768, %v762
    %v809 = vmin.f32 %v769, %v763
    %v810 = vmin.f32 %v808, %v774
    %v811 = vmin.f32 %v809, %v775
    %812 = vrot.lane.b32.xlu0 %v762, 1
    %v813 = vpop.permute.xlu0 %812
    %814 = vrot.lane.b32.xlu0 %v763, 1
    %v815 = vpop.permute.xlu0 %814
    %v816 = vsel %vm157, %v762, %v813
    %v817 = vsel %vm157, %v763, %v815
    %v818 = vmin.f32 %v816, %v762
    %v819 = vmin.f32 %v817, %v763
    %820 = vrot.lane.b32.xlu0 %v762, 127
    %v821 = vpop.permute.xlu0 %820
    %822 = vrot.lane.b32.xlu0 %v763, 127
    %v823 = vpop.permute.xlu0 %822
    %v824 = vsel %vm171, %v762, %v821
    %v825 = vsel %vm171, %v763, %v823
    %v826 = vmin.f32 %v818, %v824
    %v827 = vmin.f32 %v819, %v825
    %v828 = vmin.f32 %v810, %v826
    %v829 = vmin.f32 %v811, %v827
    %v830 = vrot.slane %v828, 7
    %v831 = vrot.slane %v829, 7
    %v832 = vsel %vm112, %v830, %v831
    %v833 = vsel %vm112, %v831, %v830
    %v834 = vsel %vm123, %v828, %v833
    %v835 = vsel %vm124, %v829, %v832
    %v836 = vrot.slane %v828, 1
    %v837 = vrot.slane %v829, 1
    %v838 = vsel %vm131, %v836, %v837
    %v839 = vsel %vm131, %v837, %v836
    %v840 = vsel %vm142, %v828, %v838
    %v841 = vsel %vm143, %v829, %v839
    %v842 = vmax.f32 %v834, %v828
    %v843 = vmax.f32 %v835, %v829
    %v844 = vmax.f32 %v842, %v840
    %v845 = vmax.f32 %v843, %v841
    %846 = vrot.lane.b32.xlu0 %v844, 1
    %v847 = vpop.permute.xlu0 %846
    %848 = vrot.lane.b32.xlu0 %v845, 1
    %v849 = vpop.permute.xlu0 %848
    %v850 = vsel %vm157, %v844, %v847
    %v851 = vsel %vm157, %v845, %v849
    %v852 = vmax.f32 %v850, %v844
    %v853 = vmax.f32 %v851, %v845
    %854 = vrot.lane.b32.xlu0 %v844, 127
    %v855 = vpop.permute.xlu0 %854
    %856 = vrot.lane.b32.xlu0 %v845, 127
    %v857 = vpop.permute.xlu0 %856
    %v858 = vsel %vm171, %v844, %v855
    %v859 = vsel %vm171, %v845, %v857
    %v860 = vmax.f32 %v852, %v858
    %v861 = vmax.f32 %v853, %v859
    %v862 = vsub.f32 %v762, %v860
    %v863 = vsub.f32 %v763, %v861
    %v864 = vmax.f32 %v862, 0.0
    %v865 = vmax.f32 %v863, 0.0
    %v866 = vmul.f32 %v806, %v864
    %v867 = vmul.f32 %v807, %v865
    %v868 = vsub.f32 %v864, %v866
    %v869 = vsub.f32 %v865, %v867
    %v870 = vmax.f32 %v868, 0.0
    %v871 = vmax.f32 %v869, 0.0
    %v872 = vadd.f32 %v806, %v870
    %v873 = vadd.f32 %v807, %v871
    %s874 = sld [smem:[#allocation5 + $0x3]]
    %v875 = vmul.f32 %v872, %v63
    %v876 = vmul.f32 %v873, %v64
    %v877 = vadd.f32 %v875, %v876
    %878 = vadd.xlane.f32.xlu0 %v877
    %v879 = vpop.xlane.xlu0 %878
    %v880 = vrot.slane %v879, 4
    %v881 = vadd.f32 %v879, %v880
    %v882 = vrot.slane %v881, 2
    %v883 = vadd.f32 %v881, %v882
    %v884 = vrot.slane %v883, 1
    %v885 = vadd.f32 %v883, %v884
    %s886 = vtos %v885
    %s887 = sadd.f32 %s874, %s886
    %888 = sst [smem:[%s53]] %s887
    %s889 = sld [smem:[#allocation5 + $0x4]]
    %v890 = vadd.f32 %v872, %v873
    %891 = vadd.xlane.f32.xlu0 %v890
    %v892 = vpop.xlane.xlu0 %891
    %v893 = vrot.slane %v892, 4
    %v894 = vadd.f32 %v892, %v893
    %v895 = vrot.slane %v894, 2
    %v896 = vadd.f32 %v894, %v895
    %v897 = vrot.slane %v896, 1
    %v898 = vadd.f32 %v896, %v897
    %s899 = vtos %v898
    %s900 = sadd.f32 %s889, %s899
    %901 = sst [smem:[%s55]] %s900
    %v902 = vrot.slane %v63, 7
    %v903 = vrot.slane %v64, 7
    %v904 = vsel %vm112, %v902, %v903
    %v905 = vsel %vm112, %v903, %v902
    %v906 = vsel %vm123, %v63, %v905
    %v907 = vsel %vm124, %v64, %v904
    %v908 = vmin.f32 %v906, %v63
    %v909 = vmin.f32 %v907, %v64
    %v910 = vrot.slane %v63, 1
    %v911 = vrot.slane %v64, 1
    %v912 = vsel %vm131, %v910, %v911
    %v913 = vsel %vm131, %v911, %v910
    %v914 = vsel %vm142, %v63, %v912
    %v915 = vsel %vm143, %v64, %v913
    %v916 = vmin.f32 %v908, %v914
    %v917 = vmin.f32 %v909, %v915
    %918 = vrot.lane.b32.xlu0 %v63, 1
    %v919 = vpop.permute.xlu0 %918
    %920 = vrot.lane.b32.xlu0 %v64, 1
    %v921 = vpop.permute.xlu0 %920
    %v922 = vsel %vm157, %v63, %v919
    %v923 = vsel %vm157, %v64, %v921
    %v924 = vmin.f32 %v922, %v63
    %v925 = vmin.f32 %v923, %v64
    %926 = vrot.lane.b32.xlu0 %v63, 127
    %v927 = vpop.permute.xlu0 %926
    %928 = vrot.lane.b32.xlu0 %v64, 127
    %v929 = vpop.permute.xlu0 %928
    %v930 = vsel %vm171, %v63, %v927
    %v931 = vsel %vm171, %v64, %v929
    %v932 = vmin.f32 %v924, %v930
    %v933 = vmin.f32 %v925, %v931
    %v934 = vmin.f32 %v916, %v932
    %v935 = vmin.f32 %v917, %v933
    %v936 = vrot.slane %v934, 7
    %v937 = vrot.slane %v935, 7
    %v938 = vsel %vm112, %v936, %v937
    %v939 = vsel %vm112, %v937, %v936
    %v940 = vsel %vm123, %v934, %v939
    %v941 = vsel %vm124, %v935, %v938
    %v942 = vrot.slane %v934, 1
    %v943 = vrot.slane %v935, 1
    %v944 = vsel %vm131, %v942, %v943
    %v945 = vsel %vm131, %v943, %v942
    %v946 = vsel %vm142, %v934, %v944
    %v947 = vsel %vm143, %v935, %v945
    %v948 = vmax.f32 %v940, %v934
    %v949 = vmax.f32 %v941, %v935
    %v950 = vmax.f32 %v948, %v946
    %v951 = vmax.f32 %v949, %v947
    %952 = vrot.lane.b32.xlu0 %v950, 1
    %v953 = vpop.permute.xlu0 %952
    %954 = vrot.lane.b32.xlu0 %v951, 1
    %v955 = vpop.permute.xlu0 %954
    %v956 = vsel %vm157, %v950, %v953
    %v957 = vsel %vm157, %v951, %v955
    %v958 = vmax.f32 %v956, %v950
    %v959 = vmax.f32 %v957, %v951
    %960 = vrot.lane.b32.xlu0 %v950, 127
    %v961 = vpop.permute.xlu0 %960
    %962 = vrot.lane.b32.xlu0 %v951, 127
    %v963 = vpop.permute.xlu0 %962
    %v964 = vsel %vm171, %v950, %v961
    %v965 = vsel %vm171, %v951, %v963
    %v966 = vmax.f32 %v958, %v964
    %v967 = vmax.f32 %v959, %v965
    %v968 = vsub.f32 %v63, %v966
    %v969 = vsub.f32 %v64, %v967
    %v970 = vmax.f32 %v968, 0.0
    %v971 = vmax.f32 %v969, 0.0
    %v972 = vmin.f32 %v940, %v934
    %v973 = vmin.f32 %v941, %v935
    %v974 = vmin.f32 %v972, %v946
    %v975 = vmin.f32 %v973, %v947
    %976 = vrot.lane.b32.xlu0 %v934, 1
    %v977 = vpop.permute.xlu0 %976
    %978 = vrot.lane.b32.xlu0 %v935, 1
    %v979 = vpop.permute.xlu0 %978
    %v980 = vsel %vm157, %v934, %v977
    %v981 = vsel %vm157, %v935, %v979
    %v982 = vmin.f32 %v980, %v934
    %v983 = vmin.f32 %v981, %v935
    %984 = vrot.lane.b32.xlu0 %v934, 127
    %v985 = vpop.permute.xlu0 %984
    %986 = vrot.lane.b32.xlu0 %v935, 127
    %v987 = vpop.permute.xlu0 %986
    %v988 = vsel %vm171, %v934, %v985
    %v989 = vsel %vm171, %v935, %v987
    %v990 = vmin.f32 %v982, %v988
    %v991 = vmin.f32 %v983, %v989
    %v992 = vmin.f32 %v974, %v990
    %v993 = vmin.f32 %v975, %v991
    %v994 = vrot.slane %v992, 7
    %v995 = vrot.slane %v993, 7
    %v996 = vsel %vm112, %v994, %v995
    %v997 = vsel %vm112, %v995, %v994
    %v998 = vsel %vm123, %v992, %v997
    %v999 = vsel %vm124, %v993, %v996
    %v1000 = vrot.slane %v992, 1
    %v1001 = vrot.slane %v993, 1
    %v1002 = vsel %vm131, %v1000, %v1001
    %v1003 = vsel %vm131, %v1001, %v1000
    %v1004 = vsel %vm142, %v992, %v1002
    %v1005 = vsel %vm143, %v993, %v1003
    %v1006 = vmax.f32 %v998, %v992
    %v1007 = vmax.f32 %v999, %v993
    %v1008 = vmax.f32 %v1006, %v1004
    %v1009 = vmax.f32 %v1007, %v1005
    %1010 = vrot.lane.b32.xlu0 %v1008, 1
    %v1011 = vpop.permute.xlu0 %1010
    %1012 = vrot.lane.b32.xlu0 %v1009, 1
    %v1013 = vpop.permute.xlu0 %1012
    %v1014 = vsel %vm157, %v1008, %v1011
    %v1015 = vsel %vm157, %v1009, %v1013
    %v1016 = vmax.f32 %v1014, %v1008
    %v1017 = vmax.f32 %v1015, %v1009
    %1018 = vrot.lane.b32.xlu0 %v1008, 127
    %v1019 = vpop.permute.xlu0 %1018
    %1020 = vrot.lane.b32.xlu0 %v1009, 127
    %v1021 = vpop.permute.xlu0 %1020
    %v1022 = vsel %vm171, %v1008, %v1019
    %v1023 = vsel %vm171, %v1009, %v1021
    %v1024 = vmax.f32 %v1016, %v1022
    %v1025 = vmax.f32 %v1017, %v1023
    %v1026 = vsub.f32 %v934, %v1024
    %v1027 = vsub.f32 %v935, %v1025
    %v1028 = vmax.f32 %v1026, 0.0
    %v1029 = vmax.f32 %v1027, 0.0
    %v1030 = vmul.f32 %v970, %v1028
    %v1031 = vmul.f32 %v971, %v1029
    %v1032 = vsub.f32 %v1028, %v1030
    %v1033 = vsub.f32 %v1029, %v1031
    %v1034 = vmax.f32 %v1032, 0.0
    %v1035 = vmax.f32 %v1033, 0.0
    %v1036 = vadd.f32 %v970, %v1034
    %v1037 = vadd.f32 %v971, %v1035
    %v1038 = vmin.f32 %v998, %v992
    %v1039 = vmin.f32 %v999, %v993
    %v1040 = vmin.f32 %v1038, %v1004
    %v1041 = vmin.f32 %v1039, %v1005
    %1042 = vrot.lane.b32.xlu0 %v992, 1
    %v1043 = vpop.permute.xlu0 %1042
    %1044 = vrot.lane.b32.xlu0 %v993, 1
    %v1045 = vpop.permute.xlu0 %1044
    %v1046 = vsel %vm157, %v992, %v1043
    %v1047 = vsel %vm157, %v993, %v1045
    %v1048 = vmin.f32 %v1046, %v992
    %v1049 = vmin.f32 %v1047, %v993
    %1050 = vrot.lane.b32.xlu0 %v992, 127
    %v1051 = vpop.permute.xlu0 %1050
    %1052 = vrot.lane.b32.xlu0 %v993, 127
    %v1053 = vpop.permute.xlu0 %1052
    %v1054 = vsel %vm171, %v992, %v1051
    %v1055 = vsel %vm171, %v993, %v1053
    %v1056 = vmin.f32 %v1048, %v1054
    %v1057 = vmin.f32 %v1049, %v1055
    %v1058 = vmin.f32 %v1040, %v1056
    %v1059 = vmin.f32 %v1041, %v1057
    %v1060 = vrot.slane %v1058, 7
    %v1061 = vrot.slane %v1059, 7
    %v1062 = vsel %vm112, %v1060, %v1061
    %v1063 = vsel %vm112, %v1061, %v1060
    %v1064 = vsel %vm123, %v1058, %v1063
    %v1065 = vsel %vm124, %v1059, %v1062
    %v1066 = vrot.slane %v1058, 1
    %v1067 = vrot.slane %v1059, 1
    %v1068 = vsel %vm131, %v1066, %v1067
    %v1069 = vsel %vm131, %v1067, %v1066
    %v1070 = vsel %vm142, %v1058, %v1068
    %v1071 = vsel %vm143, %v1059, %v1069
    %v1072 = vmax.f32 %v1064, %v1058
    %v1073 = vmax.f32 %v1065, %v1059
    %v1074 = vmax.f32 %v1072, %v1070
    %v1075 = vmax.f32 %v1073, %v1071
    %1076 = vrot.lane.b32.xlu0 %v1074, 1
    %v1077 = vpop.permute.xlu0 %1076
    %1078 = vrot.lane.b32.xlu0 %v1075, 1
    %v1079 = vpop.permute.xlu0 %1078
    %v1080 = vsel %vm157, %v1074, %v1077
    %v1081 = vsel %vm157, %v1075, %v1079
    %v1082 = vmax.f32 %v1080, %v1074
    %v1083 = vmax.f32 %v1081, %v1075
    %1084 = vrot.lane.b32.xlu0 %v1074, 127
    %v1085 = vpop.permute.xlu0 %1084
    %1086 = vrot.lane.b32.xlu0 %v1075, 127
    %v1087 = vpop.permute.xlu0 %1086
    %v1088 = vsel %vm171, %v1074, %v1085
    %v1089 = vsel %vm171, %v1075, %v1087
    %v1090 = vmax.f32 %v1082, %v1088
    %v1091 = vmax.f32 %v1083, %v1089
    %v1092 = vsub.f32 %v992, %v1090
    %v1093 = vsub.f32 %v993, %v1091
    %v1094 = vmax.f32 %v1092, 0.0
    %v1095 = vmax.f32 %v1093, 0.0
    %v1096 = vmul.f32 %v1036, %v1094
    %v1097 = vmul.f32 %v1037, %v1095
    %v1098 = vsub.f32 %v1094, %v1096
    %v1099 = vsub.f32 %v1095, %v1097
    %v1100 = vmax.f32 %v1098, 0.0
    %v1101 = vmax.f32 %v1099, 0.0
    %v1102 = vadd.f32 %v1036, %v1100
    %v1103 = vadd.f32 %v1037, %v1101
    %v1104 = vmin.f32 %v1064, %v1058
    %v1105 = vmin.f32 %v1065, %v1059
    %v1106 = vmin.f32 %v1104, %v1070
    %v1107 = vmin.f32 %v1105, %v1071
    %1108 = vrot.lane.b32.xlu0 %v1058, 1
    %v1109 = vpop.permute.xlu0 %1108
    %1110 = vrot.lane.b32.xlu0 %v1059, 1
    %v1111 = vpop.permute.xlu0 %1110
    %v1112 = vsel %vm157, %v1058, %v1109
    %v1113 = vsel %vm157, %v1059, %v1111
    %v1114 = vmin.f32 %v1112, %v1058
    %v1115 = vmin.f32 %v1113, %v1059
    %1116 = vrot.lane.b32.xlu0 %v1058, 127
    %v1117 = vpop.permute.xlu0 %1116
    %1118 = vrot.lane.b32.xlu0 %v1059, 127
    %v1119 = vpop.permute.xlu0 %1118
    %v1120 = vsel %vm171, %v1058, %v1117
    %v1121 = vsel %vm171, %v1059, %v1119
    %v1122 = vmin.f32 %v1114, %v1120
    %v1123 = vmin.f32 %v1115, %v1121
    %v1124 = vmin.f32 %v1106, %v1122
    %v1125 = vmin.f32 %v1107, %v1123
    %v1126 = vrot.slane %v1124, 7
    %v1127 = vrot.slane %v1125, 7
    %v1128 = vsel %vm112, %v1126, %v1127
    %v1129 = vsel %vm112, %v1127, %v1126
    %v1130 = vsel %vm123, %v1124, %v1129
    %v1131 = vsel %vm124, %v1125, %v1128
    %v1132 = vrot.slane %v1124, 1
    %v1133 = vrot.slane %v1125, 1
    %v1134 = vsel %vm131, %v1132, %v1133
    %v1135 = vsel %vm131, %v1133, %v1132
    %v1136 = vsel %vm142, %v1124, %v1134
    %v1137 = vsel %vm143, %v1125, %v1135
    %v1138 = vmax.f32 %v1130, %v1124
    %v1139 = vmax.f32 %v1131, %v1125
    %v1140 = vmax.f32 %v1138, %v1136
    %v1141 = vmax.f32 %v1139, %v1137
    %1142 = vrot.lane.b32.xlu0 %v1140, 1
    %v1143 = vpop.permute.xlu0 %1142
    %1144 = vrot.lane.b32.xlu0 %v1141, 1
    %v1145 = vpop.permute.xlu0 %1144
    %v1146 = vsel %vm157, %v1140, %v1143
    %v1147 = vsel %vm157, %v1141, %v1145
    %v1148 = vmax.f32 %v1146, %v1140
    %v1149 = vmax.f32 %v1147, %v1141
    %1150 = vrot.lane.b32.xlu0 %v1140, 127
    %v1151 = vpop.permute.xlu0 %1150
    %1152 = vrot.lane.b32.xlu0 %v1141, 127
    %v1153 = vpop.permute.xlu0 %1152
    %v1154 = vsel %vm171, %v1140, %v1151
    %v1155 = vsel %vm171, %v1141, %v1153
    %v1156 = vmax.f32 %v1148, %v1154
    %v1157 = vmax.f32 %v1149, %v1155
    %v1158 = vsub.f32 %v1058, %v1156
    %v1159 = vsub.f32 %v1059, %v1157
    %v1160 = vmax.f32 %v1158, 0.0
    %v1161 = vmax.f32 %v1159, 0.0
    %v1162 = vmul.f32 %v1102, %v1160
    %v1163 = vmul.f32 %v1103, %v1161
    %v1164 = vsub.f32 %v1160, %v1162
    %v1165 = vsub.f32 %v1161, %v1163
    %v1166 = vmax.f32 %v1164, 0.0
    %v1167 = vmax.f32 %v1165, 0.0
    %v1168 = vadd.f32 %v1102, %v1166
    %v1169 = vadd.f32 %v1103, %v1167
    %v1170 = vmin.f32 %v1130, %v1124
    %v1171 = vmin.f32 %v1131, %v1125
    %v1172 = vmin.f32 %v1170, %v1136
    %v1173 = vmin.f32 %v1171, %v1137
    %1174 = vrot.lane.b32.xlu0 %v1124, 1
    %v1175 = vpop.permute.xlu0 %1174
    %1176 = vrot.lane.b32.xlu0 %v1125, 1
    %v1177 = vpop.permute.xlu0 %1176
    %v1178 = vsel %vm157, %v1124, %v1175
    %v1179 = vsel %vm157, %v1125, %v1177
    %v1180 = vmin.f32 %v1178, %v1124
    %v1181 = vmin.f32 %v1179, %v1125
    %1182 = vrot.lane.b32.xlu0 %v1124, 127
    %v1183 = vpop.permute.xlu0 %1182
    %1184 = vrot.lane.b32.xlu0 %v1125, 127
    %v1185 = vpop.permute.xlu0 %1184
    %v1186 = vsel %vm171, %v1124, %v1183
    %v1187 = vsel %vm171, %v1125, %v1185
    %v1188 = vmin.f32 %v1180, %v1186
    %v1189 = vmin.f32 %v1181, %v1187
    %v1190 = vmin.f32 %v1172, %v1188
    %v1191 = vmin.f32 %v1173, %v1189
    %v1192 = vrot.slane %v1190, 7
    %v1193 = vrot.slane %v1191, 7
    %v1194 = vsel %vm112, %v1192, %v1193
    %v1195 = vsel %vm112, %v1193, %v1192
    %v1196 = vsel %vm123, %v1190, %v1195
    %v1197 = vsel %vm124, %v1191, %v1194
    %v1198 = vrot.slane %v1190, 1
    %v1199 = vrot.slane %v1191, 1
    %v1200 = vsel %vm131, %v1198, %v1199
    %v1201 = vsel %vm131, %v1199, %v1198
    %v1202 = vsel %vm142, %v1190, %v1200
    %v1203 = vsel %vm143, %v1191, %v1201
    %v1204 = vmax.f32 %v1196, %v1190
    %v1205 = vmax.f32 %v1197, %v1191
    %v1206 = vmax.f32 %v1204, %v1202
    %v1207 = vmax.f32 %v1205, %v1203
    %1208 = vrot.lane.b32.xlu0 %v1206, 1
    %v1209 = vpop.permute.xlu0 %1208
    %1210 = vrot.lane.b32.xlu0 %v1207, 1
    %v1211 = vpop.permute.xlu0 %1210
    %v1212 = vsel %vm157, %v1206, %v1209
    %v1213 = vsel %vm157, %v1207, %v1211
    %v1214 = vmax.f32 %v1212, %v1206
    %v1215 = vmax.f32 %v1213, %v1207
    %1216 = vrot.lane.b32.xlu0 %v1206, 127
    %v1217 = vpop.permute.xlu0 %1216
    %1218 = vrot.lane.b32.xlu0 %v1207, 127
    %v1219 = vpop.permute.xlu0 %1218
    %v1220 = vsel %vm171, %v1206, %v1217
    %v1221 = vsel %vm171, %v1207, %v1219
    %v1222 = vmax.f32 %v1214, %v1220
    %v1223 = vmax.f32 %v1215, %v1221
    %v1224 = vsub.f32 %v1124, %v1222
    %v1225 = vsub.f32 %v1125, %v1223
    %v1226 = vmax.f32 %v1224, 0.0
    %v1227 = vmax.f32 %v1225, 0.0
    %v1228 = vmul.f32 %v1168, %v1226
    %v1229 = vmul.f32 %v1169, %v1227
    %v1230 = vsub.f32 %v1226, %v1228
    %v1231 = vsub.f32 %v1227, %v1229
    %v1232 = vmax.f32 %v1230, 0.0
    %v1233 = vmax.f32 %v1231, 0.0
    %v1234 = vadd.f32 %v1168, %v1232
    %v1235 = vadd.f32 %v1169, %v1233
    %v1236 = vmin.f32 %v1196, %v1190
    %v1237 = vmin.f32 %v1197, %v1191
    %v1238 = vmin.f32 %v1236, %v1202
    %v1239 = vmin.f32 %v1237, %v1203
    %1240 = vrot.lane.b32.xlu0 %v1190, 1
    %v1241 = vpop.permute.xlu0 %1240
    %1242 = vrot.lane.b32.xlu0 %v1191, 1
    %v1243 = vpop.permute.xlu0 %1242
    %v1244 = vsel %vm157, %v1190, %v1241
    %v1245 = vsel %vm157, %v1191, %v1243
    %v1246 = vmin.f32 %v1244, %v1190
    %v1247 = vmin.f32 %v1245, %v1191
    %1248 = vrot.lane.b32.xlu0 %v1190, 127
    %v1249 = vpop.permute.xlu0 %1248
    %1250 = vrot.lane.b32.xlu0 %v1191, 127
    %v1251 = vpop.permute.xlu0 %1250
    %v1252 = vsel %vm171, %v1190, %v1249
    %v1253 = vsel %vm171, %v1191, %v1251
    %v1254 = vmin.f32 %v1246, %v1252
    %v1255 = vmin.f32 %v1247, %v1253
    %v1256 = vmin.f32 %v1238, %v1254
    %v1257 = vmin.f32 %v1239, %v1255
    %v1258 = vrot.slane %v1256, 7
    %v1259 = vrot.slane %v1257, 7
    %v1260 = vsel %vm112, %v1258, %v1259
    %v1261 = vsel %vm112, %v1259, %v1258
    %v1262 = vsel %vm123, %v1256, %v1261
    %v1263 = vsel %vm124, %v1257, %v1260
    %v1264 = vrot.slane %v1256, 1
    %v1265 = vrot.slane %v1257, 1
    %v1266 = vsel %vm131, %v1264, %v1265
    %v1267 = vsel %vm131, %v1265, %v1264
    %v1268 = vsel %vm142, %v1256, %v1266
    %v1269 = vsel %vm143, %v1257, %v1267
    %v1270 = vmax.f32 %v1262, %v1256
    %v1271 = vmax.f32 %v1263, %v1257
    %v1272 = vmax.f32 %v1270, %v1268
    %v1273 = vmax.f32 %v1271, %v1269
    %1274 = vrot.lane.b32.xlu0 %v1272, 1
    %v1275 = vpop.permute.xlu0 %1274
    %1276 = vrot.lane.b32.xlu0 %v1273, 1
    %v1277 = vpop.permute.xlu0 %1276
    %v1278 = vsel %vm157, %v1272, %v1275
    %v1279 = vsel %vm157, %v1273, %v1277
    %v1280 = vmax.f32 %v1278, %v1272
    %v1281 = vmax.f32 %v1279, %v1273
    %1282 = vrot.lane.b32.xlu0 %v1272, 127
    %v1283 = vpop.permute.xlu0 %1282
    %1284 = vrot.lane.b32.xlu0 %v1273, 127
    %v1285 = vpop.permute.xlu0 %1284
    %v1286 = vsel %vm171, %v1272, %v1283
    %v1287 = vsel %vm171, %v1273, %v1285
    %v1288 = vmax.f32 %v1280, %v1286
    %v1289 = vmax.f32 %v1281, %v1287
    %v1290 = vsub.f32 %v1190, %v1288
    %v1291 = vsub.f32 %v1191, %v1289
    %v1292 = vmax.f32 %v1290, 0.0
    %v1293 = vmax.f32 %v1291, 0.0
    %v1294 = vmul.f32 %v1234, %v1292
    %v1295 = vmul.f32 %v1235, %v1293
    %v1296 = vsub.f32 %v1292, %v1294
    %v1297 = vsub.f32 %v1293, %v1295
    %v1298 = vmax.f32 %v1296, 0.0
    %v1299 = vmax.f32 %v1297, 0.0
    %v1300 = vadd.f32 %v1234, %v1298
    %v1301 = vadd.f32 %v1235, %v1299
    %v1302 = vmin.f32 %v1262, %v1256
    %v1303 = vmin.f32 %v1263, %v1257
    %v1304 = vmin.f32 %v1302, %v1268
    %v1305 = vmin.f32 %v1303, %v1269
    %1306 = vrot.lane.b32.xlu0 %v1256, 1
    %v1307 = vpop.permute.xlu0 %1306
    %1308 = vrot.lane.b32.xlu0 %v1257, 1
    %v1309 = vpop.permute.xlu0 %1308
    %v1310 = vsel %vm157, %v1256, %v1307
    %v1311 = vsel %vm157, %v1257, %v1309
    %v1312 = vmin.f32 %v1310, %v1256
    %v1313 = vmin.f32 %v1311, %v1257
    %1314 = vrot.lane.b32.xlu0 %v1256, 127
    %v1315 = vpop.permute.xlu0 %1314
    %1316 = vrot.lane.b32.xlu0 %v1257, 127
    %v1317 = vpop.permute.xlu0 %1316
    %v1318 = vsel %vm171, %v1256, %v1315
    %v1319 = vsel %vm171, %v1257, %v1317
    %v1320 = vmin.f32 %v1312, %v1318
    %v1321 = vmin.f32 %v1313, %v1319
    %v1322 = vmin.f32 %v1304, %v1320
    %v1323 = vmin.f32 %v1305, %v1321
    %v1324 = vrot.slane %v1322, 7
    %v1325 = vrot.slane %v1323, 7
    %v1326 = vsel %vm112, %v1324, %v1325
    %v1327 = vsel %vm112, %v1325, %v1324
    %v1328 = vsel %vm123, %v1322, %v1327
    %v1329 = vsel %vm124, %v1323, %v1326
    %v1330 = vrot.slane %v1322, 1
    %v1331 = vrot.slane %v1323, 1
    %v1332 = vsel %vm131, %v1330, %v1331
    %v1333 = vsel %vm131, %v1331, %v1330
    %v1334 = vsel %vm142, %v1322, %v1332
    %v1335 = vsel %vm143, %v1323, %v1333
    %v1336 = vmax.f32 %v1328, %v1322
    %v1337 = vmax.f32 %v1329, %v1323
    %v1338 = vmax.f32 %v1336, %v1334
    %v1339 = vmax.f32 %v1337, %v1335
    %1340 = vrot.lane.b32.xlu0 %v1338, 1
    %v1341 = vpop.permute.xlu0 %1340
    %1342 = vrot.lane.b32.xlu0 %v1339, 1
    %v1343 = vpop.permute.xlu0 %1342
    %v1344 = vsel %vm157, %v1338, %v1341
    %v1345 = vsel %vm157, %v1339, %v1343
    %v1346 = vmax.f32 %v1344, %v1338
    %v1347 = vmax.f32 %v1345, %v1339
    %1348 = vrot.lane.b32.xlu0 %v1338, 127
    %v1349 = vpop.permute.xlu0 %1348
    %1350 = vrot.lane.b32.xlu0 %v1339, 127
    %v1351 = vpop.permute.xlu0 %1350
    %v1352 = vsel %vm171, %v1338, %v1349
    %v1353 = vsel %vm171, %v1339, %v1351
    %v1354 = vmax.f32 %v1346, %v1352
    %v1355 = vmax.f32 %v1347, %v1353
    %v1356 = vsub.f32 %v1256, %v1354
    %v1357 = vsub.f32 %v1257, %v1355
    %v1358 = vmax.f32 %v1356, 0.0
    %v1359 = vmax.f32 %v1357, 0.0
    %v1360 = vmul.f32 %v1300, %v1358
    %v1361 = vmul.f32 %v1301, %v1359
    %v1362 = vsub.f32 %v1358, %v1360
    %v1363 = vsub.f32 %v1359, %v1361
    %v1364 = vmax.f32 %v1362, 0.0
    %v1365 = vmax.f32 %v1363, 0.0
    %v1366 = vadd.f32 %v1300, %v1364
    %v1367 = vadd.f32 %v1301, %v1365
    %v1368 = vmin.f32 %v1328, %v1322
    %v1369 = vmin.f32 %v1329, %v1323
    %v1370 = vmin.f32 %v1368, %v1334
    %v1371 = vmin.f32 %v1369, %v1335
    %1372 = vrot.lane.b32.xlu0 %v1322, 1
    %v1373 = vpop.permute.xlu0 %1372
    %1374 = vrot.lane.b32.xlu0 %v1323, 1
    %v1375 = vpop.permute.xlu0 %1374
    %v1376 = vsel %vm157, %v1322, %v1373
    %v1377 = vsel %vm157, %v1323, %v1375
    %v1378 = vmin.f32 %v1376, %v1322
    %v1379 = vmin.f32 %v1377, %v1323
    %1380 = vrot.lane.b32.xlu0 %v1322, 127
    %v1381 = vpop.permute.xlu0 %1380
    %1382 = vrot.lane.b32.xlu0 %v1323, 127
    %v1383 = vpop.permute.xlu0 %1382
    %v1384 = vsel %vm171, %v1322, %v1381
    %v1385 = vsel %vm171, %v1323, %v1383
    %v1386 = vmin.f32 %v1378, %v1384
    %v1387 = vmin.f32 %v1379, %v1385
    %v1388 = vmin.f32 %v1370, %v1386
    %v1389 = vmin.f32 %v1371, %v1387
    %v1390 = vrot.slane %v1388, 7
    %v1391 = vrot.slane %v1389, 7
    %v1392 = vsel %vm112, %v1390, %v1391
    %v1393 = vsel %vm112, %v1391, %v1390
    %v1394 = vsel %vm123, %v1388, %v1393
    %v1395 = vsel %vm124, %v1389, %v1392
    %v1396 = vrot.slane %v1388, 1
    %v1397 = vrot.slane %v1389, 1
    %v1398 = vsel %vm131, %v1396, %v1397
    %v1399 = vsel %vm131, %v1397, %v1396
    %v1400 = vsel %vm142, %v1388, %v1398
    %v1401 = vsel %vm143, %v1389, %v1399
    %v1402 = vmax.f32 %v1394, %v1388
    %v1403 = vmax.f32 %v1395, %v1389
    %v1404 = vmax.f32 %v1402, %v1400
    %v1405 = vmax.f32 %v1403, %v1401
    %1406 = vrot.lane.b32.xlu0 %v1404, 1
    %v1407 = vpop.permute.xlu0 %1406
    %1408 = vrot.lane.b32.xlu0 %v1405, 1
    %v1409 = vpop.permute.xlu0 %1408
    %v1410 = vsel %vm157, %v1404, %v1407
    %v1411 = vsel %vm157, %v1405, %v1409
    %v1412 = vmax.f32 %v1410, %v1404
    %v1413 = vmax.f32 %v1411, %v1405
    %1414 = vrot.lane.b32.xlu0 %v1404, 127
    %v1415 = vpop.permute.xlu0 %1414
    %1416 = vrot.lane.b32.xlu0 %v1405, 127
    %v1417 = vpop.permute.xlu0 %1416
    %v1418 = vsel %vm171, %v1404, %v1415
    %v1419 = vsel %vm171, %v1405, %v1417
    %v1420 = vmax.f32 %v1412, %v1418
    %v1421 = vmax.f32 %v1413, %v1419
    %v1422 = vsub.f32 %v1322, %v1420
    %v1423 = vsub.f32 %v1323, %v1421
    %v1424 = vmax.f32 %v1422, 0.0
    %v1425 = vmax.f32 %v1423, 0.0
    %v1426 = vmul.f32 %v1366, %v1424
    %v1427 = vmul.f32 %v1367, %v1425
    %v1428 = vsub.f32 %v1424, %v1426
    %v1429 = vsub.f32 %v1425, %v1427
    %v1430 = vmax.f32 %v1428, 0.0
    %v1431 = vmax.f32 %v1429, 0.0
    %v1432 = vadd.f32 %v1366, %v1430
    %v1433 = vadd.f32 %v1367, %v1431
    %v1434 = vmin.f32 %v1394, %v1388
    %v1435 = vmin.f32 %v1395, %v1389
    %v1436 = vmin.f32 %v1434, %v1400
    %v1437 = vmin.f32 %v1435, %v1401
    %1438 = vrot.lane.b32.xlu0 %v1388, 1
    %v1439 = vpop.permute.xlu0 %1438
    %1440 = vrot.lane.b32.xlu0 %v1389, 1
    %v1441 = vpop.permute.xlu0 %1440
    %v1442 = vsel %vm157, %v1388, %v1439
    %v1443 = vsel %vm157, %v1389, %v1441
    %v1444 = vmin.f32 %v1442, %v1388
    %v1445 = vmin.f32 %v1443, %v1389
    %1446 = vrot.lane.b32.xlu0 %v1388, 127
    %v1447 = vpop.permute.xlu0 %1446
    %1448 = vrot.lane.b32.xlu0 %v1389, 127
    %v1449 = vpop.permute.xlu0 %1448
    %v1450 = vsel %vm171, %v1388, %v1447
    %v1451 = vsel %vm171, %v1389, %v1449
    %v1452 = vmin.f32 %v1444, %v1450
    %v1453 = vmin.f32 %v1445, %v1451
    %v1454 = vmin.f32 %v1436, %v1452
    %v1455 = vmin.f32 %v1437, %v1453
    %v1456 = vrot.slane %v1454, 7
    %v1457 = vrot.slane %v1455, 7
    %v1458 = vsel %vm112, %v1456, %v1457
    %v1459 = vsel %vm112, %v1457, %v1456
    %v1460 = vsel %vm123, %v1454, %v1459
    %v1461 = vsel %vm124, %v1455, %v1458
    %v1462 = vrot.slane %v1454, 1
    %v1463 = vrot.slane %v1455, 1
    %v1464 = vsel %vm131, %v1462, %v1463
    %v1465 = vsel %vm131, %v1463, %v1462
    %v1466 = vsel %vm142, %v1454, %v1464
    %v1467 = vsel %vm143, %v1455, %v1465
    %v1468 = vmax.f32 %v1460, %v1454
    %v1469 = vmax.f32 %v1461, %v1455
    %v1470 = vmax.f32 %v1468, %v1466
    %v1471 = vmax.f32 %v1469, %v1467
    %1472 = vrot.lane.b32.xlu0 %v1470, 1
    %v1473 = vpop.permute.xlu0 %1472
    %1474 = vrot.lane.b32.xlu0 %v1471, 1
    %v1475 = vpop.permute.xlu0 %1474
    %v1476 = vsel %vm157, %v1470, %v1473
    %v1477 = vsel %vm157, %v1471, %v1475
    %v1478 = vmax.f32 %v1476, %v1470
    %v1479 = vmax.f32 %v1477, %v1471
    %1480 = vrot.lane.b32.xlu0 %v1470, 127
    %v1481 = vpop.permute.xlu0 %1480
    %1482 = vrot.lane.b32.xlu0 %v1471, 127
    %v1483 = vpop.permute.xlu0 %1482
    %v1484 = vsel %vm171, %v1470, %v1481
    %v1485 = vsel %vm171, %v1471, %v1483
    %v1486 = vmax.f32 %v1478, %v1484
    %v1487 = vmax.f32 %v1479, %v1485
    %v1488 = vsub.f32 %v1388, %v1486
    %v1489 = vsub.f32 %v1389, %v1487
    %v1490 = vmax.f32 %v1488, 0.0
    %v1491 = vmax.f32 %v1489, 0.0
    %v1492 = vmul.f32 %v1432, %v1490
    %v1493 = vmul.f32 %v1433, %v1491
    %v1494 = vsub.f32 %v1490, %v1492
    %v1495 = vsub.f32 %v1491, %v1493
    %v1496 = vmax.f32 %v1494, 0.0
    %v1497 = vmax.f32 %v1495, 0.0
    %v1498 = vadd.f32 %v1432, %v1496
    %v1499 = vadd.f32 %v1433, %v1497
    %v1500 = vmin.f32 %v1460, %v1454
    %v1501 = vmin.f32 %v1461, %v1455
    %v1502 = vmin.f32 %v1500, %v1466
    %v1503 = vmin.f32 %v1501, %v1467
    %1504 = vrot.lane.b32.xlu0 %v1454, 1
    %v1505 = vpop.permute.xlu0 %1504
    %1506 = vrot.lane.b32.xlu0 %v1455, 1
    %v1507 = vpop.permute.xlu0 %1506
    %v1508 = vsel %vm157, %v1454, %v1505
    %v1509 = vsel %vm157, %v1455, %v1507
    %v1510 = vmin.f32 %v1508, %v1454
    %v1511 = vmin.f32 %v1509, %v1455
    %1512 = vrot.lane.b32.xlu0 %v1454, 127
    %v1513 = vpop.permute.xlu0 %1512
    %1514 = vrot.lane.b32.xlu0 %v1455, 127
    %v1515 = vpop.permute.xlu0 %1514
    %v1516 = vsel %vm171, %v1454, %v1513
    %v1517 = vsel %vm171, %v1455, %v1515
    %v1518 = vmin.f32 %v1510, %v1516
    %v1519 = vmin.f32 %v1511, %v1517
    %v1520 = vmin.f32 %v1502, %v1518
    %v1521 = vmin.f32 %v1503, %v1519
    %v1522 = vrot.slane %v1520, 7
    %v1523 = vrot.slane %v1521, 7
    %v1524 = vsel %vm112, %v1522, %v1523
    %v1525 = vsel %vm112, %v1523, %v1522
    %v1526 = vsel %vm123, %v1520, %v1525
    %v1527 = vsel %vm124, %v1521, %v1524
    %v1528 = vrot.slane %v1520, 1
    %v1529 = vrot.slane %v1521, 1
    %v1530 = vsel %vm131, %v1528, %v1529
    %v1531 = vsel %vm131, %v1529, %v1528
    %v1532 = vsel %vm142, %v1520, %v1530
    %v1533 = vsel %vm143, %v1521, %v1531
    %v1534 = vmax.f32 %v1526, %v1520
    %v1535 = vmax.f32 %v1527, %v1521
    %v1536 = vmax.f32 %v1534, %v1532
    %v1537 = vmax.f32 %v1535, %v1533
    %1538 = vrot.lane.b32.xlu0 %v1536, 1
    %v1539 = vpop.permute.xlu0 %1538
    %1540 = vrot.lane.b32.xlu0 %v1537, 1
    %v1541 = vpop.permute.xlu0 %1540
    %v1542 = vsel %vm157, %v1536, %v1539
    %v1543 = vsel %vm157, %v1537, %v1541
    %v1544 = vmax.f32 %v1542, %v1536
    %v1545 = vmax.f32 %v1543, %v1537
    %1546 = vrot.lane.b32.xlu0 %v1536, 127
    %v1547 = vpop.permute.xlu0 %1546
    %1548 = vrot.lane.b32.xlu0 %v1537, 127
    %v1549 = vpop.permute.xlu0 %1548
    %v1550 = vsel %vm171, %v1536, %v1547
    %v1551 = vsel %vm171, %v1537, %v1549
    %v1552 = vmax.f32 %v1544, %v1550
    %v1553 = vmax.f32 %v1545, %v1551
    %v1554 = vsub.f32 %v1454, %v1552
    %v1555 = vsub.f32 %v1455, %v1553
    %v1556 = vmax.f32 %v1554, 0.0
    %v1557 = vmax.f32 %v1555, 0.0
    %v1558 = vmul.f32 %v1498, %v1556
    %v1559 = vmul.f32 %v1499, %v1557
    %v1560 = vsub.f32 %v1556, %v1558
    %v1561 = vsub.f32 %v1557, %v1559
    %v1562 = vmax.f32 %v1560, 0.0
    %v1563 = vmax.f32 %v1561, 0.0
    %v1564 = vadd.f32 %v1498, %v1562
    %v1565 = vadd.f32 %v1499, %v1563
    %v1566 = vmin.f32 %v1526, %v1520
    %v1567 = vmin.f32 %v1527, %v1521
    %v1568 = vmin.f32 %v1566, %v1532
    %v1569 = vmin.f32 %v1567, %v1533
    %1570 = vrot.lane.b32.xlu0 %v1520, 1
    %v1571 = vpop.permute.xlu0 %1570
    %1572 = vrot.lane.b32.xlu0 %v1521, 1
    %v1573 = vpop.permute.xlu0 %1572
    %v1574 = vsel %vm157, %v1520, %v1571
    %v1575 = vsel %vm157, %v1521, %v1573
    %v1576 = vmin.f32 %v1574, %v1520
    %v1577 = vmin.f32 %v1575, %v1521
    %1578 = vrot.lane.b32.xlu0 %v1520, 127
    %v1579 = vpop.permute.xlu0 %1578
    %1580 = vrot.lane.b32.xlu0 %v1521, 127
    %v1581 = vpop.permute.xlu0 %1580
    %v1582 = vsel %vm171, %v1520, %v1579
    %v1583 = vsel %vm171, %v1521, %v1581
    %v1584 = vmin.f32 %v1576, %v1582
    %v1585 = vmin.f32 %v1577, %v1583
    %v1586 = vmin.f32 %v1568, %v1584
    %v1587 = vmin.f32 %v1569, %v1585
    %v1588 = vrot.slane %v1586, 7
    %v1589 = vrot.slane %v1587, 7
    %v1590 = vsel %vm112, %v1588, %v1589
    %v1591 = vsel %vm112, %v1589, %v1588
    %v1592 = vsel %vm123, %v1586, %v1591
    %v1593 = vsel %vm124, %v1587, %v1590
    %v1594 = vrot.slane %v1586, 1
    %v1595 = vrot.slane %v1587, 1
    %v1596 = vsel %vm131, %v1594, %v1595
    %v1597 = vsel %vm131, %v1595, %v1594
    %v1598 = vsel %vm142, %v1586, %v1596
    %v1599 = vsel %vm143, %v1587, %v1597
    %v1600 = vmax.f32 %v1592, %v1586
    %v1601 = vmax.f32 %v1593, %v1587
    %v1602 = vmax.f32 %v1600, %v1598
    %v1603 = vmax.f32 %v1601, %v1599
    %1604 = vrot.lane.b32.xlu0 %v1602, 1
    %v1605 = vpop.permute.xlu0 %1604
    %1606 = vrot.lane.b32.xlu0 %v1603, 1
    %v1607 = vpop.permute.xlu0 %1606
    %v1608 = vsel %vm157, %v1602, %v1605
    %v1609 = vsel %vm157, %v1603, %v1607
    %v1610 = vmax.f32 %v1608, %v1602
    %v1611 = vmax.f32 %v1609, %v1603
    %1612 = vrot.lane.b32.xlu0 %v1602, 127
    %v1613 = vpop.permute.xlu0 %1612
    %1614 = vrot.lane.b32.xlu0 %v1603, 127
    %v1615 = vpop.permute.xlu0 %1614
    %v1616 = vsel %vm171, %v1602, %v1613
    %v1617 = vsel %vm171, %v1603, %v1615
    %v1618 = vmax.f32 %v1610, %v1616
    %v1619 = vmax.f32 %v1611, %v1617
    %v1620 = vsub.f32 %v1520, %v1618
    %v1621 = vsub.f32 %v1521, %v1619
    %v1622 = vmax.f32 %v1620, 0.0
    %v1623 = vmax.f32 %v1621, 0.0
    %v1624 = vmul.f32 %v1564, %v1622
    %v1625 = vmul.f32 %v1565, %v1623
    %v1626 = vsub.f32 %v1622, %v1624
    %v1627 = vsub.f32 %v1623, %v1625
    %v1628 = vmax.f32 %v1626, 0.0
    %v1629 = vmax.f32 %v1627, 0.0
    %v1630 = vadd.f32 %v1564, %v1628
    %v1631 = vadd.f32 %v1565, %v1629
    %s1632 = sld [smem:[#allocation5 + $0x5]]
    %v1633 = vmul.f32 %v1630, %v65
    %v1634 = vmul.f32 %v1631, %v66
    %v1635 = vadd.f32 %v1633, %v1634
    %1636 = vadd.xlane.f32.xlu0 %v1635
    %v1637 = vpop.xlane.xlu0 %1636
    %v1638 = vrot.slane %v1637, 4
    %v1639 = vadd.f32 %v1637, %v1638
    %v1640 = vrot.slane %v1639, 2
    %v1641 = vadd.f32 %v1639, %v1640
    %v1642 = vrot.slane %v1641, 1
    %v1643 = vadd.f32 %v1641, %v1642
    %s1644 = vtos %v1643
    %s1645 = sadd.f32 %s1632, %s1644
    %1646 = sst [smem:[%s57]] %s1645
    %s1647 = sld [smem:[#allocation5 + $0x6]]
    %v1648 = vadd.f32 %v1630, %v1631
    %1649 = vadd.xlane.f32.xlu0 %v1648
    %v1650 = vpop.xlane.xlu0 %1649
    %v1651 = vrot.slane %v1650, 4
    %v1652 = vadd.f32 %v1650, %v1651
    %v1653 = vrot.slane %v1652, 2
    %v1654 = vadd.f32 %v1652, %v1653
    %v1655 = vrot.slane %v1654, 1
    %v1656 = vadd.f32 %v1654, %v1655
    %s1657 = vtos %v1656
    %s1658 = sadd.f32 %s1647, %s1657
    %1659 = sst [smem:[%s59]] %s1658
    // Predicated region
    $region22: #{tpu_custom_call.1} parent=1 // pred_check
      _
    $region23: #{tpu_custom_call.1} parent=1 // pred_check_branch
      %1661 = sbr.rel (0) target = $region25
    $region24: #{tpu_custom_call.1} parent=1 // pred_region
      %s1663 = ssub.s32 16, 16
      %1664 = vsyncadd [#allocation4], %s1663
      %1667 = dma.smem_to_hbm [#allocation5], 16, %s4, [#allocation4]
    $region25: #{tpu_custom_call.1} parent=1 // pred_fallthru
      _
    // Predicated region
    $region26: #{tpu_custom_call.1} parent=1 // pred_check
      _
    $region27: #{tpu_custom_call.1} parent=1 // pred_check_branch
      %1669 = sbr.rel (0) target = $region29
    $region28: #{tpu_custom_call.1} parent=1 // pred_region
      %1670 = dma.done [#allocation4], 16
    $region29: #{tpu_custom_call.1} parent=1 // pred_fallthru
      _
    %1671 = sfence
    %1672 = vsyncpa [#allocation3], 1
    %1673 = vsyncpa [#allocation4], 1

</llo_original>
